<compile_context>
chip_gen: v7x
topology: tpu7x:2x2x1
jax: 0.10.0
libtpu: 0.0.40
codegen_flags: <defaults>
</compile_context>

<pallas_src>
import functools

import jax
import jax.numpy as jnp
from jax import lax
from jax.experimental import pallas as pl
from jax.experimental.pallas import tpu as pltpu


def _round_up(n, m):
    return (n + m - 1) // m * m


def mlp_kernel(x_ref, w1_ref, wpack_ref, bpack_ref, out_ref):
    """Fused 6-layer MLP.

    x_ref:     [TB, F]   batch-major input tile (natural layout, no host transpose)
    w1_ref:    [D, F]    layer-1 weight (rows >= 10 are zero padding)
    wpack_ref: [5, D, D] layers 2..5 + folded final layer (row 0 of slot 4)
    bpack_ref: [6, D, 1] biases for layers 1..5 + folded final bias
    out_ref:   [1, TB]   lane-dense per-tile output
    """
    hi = lax.Precision.HIGHEST

    x = x_ref[...]                                        # [TB, F] f32
    # Layer 1: contract on F of both operands -> feature-major [D, TB]
    # (batch on the lane axis; garbage tail lanes stay in their own columns).
    h = lax.dot_general(w1_ref[...], x, (((1,), (1,)), ((), ())),
                        precision=hi, preferred_element_type=jnp.float32)
    h = jnp.tanh(h + bpack_ref[0])                        # bias broadcasts over lanes

    # Hidden layers 2..5: tanh(W @ h + b); padded rows stay tanh(0) = 0.
    for i in range(4):
        h = jnp.tanh(
            jnp.dot(wpack_ref[i], h,
                    precision=hi, preferred_element_type=jnp.float32)
            + bpack_ref[i + 1])

    # Final layer with the params-scale and sum(dim=1) folded in: only row 0 of
    # wpack[4] / bpack[5] is nonzero, so the [1, TB] result comes out directly.
    w6 = wpack_ref[4][0:1, :]                             # [1, D]
    b6 = bpack_ref[5][0:1, :]                             # [1, 1]
    out_ref[...] = jnp.dot(w6, h,
                           precision=hi,
                           preferred_element_type=jnp.float32) + b6


def pack_mlp_params(weights, biases, params, dtype=jnp.float32):
    """One-time packing (hoisted out of the per-call path).

    weights[i]: torch-native [out_features, in_features]; biases[i]: [out];
    params: [6] output scale.  Folds  sum_j params_j * (W6 h + b6)_j  ==
    (params @ W6) h + params @ b6  into the last layer (exact: it's linear).

    Invariant required by the kernel's zero-padding argument: every packed row
    / column with index >= 10 (and every unused pack slot) is exactly zero.
    """
    F = weights[0].shape[1]
    D = 16                                                # padded hidden width (>=10, mult. of 8)

    w_last = params @ weights[5]                          # [10]
    b_last = jnp.dot(params, biases[5])                   # scalar

    w1 = jnp.zeros((D, F), dtype).at[:10, :].set(weights[0].astype(dtype))
    wpack = jnp.zeros((5, D, D), dtype)
    bpack = jnp.zeros((6, D, 1), dtype)
    bpack = bpack.at[0, :10, 0].set(biases[0].astype(dtype))
    for i in range(4):                                    # layers 2..5
        wpack = wpack.at[i, :10, :10].set(weights[i + 1].astype(dtype))
        bpack = bpack.at[i + 1, :10, 0].set(biases[i + 1].astype(dtype))
    wpack = wpack.at[4, 0, :10].set(w_last.astype(dtype)) # folded final layer
    bpack = bpack.at[5, 0, 0].set(b_last.astype(dtype))
    return w1, wpack, bpack


@functools.partial(jax.jit, static_argnames=("max_tb",))
def mlp_forward(x, w1, wpack, bpack, *, max_tb=16384):
    """x: [B, F] float; packed params from pack_mlp_params(). Returns [B]."""
    B, F = x.shape
    D = w1.shape[0]

    # Tile-count first (>= 2, even) so v7x's two TensorCores split the batch
    # axis; then the per-tile batch width, lane-aligned to 128.
    n_tiles = max(2, pl.cdiv(B, max_tb))
    n_tiles += n_tiles % 2
    TB = _round_up(pl.cdiv(B, n_tiles), 128)
    grid_n = pl.cdiv(B, TB)                               # ragged tail handled by Pallas

    x = x.astype(jnp.float32)

    cost = pl.CostEstimate(
        flops=2 * B * (F * D + 4 * D * D + D),
        transcendentals=5 * D * B,
        bytes_accessed=int(x.size) * 4 + B * 4
        + (int(w1.size) + int(wpack.size) + int(bpack.size)) * 4,
    )

    out = pl.pallas_call(
        mlp_kernel,
        out_shape=jax.ShapeDtypeStruct((1, B), jnp.float32),
        grid=(grid_n,),
        in_specs=[
            pl.BlockSpec((TB, F), lambda i: (i, 0)),            # x tile (double-buffered)
            pl.BlockSpec((D, F), lambda i: (0, 0)),             # layer-1 weight, resident
            pl.BlockSpec(wpack.shape, lambda i: (0, 0, 0)),     # packed weights, resident
            pl.BlockSpec(bpack.shape, lambda i: (0, 0, 0)),     # packed biases, resident
        ],
        out_specs=pl.BlockSpec((1, TB), lambda i: (0, i)),      # lane-dense output slab
        compiler_params=pltpu.CompilerParams(
            dimension_semantics=("parallel",)),                 # batch axis -> both TCs on v7x
        cost_estimate=cost,
    )(x, w1, wpack, bpack)
    return out[0]                                               # [B]


def init_params(input_dim, key):
    """Deterministic synthetic init (PyTorch-like uniform fan-in bound).

    Weights are torch-native [out_features, in_features]; biases are [out]."""
    layer_dims = [(input_dim, 10), (10, 10), (10, 10), (10, 10), (10, 10), (10, 6)]
    weights, biases = [], []
    for fan_in, fan_out in layer_dims:
        kw, kb, key = jax.random.split(key, 3)
        bound = 1.0 / float(fan_in) ** 0.5
        weights.append(jax.random.uniform(kw, (fan_out, fan_in), jnp.float32, -bound, bound))
        biases.append(jax.random.uniform(kb, (fan_out,), jnp.float32, -bound, bound))
    scale_params = jnp.full((6,), 10.0, dtype=jnp.float32)   # self.params = full(6, 10.)
    return weights, biases, scale_params


def mlp_reference(x, weights, biases, params):
    """Pure-JAX reference matching the PyTorch module (f32 matmul precision)."""
    with jax.default_matmul_precision("float32"):
        h = x
        n = len(weights)
        for i, (w, b) in enumerate(zip(weights, biases)):
            h = h @ w.T + b
            if i < n - 1:
                h = jnp.tanh(h)
        return jnp.sum(h * params[None, :], axis=1)


if __name__ == "__main__":
    key = jax.random.PRNGKey(0)
    kx, kx2, kp = jax.random.split(key, 3)

    B, input_dim = 8, 16
    x = jax.random.normal(kx, (B, input_dim), jnp.float32)
    weights, biases, scale_params = init_params(input_dim, kp)
    w1, wpack, bpack = pack_mlp_params(weights, biases, scale_params)   # packed once

    y = jax.block_until_ready(mlp_forward(x, w1, wpack, bpack))
    y_ref = mlp_reference(x, weights, biases, scale_params)
    assert y.shape == (B,)
    # With precision=HIGHEST the observed error is ~1e-5; tolerance kept
    # conservative so the check is robust across MXU precision handling.
    assert jnp.allclose(y, y_ref, atol=5e-2, rtol=5e-2), (
        float(jnp.max(jnp.abs(y - y_ref))), y, y_ref)

    # Exercise the multi-tile grid path with a ragged tail (3 tiles of 128,
    # last tile only partially valid).
    B2 = 300
    x2 = jax.random.normal(kx2, (B2, input_dim), jnp.float32)
    y2 = jax.block_until_ready(mlp_forward(x2, w1, wpack, bpack, max_tb=128))
    y2_ref = mlp_reference(x2, weights, biases, scale_params)
    assert y2.shape == (B2,)
    assert jnp.allclose(y2, y2_ref, atol=5e-2, rtol=5e-2), (
        float(jnp.max(jnp.abs(y2 - y2_ref))))

    print("KERNEL_OK")
</pallas_src>

<mosaic_0001>
module attributes {stable_mosaic.version = 11 : i64} {
  func.func @mlp_kernel(%arg0: i32, %arg1: memref<128x16xf32, #tpu.memory_space<vmem>>, %arg2: memref<16x16xf32, #tpu.memory_space<vmem>>, %arg3: memref<5x16x16xf32, #tpu.memory_space<vmem>>, %arg4: memref<6x16x1xf32, #tpu.memory_space<vmem>>, %arg5: memref<1x128xf32, #tpu.memory_space<vmem>>) attributes {dimension_semantics = [#tpu.dimension_semantics<parallel>], iteration_bounds = array<i64: 1>, scalar_prefetch = 0 : i64, scratch_operands = 0 : i64, tpu.core_type = #tpu.core_type<tc>, window_params = [{transform_indices = @transform_0, window_bounds = array<i64: 128, 16>}, {pipeline_mode = #tpu.pipeline_mode<synchronous>, transform_indices = @transform_1, window_bounds = array<i64: 16, 16>}, {pipeline_mode = #tpu.pipeline_mode<synchronous>, transform_indices = @transform_2, window_bounds = array<i64: 5, 16, 16>}, {pipeline_mode = #tpu.pipeline_mode<synchronous>, transform_indices = @transform_3, window_bounds = array<i64: 6, 16, 1>}, {transform_indices = @transform_4, window_bounds = array<i64: 1, 128>}]} {
    %c0 = arith.constant 0 : index
    %c0_0 = arith.constant 0 : index
    %0 = vector.load %arg1[%c0, %c0_0] : memref<128x16xf32, #tpu.memory_space<vmem>>, vector<128x16xf32>
    %c0_1 = arith.constant 0 : index
    %c0_2 = arith.constant 0 : index
    %1 = vector.load %arg2[%c0_1, %c0_2] : memref<16x16xf32, #tpu.memory_space<vmem>>, vector<16x16xf32>
    %cst = arith.constant dense<0.000000e+00> : vector<16x128xf32>
    %2 = tpu.matmul %1, %0, %cst {dimension_numbers = #tpu.dot_dimension_numbers<[1], [1], [0], [0], [0, 0, 1, 0], [], []>, precision = #tpu.contract_precision<fp32>} : vector<16x16xf32>, vector<128x16xf32>, vector<16x128xf32> -> vector<16x128xf32>
    %c0_3 = arith.constant 0 : index
    %c0_4 = arith.constant 0 : index
    %c0_5 = arith.constant 0 : index
    %3 = vector.load %arg4[%c0_3, %c0_4, %c0_5] : memref<6x16x1xf32, #tpu.memory_space<vmem>>, vector<1x16x1xf32>
    %4 = vector.shape_cast %3 : vector<1x16x1xf32> to vector<16x1xf32>
    %5 = vector.broadcast %4 : vector<16x1xf32> to vector<16x128xf32>
    %6 = arith.addf %2, %5 : vector<16x128xf32>
    %7 = math.tanh %6 : vector<16x128xf32>
    %c0_6 = arith.constant 0 : index
    %c0_7 = arith.constant 0 : index
    %c0_8 = arith.constant 0 : index
    %8 = vector.load %arg3[%c0_6, %c0_7, %c0_8] : memref<5x16x16xf32, #tpu.memory_space<vmem>>, vector<1x16x16xf32>
    %9 = vector.shape_cast %8 : vector<1x16x16xf32> to vector<16x16xf32>
    %cst_9 = arith.constant dense<0.000000e+00> : vector<16x128xf32>
    %10 = tpu.matmul %9, %7, %cst_9 {dimension_numbers = #tpu.dot_dimension_numbers<[1], [0], [0], [1], [0, 0, 1, 1], [], []>, precision = #tpu.contract_precision<fp32>} : vector<16x16xf32>, vector<16x128xf32>, vector<16x128xf32> -> vector<16x128xf32>
    %c1 = arith.constant 1 : index
    %c0_10 = arith.constant 0 : index
    %c0_11 = arith.constant 0 : index
    %11 = vector.load %arg4[%c1, %c0_10, %c0_11] : memref<6x16x1xf32, #tpu.memory_space<vmem>>, vector<1x16x1xf32>
    %12 = vector.shape_cast %11 : vector<1x16x1xf32> to vector<16x1xf32>
    %13 = vector.broadcast %12 : vector<16x1xf32> to vector<16x128xf32>
    %14 = arith.addf %10, %13 : vector<16x128xf32>
    %15 = math.tanh %14 : vector<16x128xf32>
    %c1_12 = arith.constant 1 : index
    %c0_13 = arith.constant 0 : index
    %c0_14 = arith.constant 0 : index
    %16 = vector.load %arg3[%c1_12, %c0_13, %c0_14] : memref<5x16x16xf32, #tpu.memory_space<vmem>>, vector<1x16x16xf32>
    %17 = vector.shape_cast %16 : vector<1x16x16xf32> to vector<16x16xf32>
    %cst_15 = arith.constant dense<0.000000e+00> : vector<16x128xf32>
    %18 = tpu.matmul %17, %15, %cst_15 {dimension_numbers = #tpu.dot_dimension_numbers<[1], [0], [0], [1], [0, 0, 1, 1], [], []>, precision = #tpu.contract_precision<fp32>} : vector<16x16xf32>, vector<16x128xf32>, vector<16x128xf32> -> vector<16x128xf32>
    %c2 = arith.constant 2 : index
    %c0_16 = arith.constant 0 : index
    %c0_17 = arith.constant 0 : index
    %19 = vector.load %arg4[%c2, %c0_16, %c0_17] : memref<6x16x1xf32, #tpu.memory_space<vmem>>, vector<1x16x1xf32>
    %20 = vector.shape_cast %19 : vector<1x16x1xf32> to vector<16x1xf32>
    %21 = vector.broadcast %20 : vector<16x1xf32> to vector<16x128xf32>
    %22 = arith.addf %18, %21 : vector<16x128xf32>
    %23 = math.tanh %22 : vector<16x128xf32>
    %c2_18 = arith.constant 2 : index
    %c0_19 = arith.constant 0 : index
    %c0_20 = arith.constant 0 : index
    %24 = vector.load %arg3[%c2_18, %c0_19, %c0_20] : memref<5x16x16xf32, #tpu.memory_space<vmem>>, vector<1x16x16xf32>
    %25 = vector.shape_cast %24 : vector<1x16x16xf32> to vector<16x16xf32>
    %cst_21 = arith.constant dense<0.000000e+00> : vector<16x128xf32>
    %26 = tpu.matmul %25, %23, %cst_21 {dimension_numbers = #tpu.dot_dimension_numbers<[1], [0], [0], [1], [0, 0, 1, 1], [], []>, precision = #tpu.contract_precision<fp32>} : vector<16x16xf32>, vector<16x128xf32>, vector<16x128xf32> -> vector<16x128xf32>
    %c3 = arith.constant 3 : index
    %c0_22 = arith.constant 0 : index
    %c0_23 = arith.constant 0 : index
    %27 = vector.load %arg4[%c3, %c0_22, %c0_23] : memref<6x16x1xf32, #tpu.memory_space<vmem>>, vector<1x16x1xf32>
    %28 = vector.shape_cast %27 : vector<1x16x1xf32> to vector<16x1xf32>
    %29 = vector.broadcast %28 : vector<16x1xf32> to vector<16x128xf32>
    %30 = arith.addf %26, %29 : vector<16x128xf32>
    %31 = math.tanh %30 : vector<16x128xf32>
    %c3_24 = arith.constant 3 : index
    %c0_25 = arith.constant 0 : index
    %c0_26 = arith.constant 0 : index
    %32 = vector.load %arg3[%c3_24, %c0_25, %c0_26] : memref<5x16x16xf32, #tpu.memory_space<vmem>>, vector<1x16x16xf32>
    %33 = vector.shape_cast %32 : vector<1x16x16xf32> to vector<16x16xf32>
    %cst_27 = arith.constant dense<0.000000e+00> : vector<16x128xf32>
    %34 = tpu.matmul %33, %31, %cst_27 {dimension_numbers = #tpu.dot_dimension_numbers<[1], [0], [0], [1], [0, 0, 1, 1], [], []>, precision = #tpu.contract_precision<fp32>} : vector<16x16xf32>, vector<16x128xf32>, vector<16x128xf32> -> vector<16x128xf32>
    %c4 = arith.constant 4 : index
    %c0_28 = arith.constant 0 : index
    %c0_29 = arith.constant 0 : index
    %35 = vector.load %arg4[%c4, %c0_28, %c0_29] : memref<6x16x1xf32, #tpu.memory_space<vmem>>, vector<1x16x1xf32>
    %36 = vector.shape_cast %35 : vector<1x16x1xf32> to vector<16x1xf32>
    %37 = vector.broadcast %36 : vector<16x1xf32> to vector<16x128xf32>
    %38 = arith.addf %34, %37 : vector<16x128xf32>
    %39 = math.tanh %38 : vector<16x128xf32>
    %c4_30 = arith.constant 4 : index
    %c0_31 = arith.constant 0 : index
    %c0_32 = arith.constant 0 : index
    %40 = vector.load %arg3[%c4_30, %c0_31, %c0_32] : memref<5x16x16xf32, #tpu.memory_space<vmem>>, vector<1x16x16xf32>
    %41 = vector.shape_cast %40 : vector<1x16x16xf32> to vector<16x16xf32>
    %42 = vector.extract_strided_slice %41 {offsets = [0, 0], sizes = [1, 16], strides = [1, 1]} : vector<16x16xf32> to vector<1x16xf32>
    %c5 = arith.constant 5 : index
    %c0_33 = arith.constant 0 : index
    %c0_34 = arith.constant 0 : index
    %43 = vector.load %arg4[%c5, %c0_33, %c0_34] : memref<6x16x1xf32, #tpu.memory_space<vmem>>, vector<1x16x1xf32>
    %44 = vector.shape_cast %43 : vector<1x16x1xf32> to vector<16x1xf32>
    %45 = vector.extract_strided_slice %44 {offsets = [0, 0], sizes = [1, 1], strides = [1, 1]} : vector<16x1xf32> to vector<1x1xf32>
    %cst_35 = arith.constant dense<0.000000e+00> : vector<1x128xf32>
    %46 = tpu.matmul %42, %39, %cst_35 {dimension_numbers = #tpu.dot_dimension_numbers<[1], [0], [0], [1], [0, 0, 1, 1], [], []>, precision = #tpu.contract_precision<fp32>} : vector<1x16xf32>, vector<16x128xf32>, vector<1x128xf32> -> vector<1x128xf32>
    %47 = vector.broadcast %45 : vector<1x1xf32> to vector<1x128xf32>
    %48 = arith.addf %46, %47 : vector<1x128xf32>
    %c0_36 = arith.constant 0 : index
    %c0_37 = arith.constant 0 : index
    %49 = vector.load %arg5[%c0_36, %c0_37] : memref<1x128xf32, #tpu.memory_space<vmem>>, vector<1x128xf32>
    tpu.vector_store %arg5[%c0_36, %c0_37], %48 {strides = array<i32>} : memref<1x128xf32, #tpu.memory_space<vmem>>, vector<1x128xf32>,
    return
  }
  func.func @transform_0(%arg0: i32) -> (i32, i32) {
    %c0_i32 = arith.constant 0 : i32
    %c0_i32_0 = arith.constant 0 : i32
    return %arg0, %c0_i32 : i32, i32
  }
  func.func @transform_1(%arg0: i32) -> (i32, i32) {
    %c0_i32 = arith.constant 0 : i32
    %c0_i32_0 = arith.constant 0 : i32
    %c0_i32_1 = arith.constant 0 : i32
    return %c0_i32, %c0_i32_0 : i32, i32
  }
  func.func @transform_2(%arg0: i32) -> (i32, i32, i32) {
    %c0_i32 = arith.constant 0 : i32
    %c0_i32_0 = arith.constant 0 : i32
    %c0_i32_1 = arith.constant 0 : i32
    %c0_i32_2 = arith.constant 0 : i32
    return %c0_i32, %c0_i32_0, %c0_i32_1 : i32, i32, i32
  }
  func.func @transform_3(%arg0: i32) -> (i32, i32, i32) {
    %c0_i32 = arith.constant 0 : i32
    %c0_i32_0 = arith.constant 0 : i32
    %c0_i32_1 = arith.constant 0 : i32
    %c0_i32_2 = arith.constant 0 : i32
    return %c0_i32, %c0_i32_0, %c0_i32_1 : i32, i32, i32
  }
  func.func @transform_4(%arg0: i32) -> (i32, i32) {
    %c0_i32 = arith.constant 0 : i32
    %c0_i32_0 = arith.constant 0 : i32
    return %c0_i32, %arg0 : i32, i32
  }
}

</mosaic_0001>

<llo_original>
// kernel: mlp_forward.1
$region0: #{mlp_forward.1}
  #allocation0 [shape = 'u32[]', space=smem, size = 0x4, offset = 0x4, fixed_abs, tag = 'smem constant byte address 0x4 - core index']
  #allocation1 [shape = 'u32[144,128]{1,0:T(1,128)}', space=vmem, size = 0x12000, scoped, tag = 'internal scratch']
  %s0 = inlined_call_operand.vmem [shape: f32[8,16], index: 0, kind: input, shape index: {}]
  %s1 = inlined_call_operand.vmem [shape: f32[16,16], index: 1, kind: input, shape index: {}]
  %s2 = inlined_call_operand.vmem [shape: f32[5,16,16], index: 2, kind: input, shape index: {}]
  %s3 = inlined_call_operand.vmem [shape: f32[6,16,1], index: 3, kind: input, shape index: {}]
  %s4 = inlined_call_operand.hbm [shape: f32[1,8], index: 4, kind: output, shape index: {}]
  %s5 = sld [smem:[#allocation0]]
  $region26: #{mlp_forward.1} parent=0
    _
  %s7 = ssub.s32 1, %s5
  %s8 = scalar_select 0, %s7, %s5
  $region1: #{mlp_forward.1} parent=0
    #allocation2 [shape = 'u8[512]{0}', space=vmem, size = 0x400, scoped, tag = 'output window, operand 0, single buffered']
    #allocation3 [shape = 's32[1]{0}', space=sflag, size = 0x4, scoped, tag = 'scoped memory for mlp_forward.1']
    %9 = vsyncpa [#allocation3], 0
    // Predicated region
    $region2: #{mlp_forward.1} parent=1 // pred_check
      _
    $region3: #{mlp_forward.1} parent=1 // pred_check_branch
      %11 = sbr.rel (0) target = $region5
    $region4: #{mlp_forward.1} parent=1 // pred_region
      _
    $region5: #{mlp_forward.1} parent=1 // pred_fallthru
      _
    // Predicated region
    $region6: #{mlp_forward.1} parent=1 // pred_check
      _
    $region7: #{mlp_forward.1} parent=1 // pred_check_branch
      %13 = sbr.rel (0) target = $region9
    $region8: #{mlp_forward.1} parent=1 // pred_region
      _
    $region9: #{mlp_forward.1} parent=1 // pred_fallthru
      _
    // Predicated region
    $region10: #{mlp_forward.1} parent=1 // pred_check
      _
    $region11: #{mlp_forward.1} parent=1 // pred_check_branch
      %15 = sbr.rel (0) target = $region13
    $region12: #{mlp_forward.1} parent=1 // pred_region
      _
    $region13: #{mlp_forward.1} parent=1 // pred_fallthru
      _
    // Predicated region
    $region14: #{mlp_forward.1} parent=1 // pred_check
      _
    $region15: #{mlp_forward.1} parent=1 // pred_check_branch
      %17 = sbr.rel (0) target = $region17
    $region16: #{mlp_forward.1} parent=1 // pred_region
      _
    $region17: #{mlp_forward.1} parent=1 // pred_fallthru
      _
    %v18 = vld [vmem:[%s0] sm:$0xff]
    %v19 = vld [vmem:[%s0 + $0x8] sm:$0xff]
    %v20 = vld [vmem:[%s0 + $0x10] sm:$0xff]
    %v21 = vld [vmem:[%s0 + $0x18] sm:$0xff]
    %v22 = vld [vmem:[%s0 + $0x20] sm:$0xff]
    %v23 = vld [vmem:[%s0 + $0x28] sm:$0xff]
    %v24 = vld [vmem:[%s0 + $0x30] sm:$0xff]
    %v25 = vld [vmem:[%s0 + $0x38] sm:$0xff]
    %v26 = vld [vmem:[%s0 + $0x40] sm:$0xff]
    %v27 = vld [vmem:[%s0 + $0x48] sm:$0xff]
    %v28 = vld [vmem:[%s0 + $0x50] sm:$0xff]
    %v29 = vld [vmem:[%s0 + $0x58] sm:$0xff]
    %v30 = vld [vmem:[%s0 + $0x60] sm:$0xff]
    %v31 = vld [vmem:[%s0 + $0x68] sm:$0xff]
    %v32 = vld [vmem:[%s0 + $0x70] sm:$0xff]
    %v33 = vld [vmem:[%s0 + $0x78] sm:$0xff]
    %v34 = vld [vmem:[%s1] sm:$0xff]
    %v35 = vld [vmem:[%s1 + $0x8] sm:$0xff]
    %v36 = vld [vmem:[%s3] sm:$0xff]
    %v37 = vld [vmem:[%s3 + $0x8] sm:$0xff]
    %39 = vset.pattern.permute.xlu0 0
    %40 = vperm.xlu0 %39, %v36
    %v41 = vpop.permute.xlu0 %40
    %44 = vset.pattern.permute.xlu0 0
    %45 = vperm.xlu0 %44, %v37
    %v46 = vpop.permute.xlu0 %45
    %vm48 = vcmask 130048
    %v50 = vsel %vm48, %v34, 0
    %v53 = vsel %vm48, %v35, 0
    %v56 = vsel %vm48, %v18, 0
    %v59 = vsel %vm48, %v19, 0
    %v62 = vsel %vm48, %v20, 0
    %v65 = vsel %vm48, %v21, 0
    %v68 = vsel %vm48, %v22, 0
    %v71 = vsel %vm48, %v23, 0
    %v74 = vsel %vm48, %v24, 0
    %v77 = vsel %vm48, %v25, 0
    %v80 = vsel %vm48, %v26, 0
    %v83 = vsel %vm48, %v27, 0
    %v86 = vsel %vm48, %v28, 0
    %v89 = vsel %vm48, %v29, 0
    %v92 = vsel %vm48, %v30, 0
    %v95 = vsel %vm48, %v31, 0
    %v98 = vsel %vm48, %v32, 0
    %v101 = vsel %vm48, %v33, 0
    %103 = vmatprep.subr.mxu0 0.0
    %v104 = vand.u32 %v56, 4294901760
    %105 = vmatpush1.xpose.msra.mxu0 %v104
    %106 = vmatprep.subr.mxu0 0.0
    %v107 = vand.u32 %v59, 4294901760
    %108 = vmatpush1.xpose.msra.mxu0 %v107
    %109 = vmatprep.subr.mxu0 0.0
    %v110 = vand.u32 %v62, 4294901760
    %111 = vmatpush1.xpose.msra.mxu0 %v110
    %112 = vmatprep.subr.mxu0 0.0
    %v113 = vand.u32 %v65, 4294901760
    %114 = vmatpush1.xpose.msra.mxu0 %v113
    %115 = vmatprep.subr.mxu0 0.0
    %v116 = vand.u32 %v68, 4294901760
    %117 = vmatpush1.xpose.msra.mxu0 %v116
    %118 = vmatprep.subr.mxu0 0.0
    %v119 = vand.u32 %v71, 4294901760
    %120 = vmatpush1.xpose.msra.mxu0 %v119
    %121 = vmatprep.subr.mxu0 0.0
    %v122 = vand.u32 %v74, 4294901760
    %123 = vmatpush1.xpose.msra.mxu0 %v122
    %124 = vmatprep.subr.mxu0 0.0
    %v125 = vand.u32 %v77, 4294901760
    %126 = vmatpush1.xpose.msra.mxu0 %v125
    %127 = vmatprep.subr.mxu0 0.0
    %v128 = vand.u32 %v80, 4294901760
    %129 = vmatpush1.xpose.msra.mxu0 %v128
    %130 = vmatprep.subr.mxu0 0.0
    %v131 = vand.u32 %v83, 4294901760
    %132 = vmatpush1.xpose.msra.mxu0 %v131
    %133 = vmatprep.subr.mxu0 0.0
    %v134 = vand.u32 %v86, 4294901760
    %135 = vmatpush1.xpose.msra.mxu0 %v134
    %136 = vmatprep.subr.mxu0 0.0
    %v137 = vand.u32 %v89, 4294901760
    %138 = vmatpush1.xpose.msra.mxu0 %v137
    %139 = vmatprep.subr.mxu0 0.0
    %v140 = vand.u32 %v92, 4294901760
    %141 = vmatpush1.xpose.msra.mxu0 %v140
    %142 = vmatprep.subr.mxu0 0.0
    %v143 = vand.u32 %v95, 4294901760
    %144 = vmatpush1.xpose.msra.mxu0 %v143
    %145 = vmatprep.subr.mxu0 0.0
    %v146 = vand.u32 %v98, 4294901760
    %147 = vmatpush1.xpose.msra.mxu0 %v146
    %148 = vmatprep.subr.mxu0 0.0
    %v149 = vand.u32 %v101, 4294901760
    %150 = vmatpush1.xpose.msra.mxu0 %v149
    %151 = vmatprep.subr.mxu0 0.0
    %152 = vmatpush1.xpose.msra.mxu0 0.0
    %153 = vmatprep.subr.mxu0 0.0
    %154 = vmatpush1.xpose.msra.mxu0 0.0
    %155 = vmatprep.subr.mxu0 0.0
    %156 = vmatpush1.xpose.msra.mxu0 0.0
    %157 = vmatprep.subr.mxu0 0.0
    %158 = vmatpush1.xpose.msra.mxu0 0.0
    %159 = vmatprep.subr.mxu0 0.0
    %160 = vmatpush1.xpose.msra.mxu0 0.0
    %161 = vmatprep.subr.mxu0 0.0
    %162 = vmatpush1.xpose.msra.mxu0 0.0
    %163 = vmatprep.subr.mxu0 0.0
    %164 = vmatpush1.xpose.msra.mxu0 0.0
    %165 = vmatprep.subr.mxu0 0.0
    %166 = vmatpush1.xpose.msra.mxu0 0.0
    %167 = vmatprep.subr.mxu0 0.0
    %168 = vmatpush1.xpose.msra.mxu0 0.0
    %169 = vmatprep.subr.mxu0 0.0
    %170 = vmatpush1.xpose.msra.mxu0 0.0
    %171 = vmatprep.subr.mxu0 0.0
    %172 = vmatpush1.xpose.msra.mxu0 0.0
    %173 = vmatprep.subr.mxu0 0.0
    %174 = vmatpush1.xpose.msra.mxu0 0.0
    %175 = vmatprep.subr.mxu0 0.0
    %176 = vmatpush1.xpose.msra.mxu0 0.0
    %177 = vmatprep.subr.mxu0 0.0
    %178 = vmatpush1.xpose.msra.mxu0 0.0
    %179 = vmatprep.subr.mxu0 0.0
    %180 = vmatpush1.xpose.msra.mxu0 0.0
    %181 = vmatprep.subr.mxu0 0.0
    %182 = vmatpush1.xpose.msra.mxu0 0.0
    %183 = vmatprep.mubr.f32.mxu0 0.0
    %v184 = vand.u32 %v50, 4294901760
    %v185 = vsub.f32 %v50, %v184
    %v186 = vand.u32 %v185, 4294901760
    %v187 = vsub.f32 %v185, %v186
    %v188 = vand.u32 %v187, 4294901760
    %189 = vmatmul.mubr.f32.gmra.mrb[0].mxu0 %v188
    %v190 = vpop.f32.mrb[0].mxu0
    %v191 = vadd.f32 %v41, %v190
    %v192 = vpop.f32.mrb[0].mxu0
    %193 = vmatprep.mubr.f32.mxu0 0.0
    %v194 = vand.u32 %v53, 4294901760
    %v195 = vsub.f32 %v53, %v194
    %v196 = vand.u32 %v195, 4294901760
    %v197 = vsub.f32 %v195, %v196
    %v198 = vand.u32 %v197, 4294901760
    %199 = vmatmul.mubr.f32.gmra.mrb[0].mxu0 %v198
    %v200 = vpop.f32.mrb[0].mxu0
    %v201 = vadd.f32 %v46, %v200
    %v202 = vpop.f32.mrb[0].mxu0
    %203 = vdwg.mxu0
    %204 = vmatprep.subr.mxu0 0.0
    %v205 = vand.u32 %v56, 4294901760
    %v206 = vsub.f32 %v56, %v205
    %v207 = vand.u32 %v206, 4294901760
    %v208 = vsub.f32 %v206, %v207
    %v209 = vand.u32 %v208, 4294901760
    %210 = vmatpush1.xpose.msra.mxu0 %v209
    %211 = vmatprep.subr.mxu0 0.0
    %v212 = vand.u32 %v59, 4294901760
    %v213 = vsub.f32 %v59, %v212
    %v214 = vand.u32 %v213, 4294901760
    %v215 = vsub.f32 %v213, %v214
    %v216 = vand.u32 %v215, 4294901760
    %217 = vmatpush1.xpose.msra.mxu0 %v216
    %218 = vmatprep.subr.mxu0 0.0
    %v219 = vand.u32 %v62, 4294901760
    %v220 = vsub.f32 %v62, %v219
    %v221 = vand.u32 %v220, 4294901760
    %v222 = vsub.f32 %v220, %v221
    %v223 = vand.u32 %v222, 4294901760
    %224 = vmatpush1.xpose.msra.mxu0 %v223
    %225 = vmatprep.subr.mxu0 0.0
    %v226 = vand.u32 %v65, 4294901760
    %v227 = vsub.f32 %v65, %v226
    %v228 = vand.u32 %v227, 4294901760
    %v229 = vsub.f32 %v227, %v228
    %v230 = vand.u32 %v229, 4294901760
    %231 = vmatpush1.xpose.msra.mxu0 %v230
    %232 = vmatprep.subr.mxu0 0.0
    %v233 = vand.u32 %v68, 4294901760
    %v234 = vsub.f32 %v68, %v233
    %v235 = vand.u32 %v234, 4294901760
    %v236 = vsub.f32 %v234, %v235
    %v237 = vand.u32 %v236, 4294901760
    %238 = vmatpush1.xpose.msra.mxu0 %v237
    %239 = vmatprep.subr.mxu0 0.0
    %v240 = vand.u32 %v71, 4294901760
    %v241 = vsub.f32 %v71, %v240
    %v242 = vand.u32 %v241, 4294901760
    %v243 = vsub.f32 %v241, %v242
    %v244 = vand.u32 %v243, 4294901760
    %245 = vmatpush1.xpose.msra.mxu0 %v244
    %246 = vmatprep.subr.mxu0 0.0
    %v247 = vand.u32 %v74, 4294901760
    %v248 = vsub.f32 %v74, %v247
    %v249 = vand.u32 %v248, 4294901760
    %v250 = vsub.f32 %v248, %v249
    %v251 = vand.u32 %v250, 4294901760
    %252 = vmatpush1.xpose.msra.mxu0 %v251
    %253 = vmatprep.subr.mxu0 0.0
    %v254 = vand.u32 %v77, 4294901760
    %v255 = vsub.f32 %v77, %v254
    %v256 = vand.u32 %v255, 4294901760
    %v257 = vsub.f32 %v255, %v256
    %v258 = vand.u32 %v257, 4294901760
    %259 = vmatpush1.xpose.msra.mxu0 %v258
    %260 = vmatprep.subr.mxu0 0.0
    %v261 = vand.u32 %v80, 4294901760
    %v262 = vsub.f32 %v80, %v261
    %v263 = vand.u32 %v262, 4294901760
    %v264 = vsub.f32 %v262, %v263
    %v265 = vand.u32 %v264, 4294901760
    %266 = vmatpush1.xpose.msra.mxu0 %v265
    %267 = vmatprep.subr.mxu0 0.0
    %v268 = vand.u32 %v83, 4294901760
    %v269 = vsub.f32 %v83, %v268
    %v270 = vand.u32 %v269, 4294901760
    %v271 = vsub.f32 %v269, %v270
    %v272 = vand.u32 %v271, 4294901760
    %273 = vmatpush1.xpose.msra.mxu0 %v272
    %274 = vmatprep.subr.mxu0 0.0
    %v275 = vand.u32 %v86, 4294901760
    %v276 = vsub.f32 %v86, %v275
    %v277 = vand.u32 %v276, 4294901760
    %v278 = vsub.f32 %v276, %v277
    %v279 = vand.u32 %v278, 4294901760
    %280 = vmatpush1.xpose.msra.mxu0 %v279
    %281 = vmatprep.subr.mxu0 0.0
    %v282 = vand.u32 %v89, 4294901760
    %v283 = vsub.f32 %v89, %v282
    %v284 = vand.u32 %v283, 4294901760
    %v285 = vsub.f32 %v283, %v284
    %v286 = vand.u32 %v285, 4294901760
    %287 = vmatpush1.xpose.msra.mxu0 %v286
    %288 = vmatprep.subr.mxu0 0.0
    %v289 = vand.u32 %v92, 4294901760
    %v290 = vsub.f32 %v92, %v289
    %v291 = vand.u32 %v290, 4294901760
    %v292 = vsub.f32 %v290, %v291
    %v293 = vand.u32 %v292, 4294901760
    %294 = vmatpush1.xpose.msra.mxu0 %v293
    %295 = vmatprep.subr.mxu0 0.0
    %v296 = vand.u32 %v95, 4294901760
    %v297 = vsub.f32 %v95, %v296
    %v298 = vand.u32 %v297, 4294901760
    %v299 = vsub.f32 %v297, %v298
    %v300 = vand.u32 %v299, 4294901760
    %301 = vmatpush1.xpose.msra.mxu0 %v300
    %302 = vmatprep.subr.mxu0 0.0
    %v303 = vand.u32 %v98, 4294901760
    %v304 = vsub.f32 %v98, %v303
    %v305 = vand.u32 %v304, 4294901760
    %v306 = vsub.f32 %v304, %v305
    %v307 = vand.u32 %v306, 4294901760
    %308 = vmatpush1.xpose.msra.mxu0 %v307
    %309 = vmatprep.subr.mxu0 0.0
    %v310 = vand.u32 %v101, 4294901760
    %v311 = vsub.f32 %v101, %v310
    %v312 = vand.u32 %v311, 4294901760
    %v313 = vsub.f32 %v311, %v312
    %v314 = vand.u32 %v313, 4294901760
    %315 = vmatpush1.xpose.msra.mxu0 %v314
    %316 = vmatprep.subr.mxu0 0.0
    %317 = vmatpush1.xpose.msra.mxu0 0.0
    %318 = vmatprep.subr.mxu0 0.0
    %319 = vmatpush1.xpose.msra.mxu0 0.0
    %320 = vmatprep.subr.mxu0 0.0
    %321 = vmatpush1.xpose.msra.mxu0 0.0
    %322 = vmatprep.subr.mxu0 0.0
    %323 = vmatpush1.xpose.msra.mxu0 0.0
    %324 = vmatprep.subr.mxu0 0.0
    %325 = vmatpush1.xpose.msra.mxu0 0.0
    %326 = vmatprep.subr.mxu0 0.0
    %327 = vmatpush1.xpose.msra.mxu0 0.0
    %328 = vmatprep.subr.mxu0 0.0
    %329 = vmatpush1.xpose.msra.mxu0 0.0
    %330 = vmatprep.subr.mxu0 0.0
    %331 = vmatpush1.xpose.msra.mxu0 0.0
    %332 = vmatprep.subr.mxu0 0.0
    %333 = vmatpush1.xpose.msra.mxu0 0.0
    %334 = vmatprep.subr.mxu0 0.0
    %335 = vmatpush1.xpose.msra.mxu0 0.0
    %336 = vmatprep.subr.mxu0 0.0
    %337 = vmatpush1.xpose.msra.mxu0 0.0
    %338 = vmatprep.subr.mxu0 0.0
    %339 = vmatpush1.xpose.msra.mxu0 0.0
    %340 = vmatprep.subr.mxu0 0.0
    %341 = vmatpush1.xpose.msra.mxu0 0.0
    %342 = vmatprep.subr.mxu0 0.0
    %343 = vmatpush1.xpose.msra.mxu0 0.0
    %344 = vmatprep.subr.mxu0 0.0
    %345 = vmatpush1.xpose.msra.mxu0 0.0
    %346 = vmatprep.subr.mxu0 0.0
    %347 = vmatpush1.xpose.msra.mxu0 0.0
    %348 = vmatprep.mubr.f32.mxu0 0.0
    %v349 = vand.u32 %v50, 4294901760
    %350 = vmatmul.mubr.f32.gmra.mrb[0].mxu0 %v349
    %v351 = vpop.f32.mrb[0].mxu0
    %v352 = vadd.f32 %v191, %v351
    %v353 = vpop.f32.mrb[0].mxu0
    %354 = vmatprep.mubr.f32.mxu0 0.0
    %v355 = vand.u32 %v53, 4294901760
    %356 = vmatmul.mubr.f32.gmra.mrb[0].mxu0 %v355
    %v357 = vpop.f32.mrb[0].mxu0
    %v358 = vadd.f32 %v201, %v357
    %v359 = vpop.f32.mrb[0].mxu0
    %360 = vdwg.mxu0
    %361 = vmatprep.subr.mxu0 0.0
    %v362 = vand.u32 %v56, 4294901760
    %v363 = vsub.f32 %v56, %v362
    %364 = vmatpush1.xpose.msra.mxu0 %v363
    %365 = vmatprep.subr.mxu0 0.0
    %v366 = vand.u32 %v59, 4294901760
    %v367 = vsub.f32 %v59, %v366
    %368 = vmatpush1.xpose.msra.mxu0 %v367
    %369 = vmatprep.subr.mxu0 0.0
    %v370 = vand.u32 %v62, 4294901760
    %v371 = vsub.f32 %v62, %v370
    %372 = vmatpush1.xpose.msra.mxu0 %v371
    %373 = vmatprep.subr.mxu0 0.0
    %v374 = vand.u32 %v65, 4294901760
    %v375 = vsub.f32 %v65, %v374
    %376 = vmatpush1.xpose.msra.mxu0 %v375
    %377 = vmatprep.subr.mxu0 0.0
    %v378 = vand.u32 %v68, 4294901760
    %v379 = vsub.f32 %v68, %v378
    %380 = vmatpush1.xpose.msra.mxu0 %v379
    %381 = vmatprep.subr.mxu0 0.0
    %v382 = vand.u32 %v71, 4294901760
    %v383 = vsub.f32 %v71, %v382
    %384 = vmatpush1.xpose.msra.mxu0 %v383
    %385 = vmatprep.subr.mxu0 0.0
    %v386 = vand.u32 %v74, 4294901760
    %v387 = vsub.f32 %v74, %v386
    %388 = vmatpush1.xpose.msra.mxu0 %v387
    %389 = vmatprep.subr.mxu0 0.0
    %v390 = vand.u32 %v77, 4294901760
    %v391 = vsub.f32 %v77, %v390
    %392 = vmatpush1.xpose.msra.mxu0 %v391
    %393 = vmatprep.subr.mxu0 0.0
    %v394 = vand.u32 %v80, 4294901760
    %v395 = vsub.f32 %v80, %v394
    %396 = vmatpush1.xpose.msra.mxu0 %v395
    %397 = vmatprep.subr.mxu0 0.0
    %v398 = vand.u32 %v83, 4294901760
    %v399 = vsub.f32 %v83, %v398
    %400 = vmatpush1.xpose.msra.mxu0 %v399
    %401 = vmatprep.subr.mxu0 0.0
    %v402 = vand.u32 %v86, 4294901760
    %v403 = vsub.f32 %v86, %v402
    %404 = vmatpush1.xpose.msra.mxu0 %v403
    %405 = vmatprep.subr.mxu0 0.0
    %v406 = vand.u32 %v89, 4294901760
    %v407 = vsub.f32 %v89, %v406
    %408 = vmatpush1.xpose.msra.mxu0 %v407
    %409 = vmatprep.subr.mxu0 0.0
    %v410 = vand.u32 %v92, 4294901760
    %v411 = vsub.f32 %v92, %v410
    %412 = vmatpush1.xpose.msra.mxu0 %v411
    %413 = vmatprep.subr.mxu0 0.0
    %v414 = vand.u32 %v95, 4294901760
    %v415 = vsub.f32 %v95, %v414
    %416 = vmatpush1.xpose.msra.mxu0 %v415
    %417 = vmatprep.subr.mxu0 0.0
    %v418 = vand.u32 %v98, 4294901760
    %v419 = vsub.f32 %v98, %v418
    %420 = vmatpush1.xpose.msra.mxu0 %v419
    %421 = vmatprep.subr.mxu0 0.0
    %v422 = vand.u32 %v101, 4294901760
    %v423 = vsub.f32 %v101, %v422
    %424 = vmatpush1.xpose.msra.mxu0 %v423
    %425 = vmatprep.subr.mxu0 0.0
    %426 = vmatpush1.xpose.msra.mxu0 0.0
    %427 = vmatprep.subr.mxu0 0.0
    %428 = vmatpush1.xpose.msra.mxu0 0.0
    %429 = vmatprep.subr.mxu0 0.0
    %430 = vmatpush1.xpose.msra.mxu0 0.0
    %431 = vmatprep.subr.mxu0 0.0
    %432 = vmatpush1.xpose.msra.mxu0 0.0
    %433 = vmatprep.subr.mxu0 0.0
    %434 = vmatpush1.xpose.msra.mxu0 0.0
    %435 = vmatprep.subr.mxu0 0.0
    %436 = vmatpush1.xpose.msra.mxu0 0.0
    %437 = vmatprep.subr.mxu0 0.0
    %438 = vmatpush1.xpose.msra.mxu0 0.0
    %439 = vmatprep.subr.mxu0 0.0
    %440 = vmatpush1.xpose.msra.mxu0 0.0
    %441 = vmatprep.subr.mxu0 0.0
    %442 = vmatpush1.xpose.msra.mxu0 0.0
    %443 = vmatprep.subr.mxu0 0.0
    %444 = vmatpush1.xpose.msra.mxu0 0.0
    %445 = vmatprep.subr.mxu0 0.0
    %446 = vmatpush1.xpose.msra.mxu0 0.0
    %447 = vmatprep.subr.mxu0 0.0
    %448 = vmatpush1.xpose.msra.mxu0 0.0
    %449 = vmatprep.subr.mxu0 0.0
    %450 = vmatpush1.xpose.msra.mxu0 0.0
    %451 = vmatprep.subr.mxu0 0.0
    %452 = vmatpush1.xpose.msra.mxu0 0.0
    %453 = vmatprep.subr.mxu0 0.0
    %454 = vmatpush1.xpose.msra.mxu0 0.0
    %455 = vmatprep.subr.mxu0 0.0
    %456 = vmatpush1.xpose.msra.mxu0 0.0
    %457 = vmatprep.mubr.f32.mxu0 0.0
    %v458 = vand.u32 %v50, 4294901760
    %v459 = vsub.f32 %v50, %v458
    %460 = vmatmul.mubr.f32.gmra.mrb[0].mxu0 %v459
    %v461 = vpop.f32.mrb[0].mxu0
    %v462 = vadd.f32 %v352, %v461
    %v463 = vpop.f32.mrb[0].mxu0
    %464 = vmatprep.mubr.f32.mxu0 0.0
    %v465 = vand.u32 %v53, 4294901760
    %v466 = vsub.f32 %v53, %v465
    %467 = vmatmul.mubr.f32.gmra.mrb[0].mxu0 %v466
    %v468 = vpop.f32.mrb[0].mxu0
    %v469 = vadd.f32 %v358, %v468
    %v470 = vpop.f32.mrb[0].mxu0
    %471 = vdwg.mxu0
    %472 = vmatprep.subr.mxu0 0.0
    %v473 = vand.u32 %v56, 4294901760
    %474 = vmatpush1.xpose.msra.mxu0 %v473
    %475 = vmatprep.subr.mxu0 0.0
    %v476 = vand.u32 %v59, 4294901760
    %477 = vmatpush1.xpose.msra.mxu0 %v476
    %478 = vmatprep.subr.mxu0 0.0
    %v479 = vand.u32 %v62, 4294901760
    %480 = vmatpush1.xpose.msra.mxu0 %v479
    %481 = vmatprep.subr.mxu0 0.0
    %v482 = vand.u32 %v65, 4294901760
    %483 = vmatpush1.xpose.msra.mxu0 %v482
    %484 = vmatprep.subr.mxu0 0.0
    %v485 = vand.u32 %v68, 4294901760
    %486 = vmatpush1.xpose.msra.mxu0 %v485
    %487 = vmatprep.subr.mxu0 0.0
    %v488 = vand.u32 %v71, 4294901760
    %489 = vmatpush1.xpose.msra.mxu0 %v488
    %490 = vmatprep.subr.mxu0 0.0
    %v491 = vand.u32 %v74, 4294901760
    %492 = vmatpush1.xpose.msra.mxu0 %v491
    %493 = vmatprep.subr.mxu0 0.0
    %v494 = vand.u32 %v77, 4294901760
    %495 = vmatpush1.xpose.msra.mxu0 %v494
    %496 = vmatprep.subr.mxu0 0.0
    %v497 = vand.u32 %v80, 4294901760
    %498 = vmatpush1.xpose.msra.mxu0 %v497
    %499 = vmatprep.subr.mxu0 0.0
    %v500 = vand.u32 %v83, 4294901760
    %501 = vmatpush1.xpose.msra.mxu0 %v500
    %502 = vmatprep.subr.mxu0 0.0
    %v503 = vand.u32 %v86, 4294901760
    %504 = vmatpush1.xpose.msra.mxu0 %v503
    %505 = vmatprep.subr.mxu0 0.0
    %v506 = vand.u32 %v89, 4294901760
    %507 = vmatpush1.xpose.msra.mxu0 %v506
    %508 = vmatprep.subr.mxu0 0.0
    %v509 = vand.u32 %v92, 4294901760
    %510 = vmatpush1.xpose.msra.mxu0 %v509
    %511 = vmatprep.subr.mxu0 0.0
    %v512 = vand.u32 %v95, 4294901760
    %513 = vmatpush1.xpose.msra.mxu0 %v512
    %514 = vmatprep.subr.mxu0 0.0
    %v515 = vand.u32 %v98, 4294901760
    %516 = vmatpush1.xpose.msra.mxu0 %v515
    %517 = vmatprep.subr.mxu0 0.0
    %v518 = vand.u32 %v101, 4294901760
    %519 = vmatpush1.xpose.msra.mxu0 %v518
    %520 = vmatprep.subr.mxu0 0.0
    %521 = vmatpush1.xpose.msra.mxu0 0.0
    %522 = vmatprep.subr.mxu0 0.0
    %523 = vmatpush1.xpose.msra.mxu0 0.0
    %524 = vmatprep.subr.mxu0 0.0
    %525 = vmatpush1.xpose.msra.mxu0 0.0
    %526 = vmatprep.subr.mxu0 0.0
    %527 = vmatpush1.xpose.msra.mxu0 0.0
    %528 = vmatprep.subr.mxu0 0.0
    %529 = vmatpush1.xpose.msra.mxu0 0.0
    %530 = vmatprep.subr.mxu0 0.0
    %531 = vmatpush1.xpose.msra.mxu0 0.0
    %532 = vmatprep.subr.mxu0 0.0
    %533 = vmatpush1.xpose.msra.mxu0 0.0
    %534 = vmatprep.subr.mxu0 0.0
    %535 = vmatpush1.xpose.msra.mxu0 0.0
    %536 = vmatprep.subr.mxu0 0.0
    %537 = vmatpush1.xpose.msra.mxu0 0.0
    %538 = vmatprep.subr.mxu0 0.0
    %539 = vmatpush1.xpose.msra.mxu0 0.0
    %540 = vmatprep.subr.mxu0 0.0
    %541 = vmatpush1.xpose.msra.mxu0 0.0
    %542 = vmatprep.subr.mxu0 0.0
    %543 = vmatpush1.xpose.msra.mxu0 0.0
    %544 = vmatprep.subr.mxu0 0.0
    %545 = vmatpush1.xpose.msra.mxu0 0.0
    %546 = vmatprep.subr.mxu0 0.0
    %547 = vmatpush1.xpose.msra.mxu0 0.0
    %548 = vmatprep.subr.mxu0 0.0
    %549 = vmatpush1.xpose.msra.mxu0 0.0
    %550 = vmatprep.subr.mxu0 0.0
    %551 = vmatpush1.xpose.msra.mxu0 0.0
    %552 = vmatprep.mubr.f32.mxu0 0.0
    %v553 = vand.u32 %v50, 4294901760
    %v554 = vsub.f32 %v50, %v553
    %v555 = vand.u32 %v554, 4294901760
    %556 = vmatmul.mubr.f32.gmra.mrb[0].mxu0 %v555
    %v557 = vpop.f32.mrb[0].mxu0
    %v558 = vadd.f32 %v462, %v557
    %v559 = vpop.f32.mrb[0].mxu0
    %560 = vmatprep.mubr.f32.mxu0 0.0
    %v561 = vand.u32 %v53, 4294901760
    %v562 = vsub.f32 %v53, %v561
    %v563 = vand.u32 %v562, 4294901760
    %564 = vmatmul.mubr.f32.gmra.mrb[0].mxu0 %v563
    %v565 = vpop.f32.mrb[0].mxu0
    %v566 = vadd.f32 %v469, %v565
    %v567 = vpop.f32.mrb[0].mxu0
    %568 = vdwg.mxu0
    %569 = vmatprep.subr.mxu0 0.0
    %v570 = vand.u32 %v56, 4294901760
    %v571 = vsub.f32 %v56, %v570
    %v572 = vand.u32 %v571, 4294901760
    %573 = vmatpush1.xpose.msra.mxu0 %v572
    %574 = vmatprep.subr.mxu0 0.0
    %v575 = vand.u32 %v59, 4294901760
    %v576 = vsub.f32 %v59, %v575
    %v577 = vand.u32 %v576, 4294901760
    %578 = vmatpush1.xpose.msra.mxu0 %v577
    %579 = vmatprep.subr.mxu0 0.0
    %v580 = vand.u32 %v62, 4294901760
    %v581 = vsub.f32 %v62, %v580
    %v582 = vand.u32 %v581, 4294901760
    %583 = vmatpush1.xpose.msra.mxu0 %v582
    %584 = vmatprep.subr.mxu0 0.0
    %v585 = vand.u32 %v65, 4294901760
    %v586 = vsub.f32 %v65, %v585
    %v587 = vand.u32 %v586, 4294901760
    %588 = vmatpush1.xpose.msra.mxu0 %v587
    %589 = vmatprep.subr.mxu0 0.0
    %v590 = vand.u32 %v68, 4294901760
    %v591 = vsub.f32 %v68, %v590
    %v592 = vand.u32 %v591, 4294901760
    %593 = vmatpush1.xpose.msra.mxu0 %v592
    %594 = vmatprep.subr.mxu0 0.0
    %v595 = vand.u32 %v71, 4294901760
    %v596 = vsub.f32 %v71, %v595
    %v597 = vand.u32 %v596, 4294901760
    %598 = vmatpush1.xpose.msra.mxu0 %v597
    %599 = vmatprep.subr.mxu0 0.0
    %v600 = vand.u32 %v74, 4294901760
    %v601 = vsub.f32 %v74, %v600
    %v602 = vand.u32 %v601, 4294901760
    %603 = vmatpush1.xpose.msra.mxu0 %v602
    %604 = vmatprep.subr.mxu0 0.0
    %v605 = vand.u32 %v77, 4294901760
    %v606 = vsub.f32 %v77, %v605
    %v607 = vand.u32 %v606, 4294901760
    %608 = vmatpush1.xpose.msra.mxu0 %v607
    %609 = vmatprep.subr.mxu0 0.0
    %v610 = vand.u32 %v80, 4294901760
    %v611 = vsub.f32 %v80, %v610
    %v612 = vand.u32 %v611, 4294901760
    %613 = vmatpush1.xpose.msra.mxu0 %v612
    %614 = vmatprep.subr.mxu0 0.0
    %v615 = vand.u32 %v83, 4294901760
    %v616 = vsub.f32 %v83, %v615
    %v617 = vand.u32 %v616, 4294901760
    %618 = vmatpush1.xpose.msra.mxu0 %v617
    %619 = vmatprep.subr.mxu0 0.0
    %v620 = vand.u32 %v86, 4294901760
    %v621 = vsub.f32 %v86, %v620
    %v622 = vand.u32 %v621, 4294901760
    %623 = vmatpush1.xpose.msra.mxu0 %v622
    %624 = vmatprep.subr.mxu0 0.0
    %v625 = vand.u32 %v89, 4294901760
    %v626 = vsub.f32 %v89, %v625
    %v627 = vand.u32 %v626, 4294901760
    %628 = vmatpush1.xpose.msra.mxu0 %v627
    %629 = vmatprep.subr.mxu0 0.0
    %v630 = vand.u32 %v92, 4294901760
    %v631 = vsub.f32 %v92, %v630
    %v632 = vand.u32 %v631, 4294901760
    %633 = vmatpush1.xpose.msra.mxu0 %v632
    %634 = vmatprep.subr.mxu0 0.0
    %v635 = vand.u32 %v95, 4294901760
    %v636 = vsub.f32 %v95, %v635
    %v637 = vand.u32 %v636, 4294901760
    %638 = vmatpush1.xpose.msra.mxu0 %v637
    %639 = vmatprep.subr.mxu0 0.0
    %v640 = vand.u32 %v98, 4294901760
    %v641 = vsub.f32 %v98, %v640
    %v642 = vand.u32 %v641, 4294901760
    %643 = vmatpush1.xpose.msra.mxu0 %v642
    %644 = vmatprep.subr.mxu0 0.0
    %v645 = vand.u32 %v101, 4294901760
    %v646 = vsub.f32 %v101, %v645
    %v647 = vand.u32 %v646, 4294901760
    %648 = vmatpush1.xpose.msra.mxu0 %v647
    %649 = vmatprep.subr.mxu0 0.0
    %650 = vmatpush1.xpose.msra.mxu0 0.0
    %651 = vmatprep.subr.mxu0 0.0
    %652 = vmatpush1.xpose.msra.mxu0 0.0
    %653 = vmatprep.subr.mxu0 0.0
    %654 = vmatpush1.xpose.msra.mxu0 0.0
    %655 = vmatprep.subr.mxu0 0.0
    %656 = vmatpush1.xpose.msra.mxu0 0.0
    %657 = vmatprep.subr.mxu0 0.0
    %658 = vmatpush1.xpose.msra.mxu0 0.0
    %659 = vmatprep.subr.mxu0 0.0
    %660 = vmatpush1.xpose.msra.mxu0 0.0
    %661 = vmatprep.subr.mxu0 0.0
    %662 = vmatpush1.xpose.msra.mxu0 0.0
    %663 = vmatprep.subr.mxu0 0.0
    %664 = vmatpush1.xpose.msra.mxu0 0.0
    %665 = vmatprep.subr.mxu0 0.0
    %666 = vmatpush1.xpose.msra.mxu0 0.0
    %667 = vmatprep.subr.mxu0 0.0
    %668 = vmatpush1.xpose.msra.mxu0 0.0
    %669 = vmatprep.subr.mxu0 0.0
    %670 = vmatpush1.xpose.msra.mxu0 0.0
    %671 = vmatprep.subr.mxu0 0.0
    %672 = vmatpush1.xpose.msra.mxu0 0.0
    %673 = vmatprep.subr.mxu0 0.0
    %674 = vmatpush1.xpose.msra.mxu0 0.0
    %675 = vmatprep.subr.mxu0 0.0
    %676 = vmatpush1.xpose.msra.mxu0 0.0
    %677 = vmatprep.subr.mxu0 0.0
    %678 = vmatpush1.xpose.msra.mxu0 0.0
    %679 = vmatprep.subr.mxu0 0.0
    %680 = vmatpush1.xpose.msra.mxu0 0.0
    %681 = vmatprep.mubr.f32.mxu0 0.0
    %v682 = vand.u32 %v50, 4294901760
    %683 = vmatmul.mubr.f32.gmra.mrb[0].mxu0 %v682
    %v684 = vpop.f32.mrb[0].mxu0
    %v685 = vadd.f32 %v558, %v684
    %v686 = vpop.f32.mrb[0].mxu0
    %687 = vmatprep.mubr.f32.mxu0 0.0
    %v688 = vand.u32 %v53, 4294901760
    %689 = vmatmul.mubr.f32.gmra.mrb[0].mxu0 %v688
    %v690 = vpop.f32.mrb[0].mxu0
    %v691 = vadd.f32 %v566, %v690
    %v692 = vpop.f32.mrb[0].mxu0
    %693 = vdwg.mxu0
    %694 = vmatprep.subr.mxu0 0.0
    %v695 = vand.u32 %v56, 4294901760
    %696 = vmatpush1.xpose.msra.mxu0 %v695
    %697 = vmatprep.subr.mxu0 0.0
    %v698 = vand.u32 %v59, 4294901760
    %699 = vmatpush1.xpose.msra.mxu0 %v698
    %700 = vmatprep.subr.mxu0 0.0
    %v701 = vand.u32 %v62, 4294901760
    %702 = vmatpush1.xpose.msra.mxu0 %v701
    %703 = vmatprep.subr.mxu0 0.0
    %v704 = vand.u32 %v65, 4294901760
    %705 = vmatpush1.xpose.msra.mxu0 %v704
    %706 = vmatprep.subr.mxu0 0.0
    %v707 = vand.u32 %v68, 4294901760
    %708 = vmatpush1.xpose.msra.mxu0 %v707
    %709 = vmatprep.subr.mxu0 0.0
    %v710 = vand.u32 %v71, 4294901760
    %711 = vmatpush1.xpose.msra.mxu0 %v710
    %712 = vmatprep.subr.mxu0 0.0
    %v713 = vand.u32 %v74, 4294901760
    %714 = vmatpush1.xpose.msra.mxu0 %v713
    %715 = vmatprep.subr.mxu0 0.0
    %v716 = vand.u32 %v77, 4294901760
    %717 = vmatpush1.xpose.msra.mxu0 %v716
    %718 = vmatprep.subr.mxu0 0.0
    %v719 = vand.u32 %v80, 4294901760
    %720 = vmatpush1.xpose.msra.mxu0 %v719
    %721 = vmatprep.subr.mxu0 0.0
    %v722 = vand.u32 %v83, 4294901760
    %723 = vmatpush1.xpose.msra.mxu0 %v722
    %724 = vmatprep.subr.mxu0 0.0
    %v725 = vand.u32 %v86, 4294901760
    %726 = vmatpush1.xpose.msra.mxu0 %v725
    %727 = vmatprep.subr.mxu0 0.0
    %v728 = vand.u32 %v89, 4294901760
    %729 = vmatpush1.xpose.msra.mxu0 %v728
    %730 = vmatprep.subr.mxu0 0.0
    %v731 = vand.u32 %v92, 4294901760
    %732 = vmatpush1.xpose.msra.mxu0 %v731
    %733 = vmatprep.subr.mxu0 0.0
    %v734 = vand.u32 %v95, 4294901760
    %735 = vmatpush1.xpose.msra.mxu0 %v734
    %736 = vmatprep.subr.mxu0 0.0
    %v737 = vand.u32 %v98, 4294901760
    %738 = vmatpush1.xpose.msra.mxu0 %v737
    %739 = vmatprep.subr.mxu0 0.0
    %v740 = vand.u32 %v101, 4294901760
    %741 = vmatpush1.xpose.msra.mxu0 %v740
    %742 = vmatprep.subr.mxu0 0.0
    %743 = vmatpush1.xpose.msra.mxu0 0.0
    %744 = vmatprep.subr.mxu0 0.0
    %745 = vmatpush1.xpose.msra.mxu0 0.0
    %746 = vmatprep.subr.mxu0 0.0
    %747 = vmatpush1.xpose.msra.mxu0 0.0
    %748 = vmatprep.subr.mxu0 0.0
    %749 = vmatpush1.xpose.msra.mxu0 0.0
    %750 = vmatprep.subr.mxu0 0.0
    %751 = vmatpush1.xpose.msra.mxu0 0.0
    %752 = vmatprep.subr.mxu0 0.0
    %753 = vmatpush1.xpose.msra.mxu0 0.0
    %754 = vmatprep.subr.mxu0 0.0
    %755 = vmatpush1.xpose.msra.mxu0 0.0
    %756 = vmatprep.subr.mxu0 0.0
    %757 = vmatpush1.xpose.msra.mxu0 0.0
    %758 = vmatprep.subr.mxu0 0.0
    %759 = vmatpush1.xpose.msra.mxu0 0.0
    %760 = vmatprep.subr.mxu0 0.0
    %761 = vmatpush1.xpose.msra.mxu0 0.0
    %762 = vmatprep.subr.mxu0 0.0
    %763 = vmatpush1.xpose.msra.mxu0 0.0
    %764 = vmatprep.subr.mxu0 0.0
    %765 = vmatpush1.xpose.msra.mxu0 0.0
    %766 = vmatprep.subr.mxu0 0.0
    %767 = vmatpush1.xpose.msra.mxu0 0.0
    %768 = vmatprep.subr.mxu0 0.0
    %769 = vmatpush1.xpose.msra.mxu0 0.0
    %770 = vmatprep.subr.mxu0 0.0
    %771 = vmatpush1.xpose.msra.mxu0 0.0
    %772 = vmatprep.subr.mxu0 0.0
    %773 = vmatpush1.xpose.msra.mxu0 0.0
    %774 = vmatprep.mubr.f32.mxu0 0.0
    %v775 = vand.u32 %v50, 4294901760
    %776 = vmatmul.mubr.f32.gmra.mrb[0].mxu0 %v775
    %v777 = vpop.f32.mrb[0].mxu0
    %v778 = vadd.f32 %v685, %v777
    %v779 = vpop.f32.mrb[0].mxu0
    %780 = vmatprep.mubr.f32.mxu0 0.0
    %v781 = vand.u32 %v53, 4294901760
    %782 = vmatmul.mubr.f32.gmra.mrb[0].mxu0 %v781
    %v783 = vpop.f32.mrb[0].mxu0
    %v784 = vadd.f32 %v691, %v783
    %v785 = vpop.f32.mrb[0].mxu0
    %786 = vdwg.mxu0
    %v787 = vtanh.pop %v778
    %v788 = vtanh.pop %v784
    %v789 = vld [vmem:[%s2] sm:$0xff]
    %v790 = vld [vmem:[%s2 + $0x8] sm:$0xff]
    %s791 = scalar_lea.vmem %s3, 16
    %v792 = vld [vmem:[%s791] sm:$0xff]
    %v793 = vld [vmem:[%s791 + $0x8] sm:$0xff]
    %795 = vset.pattern.permute.xlu0 0
    %796 = vperm.xlu0 %795, %v792
    %v797 = vpop.permute.xlu0 %796
    %800 = vset.pattern.permute.xlu0 0
    %801 = vperm.xlu0 %800, %v793
    %v802 = vpop.permute.xlu0 %801
    %v805 = vsel %vm48, %v789, 0
    %v808 = vsel %vm48, %v790, 0
    %810 = vmatprep.subr.mxu0 0.0
    %v811 = vand.u32 %v787, 4294901760
    %812 = vmatpush1.msra.mxu0 %v811
    %813 = vmatprep.subr.mxu0 0.0
    %v814 = vand.u32 %v788, 4294901760
    %815 = vmatpush1.msra.mxu0 %v814
    %816 = vmatprep.subr.mxu0 0.0
    %817 = vmatpush1.msra.mxu0 0.0
    %818 = vmatprep.subr.mxu0 0.0
    %819 = vmatpush1.msra.mxu0 0.0
    %820 = vmatprep.subr.mxu0 0.0
    %821 = vmatpush1.msra.mxu0 0.0
    %822 = vmatprep.subr.mxu0 0.0
    %823 = vmatpush1.msra.mxu0 0.0
    %824 = vmatprep.subr.mxu0 0.0
    %825 = vmatpush1.msra.mxu0 0.0
    %826 = vmatprep.subr.mxu0 0.0
    %827 = vmatpush1.msra.mxu0 0.0
    %828 = vmatprep.subr.mxu0 0.0
    %829 = vmatpush1.msra.mxu0 0.0
    %830 = vmatprep.subr.mxu0 0.0
    %831 = vmatpush1.msra.mxu0 0.0
    %832 = vmatprep.subr.mxu0 0.0
    %833 = vmatpush1.msra.mxu0 0.0
    %834 = vmatprep.subr.mxu0 0.0
    %835 = vmatpush1.msra.mxu0 0.0
    %836 = vmatprep.subr.mxu0 0.0
    %837 = vmatpush1.msra.mxu0 0.0
    %838 = vmatprep.subr.mxu0 0.0
    %839 = vmatpush1.msra.mxu0 0.0
    %840 = vmatprep.subr.mxu0 0.0
    %841 = vmatpush1.msra.mxu0 0.0
    %842 = vmatprep.subr.mxu0 0.0
    %843 = vmatpush1.msra.mxu0 0.0
    %844 = vmatprep.subr.mxu0 0.0
    %845 = vmatpush1.msra.mxu0 0.0
    %846 = vmatprep.subr.mxu0 0.0
    %847 = vmatpush1.msra.mxu0 0.0
    %848 = vmatprep.subr.mxu0 0.0
    %849 = vmatpush1.msra.mxu0 0.0
    %850 = vmatprep.subr.mxu0 0.0
    %851 = vmatpush1.msra.mxu0 0.0
    %852 = vmatprep.subr.mxu0 0.0
    %853 = vmatpush1.msra.mxu0 0.0
    %854 = vmatprep.subr.mxu0 0.0
    %855 = vmatpush1.msra.mxu0 0.0
    %856 = vmatprep.subr.mxu0 0.0
    %857 = vmatpush1.msra.mxu0 0.0
    %858 = vmatprep.subr.mxu0 0.0
    %859 = vmatpush1.msra.mxu0 0.0
    %860 = vmatprep.subr.mxu0 0.0
    %861 = vmatpush1.msra.mxu0 0.0
    %862 = vmatprep.subr.mxu0 0.0
    %863 = vmatpush1.msra.mxu0 0.0
    %864 = vmatprep.subr.mxu0 0.0
    %865 = vmatpush1.msra.mxu0 0.0
    %866 = vmatprep.subr.mxu0 0.0
    %867 = vmatpush1.msra.mxu0 0.0
    %868 = vmatprep.subr.mxu0 0.0
    %869 = vmatpush1.msra.mxu0 0.0
    %870 = vmatprep.subr.mxu0 0.0
    %871 = vmatpush1.msra.mxu0 0.0
    %872 = vmatprep.subr.mxu0 0.0
    %873 = vmatpush1.msra.mxu0 0.0
    %874 = vmatprep.subr.mxu0 0.0
    %875 = vmatpush1.msra.mxu0 0.0
    %876 = vmatprep.mubr.f32.mxu0 0.0
    %v877 = vand.u32 %v805, 4294901760
    %v878 = vsub.f32 %v805, %v877
    %v879 = vand.u32 %v878, 4294901760
    %v880 = vsub.f32 %v878, %v879
    %v881 = vand.u32 %v880, 4294901760
    %882 = vmatmul.mubr.f32.gmra.mrb[0].mxu0 %v881
    %v883 = vpop.f32.mrb[0].mxu0
    %v884 = vadd.f32 %v797, %v883
    %v885 = vpop.f32.mrb[0].mxu0
    %886 = vmatprep.mubr.f32.mxu0 0.0
    %v887 = vand.u32 %v808, 4294901760
    %v888 = vsub.f32 %v808, %v887
    %v889 = vand.u32 %v888, 4294901760
    %v890 = vsub.f32 %v888, %v889
    %v891 = vand.u32 %v890, 4294901760
    %892 = vmatmul.mubr.f32.gmra.mrb[0].mxu0 %v891
    %v893 = vpop.f32.mrb[0].mxu0
    %v894 = vadd.f32 %v802, %v893
    %v895 = vpop.f32.mrb[0].mxu0
    %896 = vdwg.mxu0
    %897 = vmatprep.subr.mxu0 0.0
    %v898 = vand.u32 %v787, 4294901760
    %v899 = vsub.f32 %v787, %v898
    %v900 = vand.u32 %v899, 4294901760
    %v901 = vsub.f32 %v899, %v900
    %v902 = vand.u32 %v901, 4294901760
    %903 = vmatpush1.msra.mxu0 %v902
    %904 = vmatprep.subr.mxu0 0.0
    %v905 = vand.u32 %v788, 4294901760
    %v906 = vsub.f32 %v788, %v905
    %v907 = vand.u32 %v906, 4294901760
    %v908 = vsub.f32 %v906, %v907
    %v909 = vand.u32 %v908, 4294901760
    %910 = vmatpush1.msra.mxu0 %v909
    %911 = vmatprep.subr.mxu0 0.0
    %912 = vmatpush1.msra.mxu0 0.0
    %913 = vmatprep.subr.mxu0 0.0
    %914 = vmatpush1.msra.mxu0 0.0
    %915 = vmatprep.subr.mxu0 0.0
    %916 = vmatpush1.msra.mxu0 0.0
    %917 = vmatprep.subr.mxu0 0.0
    %918 = vmatpush1.msra.mxu0 0.0
    %919 = vmatprep.subr.mxu0 0.0
    %920 = vmatpush1.msra.mxu0 0.0
    %921 = vmatprep.subr.mxu0 0.0
    %922 = vmatpush1.msra.mxu0 0.0
    %923 = vmatprep.subr.mxu0 0.0
    %924 = vmatpush1.msra.mxu0 0.0
    %925 = vmatprep.subr.mxu0 0.0
    %926 = vmatpush1.msra.mxu0 0.0
    %927 = vmatprep.subr.mxu0 0.0
    %928 = vmatpush1.msra.mxu0 0.0
    %929 = vmatprep.subr.mxu0 0.0
    %930 = vmatpush1.msra.mxu0 0.0
    %931 = vmatprep.subr.mxu0 0.0
    %932 = vmatpush1.msra.mxu0 0.0
    %933 = vmatprep.subr.mxu0 0.0
    %934 = vmatpush1.msra.mxu0 0.0
    %935 = vmatprep.subr.mxu0 0.0
    %936 = vmatpush1.msra.mxu0 0.0
    %937 = vmatprep.subr.mxu0 0.0
    %938 = vmatpush1.msra.mxu0 0.0
    %939 = vmatprep.subr.mxu0 0.0
    %940 = vmatpush1.msra.mxu0 0.0
    %941 = vmatprep.subr.mxu0 0.0
    %942 = vmatpush1.msra.mxu0 0.0
    %943 = vmatprep.subr.mxu0 0.0
    %944 = vmatpush1.msra.mxu0 0.0
    %945 = vmatprep.subr.mxu0 0.0
    %946 = vmatpush1.msra.mxu0 0.0
    %947 = vmatprep.subr.mxu0 0.0
    %948 = vmatpush1.msra.mxu0 0.0
    %949 = vmatprep.subr.mxu0 0.0
    %950 = vmatpush1.msra.mxu0 0.0
    %951 = vmatprep.subr.mxu0 0.0
    %952 = vmatpush1.msra.mxu0 0.0
    %953 = vmatprep.subr.mxu0 0.0
    %954 = vmatpush1.msra.mxu0 0.0
    %955 = vmatprep.subr.mxu0 0.0
    %956 = vmatpush1.msra.mxu0 0.0
    %957 = vmatprep.subr.mxu0 0.0
    %958 = vmatpush1.msra.mxu0 0.0
    %959 = vmatprep.subr.mxu0 0.0
    %960 = vmatpush1.msra.mxu0 0.0
    %961 = vmatprep.subr.mxu0 0.0
    %962 = vmatpush1.msra.mxu0 0.0
    %963 = vmatprep.subr.mxu0 0.0
    %964 = vmatpush1.msra.mxu0 0.0
    %965 = vmatprep.subr.mxu0 0.0
    %966 = vmatpush1.msra.mxu0 0.0
    %967 = vmatprep.subr.mxu0 0.0
    %968 = vmatpush1.msra.mxu0 0.0
    %969 = vmatprep.subr.mxu0 0.0
    %970 = vmatpush1.msra.mxu0 0.0
    %971 = vmatprep.mubr.f32.mxu0 0.0
    %v972 = vand.u32 %v805, 4294901760
    %973 = vmatmul.mubr.f32.gmra.mrb[0].mxu0 %v972
    %v974 = vpop.f32.mrb[0].mxu0
    %v975 = vadd.f32 %v884, %v974
    %v976 = vpop.f32.mrb[0].mxu0
    %977 = vmatprep.mubr.f32.mxu0 0.0
    %v978 = vand.u32 %v808, 4294901760
    %979 = vmatmul.mubr.f32.gmra.mrb[0].mxu0 %v978
    %v980 = vpop.f32.mrb[0].mxu0
    %v981 = vadd.f32 %v894, %v980
    %v982 = vpop.f32.mrb[0].mxu0
    %983 = vdwg.mxu0
    %984 = vmatprep.subr.mxu0 0.0
    %v985 = vand.u32 %v787, 4294901760
    %v986 = vsub.f32 %v787, %v985
    %987 = vmatpush1.msra.mxu0 %v986
    %988 = vmatprep.subr.mxu0 0.0
    %v989 = vand.u32 %v788, 4294901760
    %v990 = vsub.f32 %v788, %v989
    %991 = vmatpush1.msra.mxu0 %v990
    %992 = vmatprep.subr.mxu0 0.0
    %993 = vmatpush1.msra.mxu0 0.0
    %994 = vmatprep.subr.mxu0 0.0
    %995 = vmatpush1.msra.mxu0 0.0
    %996 = vmatprep.subr.mxu0 0.0
    %997 = vmatpush1.msra.mxu0 0.0
    %998 = vmatprep.subr.mxu0 0.0
    %999 = vmatpush1.msra.mxu0 0.0
    %1000 = vmatprep.subr.mxu0 0.0
    %1001 = vmatpush1.msra.mxu0 0.0
    %1002 = vmatprep.subr.mxu0 0.0
    %1003 = vmatpush1.msra.mxu0 0.0
    %1004 = vmatprep.subr.mxu0 0.0
    %1005 = vmatpush1.msra.mxu0 0.0
    %1006 = vmatprep.subr.mxu0 0.0
    %1007 = vmatpush1.msra.mxu0 0.0
    %1008 = vmatprep.subr.mxu0 0.0
    %1009 = vmatpush1.msra.mxu0 0.0
    %1010 = vmatprep.subr.mxu0 0.0
    %1011 = vmatpush1.msra.mxu0 0.0
    %1012 = vmatprep.subr.mxu0 0.0
    %1013 = vmatpush1.msra.mxu0 0.0
    %1014 = vmatprep.subr.mxu0 0.0
    %1015 = vmatpush1.msra.mxu0 0.0
    %1016 = vmatprep.subr.mxu0 0.0
    %1017 = vmatpush1.msra.mxu0 0.0
    %1018 = vmatprep.subr.mxu0 0.0
    %1019 = vmatpush1.msra.mxu0 0.0
    %1020 = vmatprep.subr.mxu0 0.0
    %1021 = vmatpush1.msra.mxu0 0.0
    %1022 = vmatprep.subr.mxu0 0.0
    %1023 = vmatpush1.msra.mxu0 0.0
    %1024 = vmatprep.subr.mxu0 0.0
    %1025 = vmatpush1.msra.mxu0 0.0
    %1026 = vmatprep.subr.mxu0 0.0
    %1027 = vmatpush1.msra.mxu0 0.0
    %1028 = vmatprep.subr.mxu0 0.0
    %1029 = vmatpush1.msra.mxu0 0.0
    %1030 = vmatprep.subr.mxu0 0.0
    %1031 = vmatpush1.msra.mxu0 0.0
    %1032 = vmatprep.subr.mxu0 0.0
    %1033 = vmatpush1.msra.mxu0 0.0
    %1034 = vmatprep.subr.mxu0 0.0
    %1035 = vmatpush1.msra.mxu0 0.0
    %1036 = vmatprep.subr.mxu0 0.0
    %1037 = vmatpush1.msra.mxu0 0.0
    %1038 = vmatprep.subr.mxu0 0.0
    %1039 = vmatpush1.msra.mxu0 0.0
    %1040 = vmatprep.subr.mxu0 0.0
    %1041 = vmatpush1.msra.mxu0 0.0
    %1042 = vmatprep.subr.mxu0 0.0
    %1043 = vmatpush1.msra.mxu0 0.0
    %1044 = vmatprep.subr.mxu0 0.0
    %1045 = vmatpush1.msra.mxu0 0.0
    %1046 = vmatprep.subr.mxu0 0.0
    %1047 = vmatpush1.msra.mxu0 0.0
    %1048 = vmatprep.subr.mxu0 0.0
    %1049 = vmatpush1.msra.mxu0 0.0
    %1050 = vmatprep.subr.mxu0 0.0
    %1051 = vmatpush1.msra.mxu0 0.0
    %1052 = vmatprep.mubr.f32.mxu0 0.0
    %v1053 = vand.u32 %v805, 4294901760
    %v1054 = vsub.f32 %v805, %v1053
    %1055 = vmatmul.mubr.f32.gmra.mrb[0].mxu0 %v1054
    %v1056 = vpop.f32.mrb[0].mxu0
    %v1057 = vadd.f32 %v975, %v1056
    %v1058 = vpop.f32.mrb[0].mxu0
    %1059 = vmatprep.mubr.f32.mxu0 0.0
    %v1060 = vand.u32 %v808, 4294901760
    %v1061 = vsub.f32 %v808, %v1060
    %1062 = vmatmul.mubr.f32.gmra.mrb[0].mxu0 %v1061
    %v1063 = vpop.f32.mrb[0].mxu0
    %v1064 = vadd.f32 %v981, %v1063
    %v1065 = vpop.f32.mrb[0].mxu0
    %1066 = vdwg.mxu0
    %1067 = vmatprep.subr.mxu0 0.0
    %v1068 = vand.u32 %v787, 4294901760
    %1069 = vmatpush1.msra.mxu0 %v1068
    %1070 = vmatprep.subr.mxu0 0.0
    %v1071 = vand.u32 %v788, 4294901760
    %1072 = vmatpush1.msra.mxu0 %v1071
    %1073 = vmatprep.subr.mxu0 0.0
    %1074 = vmatpush1.msra.mxu0 0.0
    %1075 = vmatprep.subr.mxu0 0.0
    %1076 = vmatpush1.msra.mxu0 0.0
    %1077 = vmatprep.subr.mxu0 0.0
    %1078 = vmatpush1.msra.mxu0 0.0
    %1079 = vmatprep.subr.mxu0 0.0
    %1080 = vmatpush1.msra.mxu0 0.0
    %1081 = vmatprep.subr.mxu0 0.0
    %1082 = vmatpush1.msra.mxu0 0.0
    %1083 = vmatprep.subr.mxu0 0.0
    %1084 = vmatpush1.msra.mxu0 0.0
    %1085 = vmatprep.subr.mxu0 0.0
    %1086 = vmatpush1.msra.mxu0 0.0
    %1087 = vmatprep.subr.mxu0 0.0
    %1088 = vmatpush1.msra.mxu0 0.0
    %1089 = vmatprep.subr.mxu0 0.0
    %1090 = vmatpush1.msra.mxu0 0.0
    %1091 = vmatprep.subr.mxu0 0.0
    %1092 = vmatpush1.msra.mxu0 0.0
    %1093 = vmatprep.subr.mxu0 0.0
    %1094 = vmatpush1.msra.mxu0 0.0
    %1095 = vmatprep.subr.mxu0 0.0
    %1096 = vmatpush1.msra.mxu0 0.0
    %1097 = vmatprep.subr.mxu0 0.0
    %1098 = vmatpush1.msra.mxu0 0.0
    %1099 = vmatprep.subr.mxu0 0.0
    %1100 = vmatpush1.msra.mxu0 0.0
    %1101 = vmatprep.subr.mxu0 0.0
    %1102 = vmatpush1.msra.mxu0 0.0
    %1103 = vmatprep.subr.mxu0 0.0
    %1104 = vmatpush1.msra.mxu0 0.0
    %1105 = vmatprep.subr.mxu0 0.0
    %1106 = vmatpush1.msra.mxu0 0.0
    %1107 = vmatprep.subr.mxu0 0.0
    %1108 = vmatpush1.msra.mxu0 0.0
    %1109 = vmatprep.subr.mxu0 0.0
    %1110 = vmatpush1.msra.mxu0 0.0
    %1111 = vmatprep.subr.mxu0 0.0
    %1112 = vmatpush1.msra.mxu0 0.0
    %1113 = vmatprep.subr.mxu0 0.0
    %1114 = vmatpush1.msra.mxu0 0.0
    %1115 = vmatprep.subr.mxu0 0.0
    %1116 = vmatpush1.msra.mxu0 0.0
    %1117 = vmatprep.subr.mxu0 0.0
    %1118 = vmatpush1.msra.mxu0 0.0
    %1119 = vmatprep.subr.mxu0 0.0
    %1120 = vmatpush1.msra.mxu0 0.0
    %1121 = vmatprep.subr.mxu0 0.0
    %1122 = vmatpush1.msra.mxu0 0.0
    %1123 = vmatprep.subr.mxu0 0.0
    %1124 = vmatpush1.msra.mxu0 0.0
    %1125 = vmatprep.subr.mxu0 0.0
    %1126 = vmatpush1.msra.mxu0 0.0
    %1127 = vmatprep.subr.mxu0 0.0
    %1128 = vmatpush1.msra.mxu0 0.0
    %1129 = vmatprep.subr.mxu0 0.0
    %1130 = vmatpush1.msra.mxu0 0.0
    %1131 = vmatprep.subr.mxu0 0.0
    %1132 = vmatpush1.msra.mxu0 0.0
    %1133 = vmatprep.mubr.f32.mxu0 0.0
    %v1134 = vand.u32 %v805, 4294901760
    %v1135 = vsub.f32 %v805, %v1134
    %v1136 = vand.u32 %v1135, 4294901760
    %1137 = vmatmul.mubr.f32.gmra.mrb[0].mxu0 %v1136
    %v1138 = vpop.f32.mrb[0].mxu0
    %v1139 = vadd.f32 %v1057, %v1138
    %v1140 = vpop.f32.mrb[0].mxu0
    %1141 = vmatprep.mubr.f32.mxu0 0.0
    %v1142 = vand.u32 %v808, 4294901760
    %v1143 = vsub.f32 %v808, %v1142
    %v1144 = vand.u32 %v1143, 4294901760
    %1145 = vmatmul.mubr.f32.gmra.mrb[0].mxu0 %v1144
    %v1146 = vpop.f32.mrb[0].mxu0
    %v1147 = vadd.f32 %v1064, %v1146
    %v1148 = vpop.f32.mrb[0].mxu0
    %1149 = vdwg.mxu0
    %1150 = vmatprep.subr.mxu0 0.0
    %v1151 = vand.u32 %v787, 4294901760
    %v1152 = vsub.f32 %v787, %v1151
    %v1153 = vand.u32 %v1152, 4294901760
    %1154 = vmatpush1.msra.mxu0 %v1153
    %1155 = vmatprep.subr.mxu0 0.0
    %v1156 = vand.u32 %v788, 4294901760
    %v1157 = vsub.f32 %v788, %v1156
    %v1158 = vand.u32 %v1157, 4294901760
    %1159 = vmatpush1.msra.mxu0 %v1158
    %1160 = vmatprep.subr.mxu0 0.0
    %1161 = vmatpush1.msra.mxu0 0.0
    %1162 = vmatprep.subr.mxu0 0.0
    %1163 = vmatpush1.msra.mxu0 0.0
    %1164 = vmatprep.subr.mxu0 0.0
    %1165 = vmatpush1.msra.mxu0 0.0
    %1166 = vmatprep.subr.mxu0 0.0
    %1167 = vmatpush1.msra.mxu0 0.0
    %1168 = vmatprep.subr.mxu0 0.0
    %1169 = vmatpush1.msra.mxu0 0.0
    %1170 = vmatprep.subr.mxu0 0.0
    %1171 = vmatpush1.msra.mxu0 0.0
    %1172 = vmatprep.subr.mxu0 0.0
    %1173 = vmatpush1.msra.mxu0 0.0
    %1174 = vmatprep.subr.mxu0 0.0
    %1175 = vmatpush1.msra.mxu0 0.0
    %1176 = vmatprep.subr.mxu0 0.0
    %1177 = vmatpush1.msra.mxu0 0.0
    %1178 = vmatprep.subr.mxu0 0.0
    %1179 = vmatpush1.msra.mxu0 0.0
    %1180 = vmatprep.subr.mxu0 0.0
    %1181 = vmatpush1.msra.mxu0 0.0
    %1182 = vmatprep.subr.mxu0 0.0
    %1183 = vmatpush1.msra.mxu0 0.0
    %1184 = vmatprep.subr.mxu0 0.0
    %1185 = vmatpush1.msra.mxu0 0.0
    %1186 = vmatprep.subr.mxu0 0.0
    %1187 = vmatpush1.msra.mxu0 0.0
    %1188 = vmatprep.subr.mxu0 0.0
    %1189 = vmatpush1.msra.mxu0 0.0
    %1190 = vmatprep.subr.mxu0 0.0
    %1191 = vmatpush1.msra.mxu0 0.0
    %1192 = vmatprep.subr.mxu0 0.0
    %1193 = vmatpush1.msra.mxu0 0.0
    %1194 = vmatprep.subr.mxu0 0.0
    %1195 = vmatpush1.msra.mxu0 0.0
    %1196 = vmatprep.subr.mxu0 0.0
    %1197 = vmatpush1.msra.mxu0 0.0
    %1198 = vmatprep.subr.mxu0 0.0
    %1199 = vmatpush1.msra.mxu0 0.0
    %1200 = vmatprep.subr.mxu0 0.0
    %1201 = vmatpush1.msra.mxu0 0.0
    %1202 = vmatprep.subr.mxu0 0.0
    %1203 = vmatpush1.msra.mxu0 0.0
    %1204 = vmatprep.subr.mxu0 0.0
    %1205 = vmatpush1.msra.mxu0 0.0
    %1206 = vmatprep.subr.mxu0 0.0
    %1207 = vmatpush1.msra.mxu0 0.0
    %1208 = vmatprep.subr.mxu0 0.0
    %1209 = vmatpush1.msra.mxu0 0.0
    %1210 = vmatprep.subr.mxu0 0.0
    %1211 = vmatpush1.msra.mxu0 0.0
    %1212 = vmatprep.subr.mxu0 0.0
    %1213 = vmatpush1.msra.mxu0 0.0
    %1214 = vmatprep.subr.mxu0 0.0
    %1215 = vmatpush1.msra.mxu0 0.0
    %1216 = vmatprep.subr.mxu0 0.0
    %1217 = vmatpush1.msra.mxu0 0.0
    %1218 = vmatprep.subr.mxu0 0.0
    %1219 = vmatpush1.msra.mxu0 0.0
    %1220 = vmatprep.mubr.f32.mxu0 0.0
    %v1221 = vand.u32 %v805, 4294901760
    %1222 = vmatmul.mubr.f32.gmra.mrb[0].mxu0 %v1221
    %v1223 = vpop.f32.mrb[0].mxu0
    %v1224 = vadd.f32 %v1139, %v1223
    %v1225 = vpop.f32.mrb[0].mxu0
    %1226 = vmatprep.mubr.f32.mxu0 0.0
    %v1227 = vand.u32 %v808, 4294901760
    %1228 = vmatmul.mubr.f32.gmra.mrb[0].mxu0 %v1227
    %v1229 = vpop.f32.mrb[0].mxu0
    %v1230 = vadd.f32 %v1147, %v1229
    %v1231 = vpop.f32.mrb[0].mxu0
    %1232 = vdwg.mxu0
    %1233 = vmatprep.subr.mxu0 0.0
    %v1234 = vand.u32 %v787, 4294901760
    %1235 = vmatpush1.msra.mxu0 %v1234
    %1236 = vmatprep.subr.mxu0 0.0
    %v1237 = vand.u32 %v788, 4294901760
    %1238 = vmatpush1.msra.mxu0 %v1237
    %1239 = vmatprep.subr.mxu0 0.0
    %1240 = vmatpush1.msra.mxu0 0.0
    %1241 = vmatprep.subr.mxu0 0.0
    %1242 = vmatpush1.msra.mxu0 0.0
    %1243 = vmatprep.subr.mxu0 0.0
    %1244 = vmatpush1.msra.mxu0 0.0
    %1245 = vmatprep.subr.mxu0 0.0
    %1246 = vmatpush1.msra.mxu0 0.0
    %1247 = vmatprep.subr.mxu0 0.0
    %1248 = vmatpush1.msra.mxu0 0.0
    %1249 = vmatprep.subr.mxu0 0.0
    %1250 = vmatpush1.msra.mxu0 0.0
    %1251 = vmatprep.subr.mxu0 0.0
    %1252 = vmatpush1.msra.mxu0 0.0
    %1253 = vmatprep.subr.mxu0 0.0
    %1254 = vmatpush1.msra.mxu0 0.0
    %1255 = vmatprep.subr.mxu0 0.0
    %1256 = vmatpush1.msra.mxu0 0.0
    %1257 = vmatprep.subr.mxu0 0.0
    %1258 = vmatpush1.msra.mxu0 0.0
    %1259 = vmatprep.subr.mxu0 0.0
    %1260 = vmatpush1.msra.mxu0 0.0
    %1261 = vmatprep.subr.mxu0 0.0
    %1262 = vmatpush1.msra.mxu0 0.0
    %1263 = vmatprep.subr.mxu0 0.0
    %1264 = vmatpush1.msra.mxu0 0.0
    %1265 = vmatprep.subr.mxu0 0.0
    %1266 = vmatpush1.msra.mxu0 0.0
    %1267 = vmatprep.subr.mxu0 0.0
    %1268 = vmatpush1.msra.mxu0 0.0
    %1269 = vmatprep.subr.mxu0 0.0
    %1270 = vmatpush1.msra.mxu0 0.0
    %1271 = vmatprep.subr.mxu0 0.0
    %1272 = vmatpush1.msra.mxu0 0.0
    %1273 = vmatprep.subr.mxu0 0.0
    %1274 = vmatpush1.msra.mxu0 0.0
    %1275 = vmatprep.subr.mxu0 0.0
    %1276 = vmatpush1.msra.mxu0 0.0
    %1277 = vmatprep.subr.mxu0 0.0
    %1278 = vmatpush1.msra.mxu0 0.0
    %1279 = vmatprep.subr.mxu0 0.0
    %1280 = vmatpush1.msra.mxu0 0.0
    %1281 = vmatprep.subr.mxu0 0.0
    %1282 = vmatpush1.msra.mxu0 0.0
    %1283 = vmatprep.subr.mxu0 0.0
    %1284 = vmatpush1.msra.mxu0 0.0
    %1285 = vmatprep.subr.mxu0 0.0
    %1286 = vmatpush1.msra.mxu0 0.0
    %1287 = vmatprep.subr.mxu0 0.0
    %1288 = vmatpush1.msra.mxu0 0.0
    %1289 = vmatprep.subr.mxu0 0.0
    %1290 = vmatpush1.msra.mxu0 0.0
    %1291 = vmatprep.subr.mxu0 0.0
    %1292 = vmatpush1.msra.mxu0 0.0
    %1293 = vmatprep.subr.mxu0 0.0
    %1294 = vmatpush1.msra.mxu0 0.0
    %1295 = vmatprep.subr.mxu0 0.0
    %1296 = vmatpush1.msra.mxu0 0.0
    %1297 = vmatprep.subr.mxu0 0.0
    %1298 = vmatpush1.msra.mxu0 0.0
    %1299 = vmatprep.mubr.f32.mxu0 0.0
    %v1300 = vand.u32 %v805, 4294901760
    %1301 = vmatmul.mubr.f32.gmra.mrb[0].mxu0 %v1300
    %v1302 = vpop.f32.mrb[0].mxu0
    %v1303 = vadd.f32 %v1224, %v1302
    %v1304 = vpop.f32.mrb[0].mxu0
    %1305 = vmatprep.mubr.f32.mxu0 0.0
    %v1306 = vand.u32 %v808, 4294901760
    %1307 = vmatmul.mubr.f32.gmra.mrb[0].mxu0 %v1306
    %v1308 = vpop.f32.mrb[0].mxu0
    %v1309 = vadd.f32 %v1230, %v1308
    %v1310 = vpop.f32.mrb[0].mxu0
    %1311 = vdwg.mxu0
    %v1312 = vtanh.pop %v1303
    %v1313 = vtanh.pop %v1309
    %s1314 = scalar_lea.vmem %s2, 16
    %v1315 = vld [vmem:[%s1314] sm:$0xff]
    %v1316 = vld [vmem:[%s1314 + $0x8] sm:$0xff]
    %s1317 = scalar_lea.vmem %s3, 32
    %v1318 = vld [vmem:[%s1317] sm:$0xff]
    %v1319 = vld [vmem:[%s1317 + $0x8] sm:$0xff]
    %1321 = vset.pattern.permute.xlu0 0
    %1322 = vperm.xlu0 %1321, %v1318
    %v1323 = vpop.permute.xlu0 %1322
    %1326 = vset.pattern.permute.xlu0 0
    %1327 = vperm.xlu0 %1326, %v1319
    %v1328 = vpop.permute.xlu0 %1327
    %v1331 = vsel %vm48, %v1315, 0
    %v1334 = vsel %vm48, %v1316, 0
    %1336 = vmatprep.subr.mxu0 0.0
    %v1337 = vand.u32 %v1312, 4294901760
    %1338 = vmatpush1.msra.mxu0 %v1337
    %1339 = vmatprep.subr.mxu0 0.0
    %v1340 = vand.u32 %v1313, 4294901760
    %1341 = vmatpush1.msra.mxu0 %v1340
    %1342 = vmatprep.subr.mxu0 0.0
    %1343 = vmatpush1.msra.mxu0 0.0
    %1344 = vmatprep.subr.mxu0 0.0
    %1345 = vmatpush1.msra.mxu0 0.0
    %1346 = vmatprep.subr.mxu0 0.0
    %1347 = vmatpush1.msra.mxu0 0.0
    %1348 = vmatprep.subr.mxu0 0.0
    %1349 = vmatpush1.msra.mxu0 0.0
    %1350 = vmatprep.subr.mxu0 0.0
    %1351 = vmatpush1.msra.mxu0 0.0
    %1352 = vmatprep.subr.mxu0 0.0
    %1353 = vmatpush1.msra.mxu0 0.0
    %1354 = vmatprep.subr.mxu0 0.0
    %1355 = vmatpush1.msra.mxu0 0.0
    %1356 = vmatprep.subr.mxu0 0.0
    %1357 = vmatpush1.msra.mxu0 0.0
    %1358 = vmatprep.subr.mxu0 0.0
    %1359 = vmatpush1.msra.mxu0 0.0
    %1360 = vmatprep.subr.mxu0 0.0
    %1361 = vmatpush1.msra.mxu0 0.0
    %1362 = vmatprep.subr.mxu0 0.0
    %1363 = vmatpush1.msra.mxu0 0.0
    %1364 = vmatprep.subr.mxu0 0.0
    %1365 = vmatpush1.msra.mxu0 0.0
    %1366 = vmatprep.subr.mxu0 0.0
    %1367 = vmatpush1.msra.mxu0 0.0
    %1368 = vmatprep.subr.mxu0 0.0
    %1369 = vmatpush1.msra.mxu0 0.0
    %1370 = vmatprep.subr.mxu0 0.0
    %1371 = vmatpush1.msra.mxu0 0.0
    %1372 = vmatprep.subr.mxu0 0.0
    %1373 = vmatpush1.msra.mxu0 0.0
    %1374 = vmatprep.subr.mxu0 0.0
    %1375 = vmatpush1.msra.mxu0 0.0
    %1376 = vmatprep.subr.mxu0 0.0
    %1377 = vmatpush1.msra.mxu0 0.0
    %1378 = vmatprep.subr.mxu0 0.0
    %1379 = vmatpush1.msra.mxu0 0.0
    %1380 = vmatprep.subr.mxu0 0.0
    %1381 = vmatpush1.msra.mxu0 0.0
    %1382 = vmatprep.subr.mxu0 0.0
    %1383 = vmatpush1.msra.mxu0 0.0
    %1384 = vmatprep.subr.mxu0 0.0
    %1385 = vmatpush1.msra.mxu0 0.0
    %1386 = vmatprep.subr.mxu0 0.0
    %1387 = vmatpush1.msra.mxu0 0.0
    %1388 = vmatprep.subr.mxu0 0.0
    %1389 = vmatpush1.msra.mxu0 0.0
    %1390 = vmatprep.subr.mxu0 0.0
    %1391 = vmatpush1.msra.mxu0 0.0
    %1392 = vmatprep.subr.mxu0 0.0
    %1393 = vmatpush1.msra.mxu0 0.0
    %1394 = vmatprep.subr.mxu0 0.0
    %1395 = vmatpush1.msra.mxu0 0.0
    %1396 = vmatprep.subr.mxu0 0.0
    %1397 = vmatpush1.msra.mxu0 0.0
    %1398 = vmatprep.subr.mxu0 0.0
    %1399 = vmatpush1.msra.mxu0 0.0
    %1400 = vmatprep.subr.mxu0 0.0
    %1401 = vmatpush1.msra.mxu0 0.0
    %1402 = vmatprep.mubr.f32.mxu0 0.0
    %v1403 = vand.u32 %v1331, 4294901760
    %v1404 = vsub.f32 %v1331, %v1403
    %v1405 = vand.u32 %v1404, 4294901760
    %v1406 = vsub.f32 %v1404, %v1405
    %v1407 = vand.u32 %v1406, 4294901760
    %1408 = vmatmul.mubr.f32.gmra.mrb[0].mxu0 %v1407
    %v1409 = vpop.f32.mrb[0].mxu0
    %v1410 = vadd.f32 %v1323, %v1409
    %v1411 = vpop.f32.mrb[0].mxu0
    %1412 = vmatprep.mubr.f32.mxu0 0.0
    %v1413 = vand.u32 %v1334, 4294901760
    %v1414 = vsub.f32 %v1334, %v1413
    %v1415 = vand.u32 %v1414, 4294901760
    %v1416 = vsub.f32 %v1414, %v1415
    %v1417 = vand.u32 %v1416, 4294901760
    %1418 = vmatmul.mubr.f32.gmra.mrb[0].mxu0 %v1417
    %v1419 = vpop.f32.mrb[0].mxu0
    %v1420 = vadd.f32 %v1328, %v1419
    %v1421 = vpop.f32.mrb[0].mxu0
    %1422 = vdwg.mxu0
    %1423 = vmatprep.subr.mxu0 0.0
    %v1424 = vand.u32 %v1312, 4294901760
    %v1425 = vsub.f32 %v1312, %v1424
    %v1426 = vand.u32 %v1425, 4294901760
    %v1427 = vsub.f32 %v1425, %v1426
    %v1428 = vand.u32 %v1427, 4294901760
    %1429 = vmatpush1.msra.mxu0 %v1428
    %1430 = vmatprep.subr.mxu0 0.0
    %v1431 = vand.u32 %v1313, 4294901760
    %v1432 = vsub.f32 %v1313, %v1431
    %v1433 = vand.u32 %v1432, 4294901760
    %v1434 = vsub.f32 %v1432, %v1433
    %v1435 = vand.u32 %v1434, 4294901760
    %1436 = vmatpush1.msra.mxu0 %v1435
    %1437 = vmatprep.subr.mxu0 0.0
    %1438 = vmatpush1.msra.mxu0 0.0
    %1439 = vmatprep.subr.mxu0 0.0
    %1440 = vmatpush1.msra.mxu0 0.0
    %1441 = vmatprep.subr.mxu0 0.0
    %1442 = vmatpush1.msra.mxu0 0.0
    %1443 = vmatprep.subr.mxu0 0.0
    %1444 = vmatpush1.msra.mxu0 0.0
    %1445 = vmatprep.subr.mxu0 0.0
    %1446 = vmatpush1.msra.mxu0 0.0
    %1447 = vmatprep.subr.mxu0 0.0
    %1448 = vmatpush1.msra.mxu0 0.0
    %1449 = vmatprep.subr.mxu0 0.0
    %1450 = vmatpush1.msra.mxu0 0.0
    %1451 = vmatprep.subr.mxu0 0.0
    %1452 = vmatpush1.msra.mxu0 0.0
    %1453 = vmatprep.subr.mxu0 0.0
    %1454 = vmatpush1.msra.mxu0 0.0
    %1455 = vmatprep.subr.mxu0 0.0
    %1456 = vmatpush1.msra.mxu0 0.0
    %1457 = vmatprep.subr.mxu0 0.0
    %1458 = vmatpush1.msra.mxu0 0.0
    %1459 = vmatprep.subr.mxu0 0.0
    %1460 = vmatpush1.msra.mxu0 0.0
    %1461 = vmatprep.subr.mxu0 0.0
    %1462 = vmatpush1.msra.mxu0 0.0
    %1463 = vmatprep.subr.mxu0 0.0
    %1464 = vmatpush1.msra.mxu0 0.0
    %1465 = vmatprep.subr.mxu0 0.0
    %1466 = vmatpush1.msra.mxu0 0.0
    %1467 = vmatprep.subr.mxu0 0.0
    %1468 = vmatpush1.msra.mxu0 0.0
    %1469 = vmatprep.subr.mxu0 0.0
    %1470 = vmatpush1.msra.mxu0 0.0
    %1471 = vmatprep.subr.mxu0 0.0
    %1472 = vmatpush1.msra.mxu0 0.0
    %1473 = vmatprep.subr.mxu0 0.0
    %1474 = vmatpush1.msra.mxu0 0.0
    %1475 = vmatprep.subr.mxu0 0.0
    %1476 = vmatpush1.msra.mxu0 0.0
    %1477 = vmatprep.subr.mxu0 0.0
    %1478 = vmatpush1.msra.mxu0 0.0
    %1479 = vmatprep.subr.mxu0 0.0
    %1480 = vmatpush1.msra.mxu0 0.0
    %1481 = vmatprep.subr.mxu0 0.0
    %1482 = vmatpush1.msra.mxu0 0.0
    %1483 = vmatprep.subr.mxu0 0.0
    %1484 = vmatpush1.msra.mxu0 0.0
    %1485 = vmatprep.subr.mxu0 0.0
    %1486 = vmatpush1.msra.mxu0 0.0
    %1487 = vmatprep.subr.mxu0 0.0
    %1488 = vmatpush1.msra.mxu0 0.0
    %1489 = vmatprep.subr.mxu0 0.0
    %1490 = vmatpush1.msra.mxu0 0.0
    %1491 = vmatprep.subr.mxu0 0.0
    %1492 = vmatpush1.msra.mxu0 0.0
    %1493 = vmatprep.subr.mxu0 0.0
    %1494 = vmatpush1.msra.mxu0 0.0
    %1495 = vmatprep.subr.mxu0 0.0
    %1496 = vmatpush1.msra.mxu0 0.0
    %1497 = vmatprep.mubr.f32.mxu0 0.0
    %v1498 = vand.u32 %v1331, 4294901760
    %1499 = vmatmul.mubr.f32.gmra.mrb[0].mxu0 %v1498
    %v1500 = vpop.f32.mrb[0].mxu0
    %v1501 = vadd.f32 %v1410, %v1500
    %v1502 = vpop.f32.mrb[0].mxu0
    %1503 = vmatprep.mubr.f32.mxu0 0.0
    %v1504 = vand.u32 %v1334, 4294901760
    %1505 = vmatmul.mubr.f32.gmra.mrb[0].mxu0 %v1504
    %v1506 = vpop.f32.mrb[0].mxu0
    %v1507 = vadd.f32 %v1420, %v1506
    %v1508 = vpop.f32.mrb[0].mxu0
    %1509 = vdwg.mxu0
    %1510 = vmatprep.subr.mxu0 0.0
    %v1511 = vand.u32 %v1312, 4294901760
    %v1512 = vsub.f32 %v1312, %v1511
    %1513 = vmatpush1.msra.mxu0 %v1512
    %1514 = vmatprep.subr.mxu0 0.0
    %v1515 = vand.u32 %v1313, 4294901760
    %v1516 = vsub.f32 %v1313, %v1515
    %1517 = vmatpush1.msra.mxu0 %v1516
    %1518 = vmatprep.subr.mxu0 0.0
    %1519 = vmatpush1.msra.mxu0 0.0
    %1520 = vmatprep.subr.mxu0 0.0
    %1521 = vmatpush1.msra.mxu0 0.0
    %1522 = vmatprep.subr.mxu0 0.0
    %1523 = vmatpush1.msra.mxu0 0.0
    %1524 = vmatprep.subr.mxu0 0.0
    %1525 = vmatpush1.msra.mxu0 0.0
    %1526 = vmatprep.subr.mxu0 0.0
    %1527 = vmatpush1.msra.mxu0 0.0
    %1528 = vmatprep.subr.mxu0 0.0
    %1529 = vmatpush1.msra.mxu0 0.0
    %1530 = vmatprep.subr.mxu0 0.0
    %1531 = vmatpush1.msra.mxu0 0.0
    %1532 = vmatprep.subr.mxu0 0.0
    %1533 = vmatpush1.msra.mxu0 0.0
    %1534 = vmatprep.subr.mxu0 0.0
    %1535 = vmatpush1.msra.mxu0 0.0
    %1536 = vmatprep.subr.mxu0 0.0
    %1537 = vmatpush1.msra.mxu0 0.0
    %1538 = vmatprep.subr.mxu0 0.0
    %1539 = vmatpush1.msra.mxu0 0.0
    %1540 = vmatprep.subr.mxu0 0.0
    %1541 = vmatpush1.msra.mxu0 0.0
    %1542 = vmatprep.subr.mxu0 0.0
    %1543 = vmatpush1.msra.mxu0 0.0
    %1544 = vmatprep.subr.mxu0 0.0
    %1545 = vmatpush1.msra.mxu0 0.0
    %1546 = vmatprep.subr.mxu0 0.0
    %1547 = vmatpush1.msra.mxu0 0.0
    %1548 = vmatprep.subr.mxu0 0.0
    %1549 = vmatpush1.msra.mxu0 0.0
    %1550 = vmatprep.subr.mxu0 0.0
    %1551 = vmatpush1.msra.mxu0 0.0
    %1552 = vmatprep.subr.mxu0 0.0
    %1553 = vmatpush1.msra.mxu0 0.0
    %1554 = vmatprep.subr.mxu0 0.0
    %1555 = vmatpush1.msra.mxu0 0.0
    %1556 = vmatprep.subr.mxu0 0.0
    %1557 = vmatpush1.msra.mxu0 0.0
    %1558 = vmatprep.subr.mxu0 0.0
    %1559 = vmatpush1.msra.mxu0 0.0
    %1560 = vmatprep.subr.mxu0 0.0
    %1561 = vmatpush1.msra.mxu0 0.0
    %1562 = vmatprep.subr.mxu0 0.0
    %1563 = vmatpush1.msra.mxu0 0.0
    %1564 = vmatprep.subr.mxu0 0.0
    %1565 = vmatpush1.msra.mxu0 0.0
    %1566 = vmatprep.subr.mxu0 0.0
    %1567 = vmatpush1.msra.mxu0 0.0
    %1568 = vmatprep.subr.mxu0 0.0
    %1569 = vmatpush1.msra.mxu0 0.0
    %1570 = vmatprep.subr.mxu0 0.0
    %1571 = vmatpush1.msra.mxu0 0.0
    %1572 = vmatprep.subr.mxu0 0.0
    %1573 = vmatpush1.msra.mxu0 0.0
    %1574 = vmatprep.subr.mxu0 0.0
    %1575 = vmatpush1.msra.mxu0 0.0
    %1576 = vmatprep.subr.mxu0 0.0
    %1577 = vmatpush1.msra.mxu0 0.0
    %1578 = vmatprep.mubr.f32.mxu0 0.0
    %v1579 = vand.u32 %v1331, 4294901760
    %v1580 = vsub.f32 %v1331, %v1579
    %1581 = vmatmul.mubr.f32.gmra.mrb[0].mxu0 %v1580
    %v1582 = vpop.f32.mrb[0].mxu0
    %v1583 = vadd.f32 %v1501, %v1582
    %v1584 = vpop.f32.mrb[0].mxu0
    %1585 = vmatprep.mubr.f32.mxu0 0.0
    %v1586 = vand.u32 %v1334, 4294901760
    %v1587 = vsub.f32 %v1334, %v1586
    %1588 = vmatmul.mubr.f32.gmra.mrb[0].mxu0 %v1587
    %v1589 = vpop.f32.mrb[0].mxu0
    %v1590 = vadd.f32 %v1507, %v1589
    %v1591 = vpop.f32.mrb[0].mxu0
    %1592 = vdwg.mxu0
    %1593 = vmatprep.subr.mxu0 0.0
    %v1594 = vand.u32 %v1312, 4294901760
    %1595 = vmatpush1.msra.mxu0 %v1594
    %1596 = vmatprep.subr.mxu0 0.0
    %v1597 = vand.u32 %v1313, 4294901760
    %1598 = vmatpush1.msra.mxu0 %v1597
    %1599 = vmatprep.subr.mxu0 0.0
    %1600 = vmatpush1.msra.mxu0 0.0
    %1601 = vmatprep.subr.mxu0 0.0
    %1602 = vmatpush1.msra.mxu0 0.0
    %1603 = vmatprep.subr.mxu0 0.0
    %1604 = vmatpush1.msra.mxu0 0.0
    %1605 = vmatprep.subr.mxu0 0.0
    %1606 = vmatpush1.msra.mxu0 0.0
    %1607 = vmatprep.subr.mxu0 0.0
    %1608 = vmatpush1.msra.mxu0 0.0
    %1609 = vmatprep.subr.mxu0 0.0
    %1610 = vmatpush1.msra.mxu0 0.0
    %1611 = vmatprep.subr.mxu0 0.0
    %1612 = vmatpush1.msra.mxu0 0.0
    %1613 = vmatprep.subr.mxu0 0.0
    %1614 = vmatpush1.msra.mxu0 0.0
    %1615 = vmatprep.subr.mxu0 0.0
    %1616 = vmatpush1.msra.mxu0 0.0
    %1617 = vmatprep.subr.mxu0 0.0
    %1618 = vmatpush1.msra.mxu0 0.0
    %1619 = vmatprep.subr.mxu0 0.0
    %1620 = vmatpush1.msra.mxu0 0.0
    %1621 = vmatprep.subr.mxu0 0.0
    %1622 = vmatpush1.msra.mxu0 0.0
    %1623 = vmatprep.subr.mxu0 0.0
    %1624 = vmatpush1.msra.mxu0 0.0
    %1625 = vmatprep.subr.mxu0 0.0
    %1626 = vmatpush1.msra.mxu0 0.0
    %1627 = vmatprep.subr.mxu0 0.0
    %1628 = vmatpush1.msra.mxu0 0.0
    %1629 = vmatprep.subr.mxu0 0.0
    %1630 = vmatpush1.msra.mxu0 0.0
    %1631 = vmatprep.subr.mxu0 0.0
    %1632 = vmatpush1.msra.mxu0 0.0
    %1633 = vmatprep.subr.mxu0 0.0
    %1634 = vmatpush1.msra.mxu0 0.0
    %1635 = vmatprep.subr.mxu0 0.0
    %1636 = vmatpush1.msra.mxu0 0.0
    %1637 = vmatprep.subr.mxu0 0.0
    %1638 = vmatpush1.msra.mxu0 0.0
    %1639 = vmatprep.subr.mxu0 0.0
    %1640 = vmatpush1.msra.mxu0 0.0
    %1641 = vmatprep.subr.mxu0 0.0
    %1642 = vmatpush1.msra.mxu0 0.0
    %1643 = vmatprep.subr.mxu0 0.0
    %1644 = vmatpush1.msra.mxu0 0.0
    %1645 = vmatprep.subr.mxu0 0.0
    %1646 = vmatpush1.msra.mxu0 0.0
    %1647 = vmatprep.subr.mxu0 0.0
    %1648 = vmatpush1.msra.mxu0 0.0
    %1649 = vmatprep.subr.mxu0 0.0
    %1650 = vmatpush1.msra.mxu0 0.0
    %1651 = vmatprep.subr.mxu0 0.0
    %1652 = vmatpush1.msra.mxu0 0.0
    %1653 = vmatprep.subr.mxu0 0.0
    %1654 = vmatpush1.msra.mxu0 0.0
    %1655 = vmatprep.subr.mxu0 0.0
    %1656 = vmatpush1.msra.mxu0 0.0
    %1657 = vmatprep.subr.mxu0 0.0
    %1658 = vmatpush1.msra.mxu0 0.0
    %1659 = vmatprep.mubr.f32.mxu0 0.0
    %v1660 = vand.u32 %v1331, 4294901760
    %v1661 = vsub.f32 %v1331, %v1660
    %v1662 = vand.u32 %v1661, 4294901760
    %1663 = vmatmul.mubr.f32.gmra.mrb[0].mxu0 %v1662
    %v1664 = vpop.f32.mrb[0].mxu0
    %v1665 = vadd.f32 %v1583, %v1664
    %v1666 = vpop.f32.mrb[0].mxu0
    %1667 = vmatprep.mubr.f32.mxu0 0.0
    %v1668 = vand.u32 %v1334, 4294901760
    %v1669 = vsub.f32 %v1334, %v1668
    %v1670 = vand.u32 %v1669, 4294901760
    %1671 = vmatmul.mubr.f32.gmra.mrb[0].mxu0 %v1670
    %v1672 = vpop.f32.mrb[0].mxu0
    %v1673 = vadd.f32 %v1590, %v1672
    %v1674 = vpop.f32.mrb[0].mxu0
    %1675 = vdwg.mxu0
    %1676 = vmatprep.subr.mxu0 0.0
    %v1677 = vand.u32 %v1312, 4294901760
    %v1678 = vsub.f32 %v1312, %v1677
    %v1679 = vand.u32 %v1678, 4294901760
    %1680 = vmatpush1.msra.mxu0 %v1679
    %1681 = vmatprep.subr.mxu0 0.0
    %v1682 = vand.u32 %v1313, 4294901760
    %v1683 = vsub.f32 %v1313, %v1682
    %v1684 = vand.u32 %v1683, 4294901760
    %1685 = vmatpush1.msra.mxu0 %v1684
    %1686 = vmatprep.subr.mxu0 0.0
    %1687 = vmatpush1.msra.mxu0 0.0
    %1688 = vmatprep.subr.mxu0 0.0
    %1689 = vmatpush1.msra.mxu0 0.0
    %1690 = vmatprep.subr.mxu0 0.0
    %1691 = vmatpush1.msra.mxu0 0.0
    %1692 = vmatprep.subr.mxu0 0.0
    %1693 = vmatpush1.msra.mxu0 0.0
    %1694 = vmatprep.subr.mxu0 0.0
    %1695 = vmatpush1.msra.mxu0 0.0
    %1696 = vmatprep.subr.mxu0 0.0
    %1697 = vmatpush1.msra.mxu0 0.0
    %1698 = vmatprep.subr.mxu0 0.0
    %1699 = vmatpush1.msra.mxu0 0.0
    %1700 = vmatprep.subr.mxu0 0.0
    %1701 = vmatpush1.msra.mxu0 0.0
    %1702 = vmatprep.subr.mxu0 0.0
    %1703 = vmatpush1.msra.mxu0 0.0
    %1704 = vmatprep.subr.mxu0 0.0
    %1705 = vmatpush1.msra.mxu0 0.0
    %1706 = vmatprep.subr.mxu0 0.0
    %1707 = vmatpush1.msra.mxu0 0.0
    %1708 = vmatprep.subr.mxu0 0.0
    %1709 = vmatpush1.msra.mxu0 0.0
    %1710 = vmatprep.subr.mxu0 0.0
    %1711 = vmatpush1.msra.mxu0 0.0
    %1712 = vmatprep.subr.mxu0 0.0
    %1713 = vmatpush1.msra.mxu0 0.0
    %1714 = vmatprep.subr.mxu0 0.0
    %1715 = vmatpush1.msra.mxu0 0.0
    %1716 = vmatprep.subr.mxu0 0.0
    %1717 = vmatpush1.msra.mxu0 0.0
    %1718 = vmatprep.subr.mxu0 0.0
    %1719 = vmatpush1.msra.mxu0 0.0
    %1720 = vmatprep.subr.mxu0 0.0
    %1721 = vmatpush1.msra.mxu0 0.0
    %1722 = vmatprep.subr.mxu0 0.0
    %1723 = vmatpush1.msra.mxu0 0.0
    %1724 = vmatprep.subr.mxu0 0.0
    %1725 = vmatpush1.msra.mxu0 0.0
    %1726 = vmatprep.subr.mxu0 0.0
    %1727 = vmatpush1.msra.mxu0 0.0
    %1728 = vmatprep.subr.mxu0 0.0
    %1729 = vmatpush1.msra.mxu0 0.0
    %1730 = vmatprep.subr.mxu0 0.0
    %1731 = vmatpush1.msra.mxu0 0.0
    %1732 = vmatprep.subr.mxu0 0.0
    %1733 = vmatpush1.msra.mxu0 0.0
    %1734 = vmatprep.subr.mxu0 0.0
    %1735 = vmatpush1.msra.mxu0 0.0
    %1736 = vmatprep.subr.mxu0 0.0
    %1737 = vmatpush1.msra.mxu0 0.0
    %1738 = vmatprep.subr.mxu0 0.0
    %1739 = vmatpush1.msra.mxu0 0.0
    %1740 = vmatprep.subr.mxu0 0.0
    %1741 = vmatpush1.msra.mxu0 0.0
    %1742 = vmatprep.subr.mxu0 0.0
    %1743 = vmatpush1.msra.mxu0 0.0
    %1744 = vmatprep.subr.mxu0 0.0
    %1745 = vmatpush1.msra.mxu0 0.0
    %1746 = vmatprep.mubr.f32.mxu0 0.0
    %v1747 = vand.u32 %v1331, 4294901760
    %1748 = vmatmul.mubr.f32.gmra.mrb[0].mxu0 %v1747
    %v1749 = vpop.f32.mrb[0].mxu0
    %v1750 = vadd.f32 %v1665, %v1749
    %v1751 = vpop.f32.mrb[0].mxu0
    %1752 = vmatprep.mubr.f32.mxu0 0.0
    %v1753 = vand.u32 %v1334, 4294901760
    %1754 = vmatmul.mubr.f32.gmra.mrb[0].mxu0 %v1753
    %v1755 = vpop.f32.mrb[0].mxu0
    %v1756 = vadd.f32 %v1673, %v1755
    %v1757 = vpop.f32.mrb[0].mxu0
    %1758 = vdwg.mxu0
    %1759 = vmatprep.subr.mxu0 0.0
    %v1760 = vand.u32 %v1312, 4294901760
    %1761 = vmatpush1.msra.mxu0 %v1760
    %1762 = vmatprep.subr.mxu0 0.0
    %v1763 = vand.u32 %v1313, 4294901760
    %1764 = vmatpush1.msra.mxu0 %v1763
    %1765 = vmatprep.subr.mxu0 0.0
    %1766 = vmatpush1.msra.mxu0 0.0
    %1767 = vmatprep.subr.mxu0 0.0
    %1768 = vmatpush1.msra.mxu0 0.0
    %1769 = vmatprep.subr.mxu0 0.0
    %1770 = vmatpush1.msra.mxu0 0.0
    %1771 = vmatprep.subr.mxu0 0.0
    %1772 = vmatpush1.msra.mxu0 0.0
    %1773 = vmatprep.subr.mxu0 0.0
    %1774 = vmatpush1.msra.mxu0 0.0
    %1775 = vmatprep.subr.mxu0 0.0
    %1776 = vmatpush1.msra.mxu0 0.0
    %1777 = vmatprep.subr.mxu0 0.0
    %1778 = vmatpush1.msra.mxu0 0.0
    %1779 = vmatprep.subr.mxu0 0.0
    %1780 = vmatpush1.msra.mxu0 0.0
    %1781 = vmatprep.subr.mxu0 0.0
    %1782 = vmatpush1.msra.mxu0 0.0
    %1783 = vmatprep.subr.mxu0 0.0
    %1784 = vmatpush1.msra.mxu0 0.0
    %1785 = vmatprep.subr.mxu0 0.0
    %1786 = vmatpush1.msra.mxu0 0.0
    %1787 = vmatprep.subr.mxu0 0.0
    %1788 = vmatpush1.msra.mxu0 0.0
    %1789 = vmatprep.subr.mxu0 0.0
    %1790 = vmatpush1.msra.mxu0 0.0
    %1791 = vmatprep.subr.mxu0 0.0
    %1792 = vmatpush1.msra.mxu0 0.0
    %1793 = vmatprep.subr.mxu0 0.0
    %1794 = vmatpush1.msra.mxu0 0.0
    %1795 = vmatprep.subr.mxu0 0.0
    %1796 = vmatpush1.msra.mxu0 0.0
    %1797 = vmatprep.subr.mxu0 0.0
    %1798 = vmatpush1.msra.mxu0 0.0
    %1799 = vmatprep.subr.mxu0 0.0
    %1800 = vmatpush1.msra.mxu0 0.0
    %1801 = vmatprep.subr.mxu0 0.0
    %1802 = vmatpush1.msra.mxu0 0.0
    %1803 = vmatprep.subr.mxu0 0.0
    %1804 = vmatpush1.msra.mxu0 0.0
    %1805 = vmatprep.subr.mxu0 0.0
    %1806 = vmatpush1.msra.mxu0 0.0
    %1807 = vmatprep.subr.mxu0 0.0
    %1808 = vmatpush1.msra.mxu0 0.0
    %1809 = vmatprep.subr.mxu0 0.0
    %1810 = vmatpush1.msra.mxu0 0.0
    %1811 = vmatprep.subr.mxu0 0.0
    %1812 = vmatpush1.msra.mxu0 0.0
    %1813 = vmatprep.subr.mxu0 0.0
    %1814 = vmatpush1.msra.mxu0 0.0
    %1815 = vmatprep.subr.mxu0 0.0
    %1816 = vmatpush1.msra.mxu0 0.0
    %1817 = vmatprep.subr.mxu0 0.0
    %1818 = vmatpush1.msra.mxu0 0.0
    %1819 = vmatprep.subr.mxu0 0.0
    %1820 = vmatpush1.msra.mxu0 0.0
    %1821 = vmatprep.subr.mxu0 0.0
    %1822 = vmatpush1.msra.mxu0 0.0
    %1823 = vmatprep.subr.mxu0 0.0
    %1824 = vmatpush1.msra.mxu0 0.0
    %1825 = vmatprep.mubr.f32.mxu0 0.0
    %v1826 = vand.u32 %v1331, 4294901760
    %1827 = vmatmul.mubr.f32.gmra.mrb[0].mxu0 %v1826
    %v1828 = vpop.f32.mrb[0].mxu0
    %v1829 = vadd.f32 %v1750, %v1828
    %v1830 = vpop.f32.mrb[0].mxu0
    %1831 = vmatprep.mubr.f32.mxu0 0.0
    %v1832 = vand.u32 %v1334, 4294901760
    %1833 = vmatmul.mubr.f32.gmra.mrb[0].mxu0 %v1832
    %v1834 = vpop.f32.mrb[0].mxu0
    %v1835 = vadd.f32 %v1756, %v1834
    %v1836 = vpop.f32.mrb[0].mxu0
    %1837 = vdwg.mxu0
    %v1838 = vtanh.pop %v1829
    %v1839 = vtanh.pop %v1835
    %s1840 = scalar_lea.vmem %s2, 32
    %v1841 = vld [vmem:[%s1840] sm:$0xff]
    %v1842 = vld [vmem:[%s1840 + $0x8] sm:$0xff]
    %s1843 = scalar_lea.vmem %s3, 48
    %v1844 = vld [vmem:[%s1843] sm:$0xff]
    %v1845 = vld [vmem:[%s1843 + $0x8] sm:$0xff]
    %1847 = vset.pattern.permute.xlu0 0
    %1848 = vperm.xlu0 %1847, %v1844
    %v1849 = vpop.permute.xlu0 %1848
    %1852 = vset.pattern.permute.xlu0 0
    %1853 = vperm.xlu0 %1852, %v1845
    %v1854 = vpop.permute.xlu0 %1853
    %v1857 = vsel %vm48, %v1841, 0
    %v1860 = vsel %vm48, %v1842, 0
    %1862 = vmatprep.subr.mxu0 0.0
    %v1863 = vand.u32 %v1838, 4294901760
    %1864 = vmatpush1.msra.mxu0 %v1863
    %1865 = vmatprep.subr.mxu0 0.0
    %v1866 = vand.u32 %v1839, 4294901760
    %1867 = vmatpush1.msra.mxu0 %v1866
    %1868 = vmatprep.subr.mxu0 0.0
    %1869 = vmatpush1.msra.mxu0 0.0
    %1870 = vmatprep.subr.mxu0 0.0
    %1871 = vmatpush1.msra.mxu0 0.0
    %1872 = vmatprep.subr.mxu0 0.0
    %1873 = vmatpush1.msra.mxu0 0.0
    %1874 = vmatprep.subr.mxu0 0.0
    %1875 = vmatpush1.msra.mxu0 0.0
    %1876 = vmatprep.subr.mxu0 0.0
    %1877 = vmatpush1.msra.mxu0 0.0
    %1878 = vmatprep.subr.mxu0 0.0
    %1879 = vmatpush1.msra.mxu0 0.0
    %1880 = vmatprep.subr.mxu0 0.0
    %1881 = vmatpush1.msra.mxu0 0.0
    %1882 = vmatprep.subr.mxu0 0.0
    %1883 = vmatpush1.msra.mxu0 0.0
    %1884 = vmatprep.subr.mxu0 0.0
    %1885 = vmatpush1.msra.mxu0 0.0
    %1886 = vmatprep.subr.mxu0 0.0
    %1887 = vmatpush1.msra.mxu0 0.0
    %1888 = vmatprep.subr.mxu0 0.0
    %1889 = vmatpush1.msra.mxu0 0.0
    %1890 = vmatprep.subr.mxu0 0.0
    %1891 = vmatpush1.msra.mxu0 0.0
    %1892 = vmatprep.subr.mxu0 0.0
    %1893 = vmatpush1.msra.mxu0 0.0
    %1894 = vmatprep.subr.mxu0 0.0
    %1895 = vmatpush1.msra.mxu0 0.0
    %1896 = vmatprep.subr.mxu0 0.0
    %1897 = vmatpush1.msra.mxu0 0.0
    %1898 = vmatprep.subr.mxu0 0.0
    %1899 = vmatpush1.msra.mxu0 0.0
    %1900 = vmatprep.subr.mxu0 0.0
    %1901 = vmatpush1.msra.mxu0 0.0
    %1902 = vmatprep.subr.mxu0 0.0
    %1903 = vmatpush1.msra.mxu0 0.0
    %1904 = vmatprep.subr.mxu0 0.0
    %1905 = vmatpush1.msra.mxu0 0.0
    %1906 = vmatprep.subr.mxu0 0.0
    %1907 = vmatpush1.msra.mxu0 0.0
    %1908 = vmatprep.subr.mxu0 0.0
    %1909 = vmatpush1.msra.mxu0 0.0
    %1910 = vmatprep.subr.mxu0 0.0
    %1911 = vmatpush1.msra.mxu0 0.0
    %1912 = vmatprep.subr.mxu0 0.0
    %1913 = vmatpush1.msra.mxu0 0.0
    %1914 = vmatprep.subr.mxu0 0.0
    %1915 = vmatpush1.msra.mxu0 0.0
    %1916 = vmatprep.subr.mxu0 0.0
    %1917 = vmatpush1.msra.mxu0 0.0
    %1918 = vmatprep.subr.mxu0 0.0
    %1919 = vmatpush1.msra.mxu0 0.0
    %1920 = vmatprep.subr.mxu0 0.0
    %1921 = vmatpush1.msra.mxu0 0.0
    %1922 = vmatprep.subr.mxu0 0.0
    %1923 = vmatpush1.msra.mxu0 0.0
    %1924 = vmatprep.subr.mxu0 0.0
    %1925 = vmatpush1.msra.mxu0 0.0
    %1926 = vmatprep.subr.mxu0 0.0
    %1927 = vmatpush1.msra.mxu0 0.0
    %1928 = vmatprep.mubr.f32.mxu0 0.0
    %v1929 = vand.u32 %v1857, 4294901760
    %v1930 = vsub.f32 %v1857, %v1929
    %v1931 = vand.u32 %v1930, 4294901760
    %v1932 = vsub.f32 %v1930, %v1931
    %v1933 = vand.u32 %v1932, 4294901760
    %1934 = vmatmul.mubr.f32.gmra.mrb[0].mxu0 %v1933
    %v1935 = vpop.f32.mrb[0].mxu0
    %v1936 = vadd.f32 %v1849, %v1935
    %v1937 = vpop.f32.mrb[0].mxu0
    %1938 = vmatprep.mubr.f32.mxu0 0.0
    %v1939 = vand.u32 %v1860, 4294901760
    %v1940 = vsub.f32 %v1860, %v1939
    %v1941 = vand.u32 %v1940, 4294901760
    %v1942 = vsub.f32 %v1940, %v1941
    %v1943 = vand.u32 %v1942, 4294901760
    %1944 = vmatmul.mubr.f32.gmra.mrb[0].mxu0 %v1943
    %v1945 = vpop.f32.mrb[0].mxu0
    %v1946 = vadd.f32 %v1854, %v1945
    %v1947 = vpop.f32.mrb[0].mxu0
    %1948 = vdwg.mxu0
    %1949 = vmatprep.subr.mxu0 0.0
    %v1950 = vand.u32 %v1838, 4294901760
    %v1951 = vsub.f32 %v1838, %v1950
    %v1952 = vand.u32 %v1951, 4294901760
    %v1953 = vsub.f32 %v1951, %v1952
    %v1954 = vand.u32 %v1953, 4294901760
    %1955 = vmatpush1.msra.mxu0 %v1954
    %1956 = vmatprep.subr.mxu0 0.0
    %v1957 = vand.u32 %v1839, 4294901760
    %v1958 = vsub.f32 %v1839, %v1957
    %v1959 = vand.u32 %v1958, 4294901760
    %v1960 = vsub.f32 %v1958, %v1959
    %v1961 = vand.u32 %v1960, 4294901760
    %1962 = vmatpush1.msra.mxu0 %v1961
    %1963 = vmatprep.subr.mxu0 0.0
    %1964 = vmatpush1.msra.mxu0 0.0
    %1965 = vmatprep.subr.mxu0 0.0
    %1966 = vmatpush1.msra.mxu0 0.0
    %1967 = vmatprep.subr.mxu0 0.0
    %1968 = vmatpush1.msra.mxu0 0.0
    %1969 = vmatprep.subr.mxu0 0.0
    %1970 = vmatpush1.msra.mxu0 0.0
    %1971 = vmatprep.subr.mxu0 0.0
    %1972 = vmatpush1.msra.mxu0 0.0
    %1973 = vmatprep.subr.mxu0 0.0
    %1974 = vmatpush1.msra.mxu0 0.0
    %1975 = vmatprep.subr.mxu0 0.0
    %1976 = vmatpush1.msra.mxu0 0.0
    %1977 = vmatprep.subr.mxu0 0.0
    %1978 = vmatpush1.msra.mxu0 0.0
    %1979 = vmatprep.subr.mxu0 0.0
    %1980 = vmatpush1.msra.mxu0 0.0
    %1981 = vmatprep.subr.mxu0 0.0
    %1982 = vmatpush1.msra.mxu0 0.0
    %1983 = vmatprep.subr.mxu0 0.0
    %1984 = vmatpush1.msra.mxu0 0.0
    %1985 = vmatprep.subr.mxu0 0.0
    %1986 = vmatpush1.msra.mxu0 0.0
    %1987 = vmatprep.subr.mxu0 0.0
    %1988 = vmatpush1.msra.mxu0 0.0
    %1989 = vmatprep.subr.mxu0 0.0
    %1990 = vmatpush1.msra.mxu0 0.0
    %1991 = vmatprep.subr.mxu0 0.0
    %1992 = vmatpush1.msra.mxu0 0.0
    %1993 = vmatprep.subr.mxu0 0.0
    %1994 = vmatpush1.msra.mxu0 0.0
    %1995 = vmatprep.subr.mxu0 0.0
    %1996 = vmatpush1.msra.mxu0 0.0
    %1997 = vmatprep.subr.mxu0 0.0
    %1998 = vmatpush1.msra.mxu0 0.0
    %1999 = vmatprep.subr.mxu0 0.0
    %2000 = vmatpush1.msra.mxu0 0.0
    %2001 = vmatprep.subr.mxu0 0.0
    %2002 = vmatpush1.msra.mxu0 0.0
    %2003 = vmatprep.subr.mxu0 0.0
    %2004 = vmatpush1.msra.mxu0 0.0
    %2005 = vmatprep.subr.mxu0 0.0
    %2006 = vmatpush1.msra.mxu0 0.0
    %2007 = vmatprep.subr.mxu0 0.0
    %2008 = vmatpush1.msra.mxu0 0.0
    %2009 = vmatprep.subr.mxu0 0.0
    %2010 = vmatpush1.msra.mxu0 0.0
    %2011 = vmatprep.subr.mxu0 0.0
    %2012 = vmatpush1.msra.mxu0 0.0
    %2013 = vmatprep.subr.mxu0 0.0
    %2014 = vmatpush1.msra.mxu0 0.0
    %2015 = vmatprep.subr.mxu0 0.0
    %2016 = vmatpush1.msra.mxu0 0.0
    %2017 = vmatprep.subr.mxu0 0.0
    %2018 = vmatpush1.msra.mxu0 0.0
    %2019 = vmatprep.subr.mxu0 0.0
    %2020 = vmatpush1.msra.mxu0 0.0
    %2021 = vmatprep.subr.mxu0 0.0
    %2022 = vmatpush1.msra.mxu0 0.0
    %2023 = vmatprep.mubr.f32.mxu0 0.0
    %v2024 = vand.u32 %v1857, 4294901760
    %2025 = vmatmul.mubr.f32.gmra.mrb[0].mxu0 %v2024
    %v2026 = vpop.f32.mrb[0].mxu0
    %v2027 = vadd.f32 %v1936, %v2026
    %v2028 = vpop.f32.mrb[0].mxu0
    %2029 = vmatprep.mubr.f32.mxu0 0.0
    %v2030 = vand.u32 %v1860, 4294901760
    %2031 = vmatmul.mubr.f32.gmra.mrb[0].mxu0 %v2030
    %v2032 = vpop.f32.mrb[0].mxu0
    %v2033 = vadd.f32 %v1946, %v2032
    %v2034 = vpop.f32.mrb[0].mxu0
    %2035 = vdwg.mxu0
    %2036 = vmatprep.subr.mxu0 0.0
    %v2037 = vand.u32 %v1838, 4294901760
    %v2038 = vsub.f32 %v1838, %v2037
    %2039 = vmatpush1.msra.mxu0 %v2038
    %2040 = vmatprep.subr.mxu0 0.0
    %v2041 = vand.u32 %v1839, 4294901760
    %v2042 = vsub.f32 %v1839, %v2041
    %2043 = vmatpush1.msra.mxu0 %v2042
    %2044 = vmatprep.subr.mxu0 0.0
    %2045 = vmatpush1.msra.mxu0 0.0
    %2046 = vmatprep.subr.mxu0 0.0
    %2047 = vmatpush1.msra.mxu0 0.0
    %2048 = vmatprep.subr.mxu0 0.0
    %2049 = vmatpush1.msra.mxu0 0.0
    %2050 = vmatprep.subr.mxu0 0.0
    %2051 = vmatpush1.msra.mxu0 0.0
    %2052 = vmatprep.subr.mxu0 0.0
    %2053 = vmatpush1.msra.mxu0 0.0
    %2054 = vmatprep.subr.mxu0 0.0
    %2055 = vmatpush1.msra.mxu0 0.0
    %2056 = vmatprep.subr.mxu0 0.0
    %2057 = vmatpush1.msra.mxu0 0.0
    %2058 = vmatprep.subr.mxu0 0.0
    %2059 = vmatpush1.msra.mxu0 0.0
    %2060 = vmatprep.subr.mxu0 0.0
    %2061 = vmatpush1.msra.mxu0 0.0
    %2062 = vmatprep.subr.mxu0 0.0
    %2063 = vmatpush1.msra.mxu0 0.0
    %2064 = vmatprep.subr.mxu0 0.0
    %2065 = vmatpush1.msra.mxu0 0.0
    %2066 = vmatprep.subr.mxu0 0.0
    %2067 = vmatpush1.msra.mxu0 0.0
    %2068 = vmatprep.subr.mxu0 0.0
    %2069 = vmatpush1.msra.mxu0 0.0
    %2070 = vmatprep.subr.mxu0 0.0
    %2071 = vmatpush1.msra.mxu0 0.0
    %2072 = vmatprep.subr.mxu0 0.0
    %2073 = vmatpush1.msra.mxu0 0.0
    %2074 = vmatprep.subr.mxu0 0.0
    %2075 = vmatpush1.msra.mxu0 0.0
    %2076 = vmatprep.subr.mxu0 0.0
    %2077 = vmatpush1.msra.mxu0 0.0
    %2078 = vmatprep.subr.mxu0 0.0
    %2079 = vmatpush1.msra.mxu0 0.0
    %2080 = vmatprep.subr.mxu0 0.0
    %2081 = vmatpush1.msra.mxu0 0.0
    %2082 = vmatprep.subr.mxu0 0.0
    %2083 = vmatpush1.msra.mxu0 0.0
    %2084 = vmatprep.subr.mxu0 0.0
    %2085 = vmatpush1.msra.mxu0 0.0
    %2086 = vmatprep.subr.mxu0 0.0
    %2087 = vmatpush1.msra.mxu0 0.0
    %2088 = vmatprep.subr.mxu0 0.0
    %2089 = vmatpush1.msra.mxu0 0.0
    %2090 = vmatprep.subr.mxu0 0.0
    %2091 = vmatpush1.msra.mxu0 0.0
    %2092 = vmatprep.subr.mxu0 0.0
    %2093 = vmatpush1.msra.mxu0 0.0
    %2094 = vmatprep.subr.mxu0 0.0
    %2095 = vmatpush1.msra.mxu0 0.0
    %2096 = vmatprep.subr.mxu0 0.0
    %2097 = vmatpush1.msra.mxu0 0.0
    %2098 = vmatprep.subr.mxu0 0.0
    %2099 = vmatpush1.msra.mxu0 0.0
    %2100 = vmatprep.subr.mxu0 0.0
    %2101 = vmatpush1.msra.mxu0 0.0
    %2102 = vmatprep.subr.mxu0 0.0
    %2103 = vmatpush1.msra.mxu0 0.0
    %2104 = vmatprep.mubr.f32.mxu0 0.0
    %v2105 = vand.u32 %v1857, 4294901760
    %v2106 = vsub.f32 %v1857, %v2105
    %2107 = vmatmul.mubr.f32.gmra.mrb[0].mxu0 %v2106
    %v2108 = vpop.f32.mrb[0].mxu0
    %v2109 = vadd.f32 %v2027, %v2108
    %v2110 = vpop.f32.mrb[0].mxu0
    %2111 = vmatprep.mubr.f32.mxu0 0.0
    %v2112 = vand.u32 %v1860, 4294901760
    %v2113 = vsub.f32 %v1860, %v2112
    %2114 = vmatmul.mubr.f32.gmra.mrb[0].mxu0 %v2113
    %v2115 = vpop.f32.mrb[0].mxu0
    %v2116 = vadd.f32 %v2033, %v2115
    %v2117 = vpop.f32.mrb[0].mxu0
    %2118 = vdwg.mxu0
    %2119 = vmatprep.subr.mxu0 0.0
    %v2120 = vand.u32 %v1838, 4294901760
    %2121 = vmatpush1.msra.mxu0 %v2120
    %2122 = vmatprep.subr.mxu0 0.0
    %v2123 = vand.u32 %v1839, 4294901760
    %2124 = vmatpush1.msra.mxu0 %v2123
    %2125 = vmatprep.subr.mxu0 0.0
    %2126 = vmatpush1.msra.mxu0 0.0
    %2127 = vmatprep.subr.mxu0 0.0
    %2128 = vmatpush1.msra.mxu0 0.0
    %2129 = vmatprep.subr.mxu0 0.0
    %2130 = vmatpush1.msra.mxu0 0.0
    %2131 = vmatprep.subr.mxu0 0.0
    %2132 = vmatpush1.msra.mxu0 0.0
    %2133 = vmatprep.subr.mxu0 0.0
    %2134 = vmatpush1.msra.mxu0 0.0
    %2135 = vmatprep.subr.mxu0 0.0
    %2136 = vmatpush1.msra.mxu0 0.0
    %2137 = vmatprep.subr.mxu0 0.0
    %2138 = vmatpush1.msra.mxu0 0.0
    %2139 = vmatprep.subr.mxu0 0.0
    %2140 = vmatpush1.msra.mxu0 0.0
    %2141 = vmatprep.subr.mxu0 0.0
    %2142 = vmatpush1.msra.mxu0 0.0
    %2143 = vmatprep.subr.mxu0 0.0
    %2144 = vmatpush1.msra.mxu0 0.0
    %2145 = vmatprep.subr.mxu0 0.0
    %2146 = vmatpush1.msra.mxu0 0.0
    %2147 = vmatprep.subr.mxu0 0.0
    %2148 = vmatpush1.msra.mxu0 0.0
    %2149 = vmatprep.subr.mxu0 0.0
    %2150 = vmatpush1.msra.mxu0 0.0
    %2151 = vmatprep.subr.mxu0 0.0
    %2152 = vmatpush1.msra.mxu0 0.0
    %2153 = vmatprep.subr.mxu0 0.0
    %2154 = vmatpush1.msra.mxu0 0.0
    %2155 = vmatprep.subr.mxu0 0.0
    %2156 = vmatpush1.msra.mxu0 0.0
    %2157 = vmatprep.subr.mxu0 0.0
    %2158 = vmatpush1.msra.mxu0 0.0
    %2159 = vmatprep.subr.mxu0 0.0
    %2160 = vmatpush1.msra.mxu0 0.0
    %2161 = vmatprep.subr.mxu0 0.0
    %2162 = vmatpush1.msra.mxu0 0.0
    %2163 = vmatprep.subr.mxu0 0.0
    %2164 = vmatpush1.msra.mxu0 0.0
    %2165 = vmatprep.subr.mxu0 0.0
    %2166 = vmatpush1.msra.mxu0 0.0
    %2167 = vmatprep.subr.mxu0 0.0
    %2168 = vmatpush1.msra.mxu0 0.0
    %2169 = vmatprep.subr.mxu0 0.0
    %2170 = vmatpush1.msra.mxu0 0.0
    %2171 = vmatprep.subr.mxu0 0.0
    %2172 = vmatpush1.msra.mxu0 0.0
    %2173 = vmatprep.subr.mxu0 0.0
    %2174 = vmatpush1.msra.mxu0 0.0
    %2175 = vmatprep.subr.mxu0 0.0
    %2176 = vmatpush1.msra.mxu0 0.0
    %2177 = vmatprep.subr.mxu0 0.0
    %2178 = vmatpush1.msra.mxu0 0.0
    %2179 = vmatprep.subr.mxu0 0.0
    %2180 = vmatpush1.msra.mxu0 0.0
    %2181 = vmatprep.subr.mxu0 0.0
    %2182 = vmatpush1.msra.mxu0 0.0
    %2183 = vmatprep.subr.mxu0 0.0
    %2184 = vmatpush1.msra.mxu0 0.0
    %2185 = vmatprep.mubr.f32.mxu0 0.0
    %v2186 = vand.u32 %v1857, 4294901760
    %v2187 = vsub.f32 %v1857, %v2186
    %v2188 = vand.u32 %v2187, 4294901760
    %2189 = vmatmul.mubr.f32.gmra.mrb[0].mxu0 %v2188
    %v2190 = vpop.f32.mrb[0].mxu0
    %v2191 = vadd.f32 %v2109, %v2190
    %v2192 = vpop.f32.mrb[0].mxu0
    %2193 = vmatprep.mubr.f32.mxu0 0.0
    %v2194 = vand.u32 %v1860, 4294901760
    %v2195 = vsub.f32 %v1860, %v2194
    %v2196 = vand.u32 %v2195, 4294901760
    %2197 = vmatmul.mubr.f32.gmra.mrb[0].mxu0 %v2196
    %v2198 = vpop.f32.mrb[0].mxu0
    %v2199 = vadd.f32 %v2116, %v2198
    %v2200 = vpop.f32.mrb[0].mxu0
    %2201 = vdwg.mxu0
    %2202 = vmatprep.subr.mxu0 0.0
    %v2203 = vand.u32 %v1838, 4294901760
    %v2204 = vsub.f32 %v1838, %v2203
    %v2205 = vand.u32 %v2204, 4294901760
    %2206 = vmatpush1.msra.mxu0 %v2205
    %2207 = vmatprep.subr.mxu0 0.0
    %v2208 = vand.u32 %v1839, 4294901760
    %v2209 = vsub.f32 %v1839, %v2208
    %v2210 = vand.u32 %v2209, 4294901760
    %2211 = vmatpush1.msra.mxu0 %v2210
    %2212 = vmatprep.subr.mxu0 0.0
    %2213 = vmatpush1.msra.mxu0 0.0
    %2214 = vmatprep.subr.mxu0 0.0
    %2215 = vmatpush1.msra.mxu0 0.0
    %2216 = vmatprep.subr.mxu0 0.0
    %2217 = vmatpush1.msra.mxu0 0.0
    %2218 = vmatprep.subr.mxu0 0.0
    %2219 = vmatpush1.msra.mxu0 0.0
    %2220 = vmatprep.subr.mxu0 0.0
    %2221 = vmatpush1.msra.mxu0 0.0
    %2222 = vmatprep.subr.mxu0 0.0
    %2223 = vmatpush1.msra.mxu0 0.0
    %2224 = vmatprep.subr.mxu0 0.0
    %2225 = vmatpush1.msra.mxu0 0.0
    %2226 = vmatprep.subr.mxu0 0.0
    %2227 = vmatpush1.msra.mxu0 0.0
    %2228 = vmatprep.subr.mxu0 0.0
    %2229 = vmatpush1.msra.mxu0 0.0
    %2230 = vmatprep.subr.mxu0 0.0
    %2231 = vmatpush1.msra.mxu0 0.0
    %2232 = vmatprep.subr.mxu0 0.0
    %2233 = vmatpush1.msra.mxu0 0.0
    %2234 = vmatprep.subr.mxu0 0.0
    %2235 = vmatpush1.msra.mxu0 0.0
    %2236 = vmatprep.subr.mxu0 0.0
    %2237 = vmatpush1.msra.mxu0 0.0
    %2238 = vmatprep.subr.mxu0 0.0
    %2239 = vmatpush1.msra.mxu0 0.0
    %2240 = vmatprep.subr.mxu0 0.0
    %2241 = vmatpush1.msra.mxu0 0.0
    %2242 = vmatprep.subr.mxu0 0.0
    %2243 = vmatpush1.msra.mxu0 0.0
    %2244 = vmatprep.subr.mxu0 0.0
    %2245 = vmatpush1.msra.mxu0 0.0
    %2246 = vmatprep.subr.mxu0 0.0
    %2247 = vmatpush1.msra.mxu0 0.0
    %2248 = vmatprep.subr.mxu0 0.0
    %2249 = vmatpush1.msra.mxu0 0.0
    %2250 = vmatprep.subr.mxu0 0.0
    %2251 = vmatpush1.msra.mxu0 0.0
    %2252 = vmatprep.subr.mxu0 0.0
    %2253 = vmatpush1.msra.mxu0 0.0
    %2254 = vmatprep.subr.mxu0 0.0
    %2255 = vmatpush1.msra.mxu0 0.0
    %2256 = vmatprep.subr.mxu0 0.0
    %2257 = vmatpush1.msra.mxu0 0.0
    %2258 = vmatprep.subr.mxu0 0.0
    %2259 = vmatpush1.msra.mxu0 0.0
    %2260 = vmatprep.subr.mxu0 0.0
    %2261 = vmatpush1.msra.mxu0 0.0
    %2262 = vmatprep.subr.mxu0 0.0
    %2263 = vmatpush1.msra.mxu0 0.0
    %2264 = vmatprep.subr.mxu0 0.0
    %2265 = vmatpush1.msra.mxu0 0.0
    %2266 = vmatprep.subr.mxu0 0.0
    %2267 = vmatpush1.msra.mxu0 0.0
    %2268 = vmatprep.subr.mxu0 0.0
    %2269 = vmatpush1.msra.mxu0 0.0
    %2270 = vmatprep.subr.mxu0 0.0
    %2271 = vmatpush1.msra.mxu0 0.0
    %2272 = vmatprep.mubr.f32.mxu0 0.0
    %v2273 = vand.u32 %v1857, 4294901760
    %2274 = vmatmul.mubr.f32.gmra.mrb[0].mxu0 %v2273
    %v2275 = vpop.f32.mrb[0].mxu0
    %v2276 = vadd.f32 %v2191, %v2275
    %v2277 = vpop.f32.mrb[0].mxu0
    %2278 = vmatprep.mubr.f32.mxu0 0.0
    %v2279 = vand.u32 %v1860, 4294901760
    %2280 = vmatmul.mubr.f32.gmra.mrb[0].mxu0 %v2279
    %v2281 = vpop.f32.mrb[0].mxu0
    %v2282 = vadd.f32 %v2199, %v2281
    %v2283 = vpop.f32.mrb[0].mxu0
    %2284 = vdwg.mxu0
    %2285 = vmatprep.subr.mxu0 0.0
    %v2286 = vand.u32 %v1838, 4294901760
    %2287 = vmatpush1.msra.mxu0 %v2286
    %2288 = vmatprep.subr.mxu0 0.0
    %v2289 = vand.u32 %v1839, 4294901760
    %2290 = vmatpush1.msra.mxu0 %v2289
    %2291 = vmatprep.subr.mxu0 0.0
    %2292 = vmatpush1.msra.mxu0 0.0
    %2293 = vmatprep.subr.mxu0 0.0
    %2294 = vmatpush1.msra.mxu0 0.0
    %2295 = vmatprep.subr.mxu0 0.0
    %2296 = vmatpush1.msra.mxu0 0.0
    %2297 = vmatprep.subr.mxu0 0.0
    %2298 = vmatpush1.msra.mxu0 0.0
    %2299 = vmatprep.subr.mxu0 0.0
    %2300 = vmatpush1.msra.mxu0 0.0
    %2301 = vmatprep.subr.mxu0 0.0
    %2302 = vmatpush1.msra.mxu0 0.0
    %2303 = vmatprep.subr.mxu0 0.0
    %2304 = vmatpush1.msra.mxu0 0.0
    %2305 = vmatprep.subr.mxu0 0.0
    %2306 = vmatpush1.msra.mxu0 0.0
    %2307 = vmatprep.subr.mxu0 0.0
    %2308 = vmatpush1.msra.mxu0 0.0
    %2309 = vmatprep.subr.mxu0 0.0
    %2310 = vmatpush1.msra.mxu0 0.0
    %2311 = vmatprep.subr.mxu0 0.0
    %2312 = vmatpush1.msra.mxu0 0.0
    %2313 = vmatprep.subr.mxu0 0.0
    %2314 = vmatpush1.msra.mxu0 0.0
    %2315 = vmatprep.subr.mxu0 0.0
    %2316 = vmatpush1.msra.mxu0 0.0
    %2317 = vmatprep.subr.mxu0 0.0
    %2318 = vmatpush1.msra.mxu0 0.0
    %2319 = vmatprep.subr.mxu0 0.0
    %2320 = vmatpush1.msra.mxu0 0.0
    %2321 = vmatprep.subr.mxu0 0.0
    %2322 = vmatpush1.msra.mxu0 0.0
    %2323 = vmatprep.subr.mxu0 0.0
    %2324 = vmatpush1.msra.mxu0 0.0
    %2325 = vmatprep.subr.mxu0 0.0
    %2326 = vmatpush1.msra.mxu0 0.0
    %2327 = vmatprep.subr.mxu0 0.0
    %2328 = vmatpush1.msra.mxu0 0.0
    %2329 = vmatprep.subr.mxu0 0.0
    %2330 = vmatpush1.msra.mxu0 0.0
    %2331 = vmatprep.subr.mxu0 0.0
    %2332 = vmatpush1.msra.mxu0 0.0
    %2333 = vmatprep.subr.mxu0 0.0
    %2334 = vmatpush1.msra.mxu0 0.0
    %2335 = vmatprep.subr.mxu0 0.0
    %2336 = vmatpush1.msra.mxu0 0.0
    %2337 = vmatprep.subr.mxu0 0.0
    %2338 = vmatpush1.msra.mxu0 0.0
    %2339 = vmatprep.subr.mxu0 0.0
    %2340 = vmatpush1.msra.mxu0 0.0
    %2341 = vmatprep.subr.mxu0 0.0
    %2342 = vmatpush1.msra.mxu0 0.0
    %2343 = vmatprep.subr.mxu0 0.0
    %2344 = vmatpush1.msra.mxu0 0.0
    %2345 = vmatprep.subr.mxu0 0.0
    %2346 = vmatpush1.msra.mxu0 0.0
    %2347 = vmatprep.subr.mxu0 0.0
    %2348 = vmatpush1.msra.mxu0 0.0
    %2349 = vmatprep.subr.mxu0 0.0
    %2350 = vmatpush1.msra.mxu0 0.0
    %2351 = vmatprep.mubr.f32.mxu0 0.0
    %v2352 = vand.u32 %v1857, 4294901760
    %2353 = vmatmul.mubr.f32.gmra.mrb[0].mxu0 %v2352
    %v2354 = vpop.f32.mrb[0].mxu0
    %v2355 = vadd.f32 %v2276, %v2354
    %v2356 = vpop.f32.mrb[0].mxu0
    %2357 = vmatprep.mubr.f32.mxu0 0.0
    %v2358 = vand.u32 %v1860, 4294901760
    %2359 = vmatmul.mubr.f32.gmra.mrb[0].mxu0 %v2358
    %v2360 = vpop.f32.mrb[0].mxu0
    %v2361 = vadd.f32 %v2282, %v2360
    %v2362 = vpop.f32.mrb[0].mxu0
    %2363 = vdwg.mxu0
    %v2364 = vtanh.pop %v2355
    %v2365 = vtanh.pop %v2361
    %s2366 = scalar_lea.vmem %s2, 48
    %v2367 = vld [vmem:[%s2366] sm:$0xff]
    %v2368 = vld [vmem:[%s2366 + $0x8] sm:$0xff]
    %s2369 = scalar_lea.vmem %s3, 64
    %v2370 = vld [vmem:[%s2369] sm:$0xff]
    %v2371 = vld [vmem:[%s2369 + $0x8] sm:$0xff]
    %2373 = vset.pattern.permute.xlu0 0
    %2374 = vperm.xlu0 %2373, %v2370
    %v2375 = vpop.permute.xlu0 %2374
    %2378 = vset.pattern.permute.xlu0 0
    %2379 = vperm.xlu0 %2378, %v2371
    %v2380 = vpop.permute.xlu0 %2379
    %v2383 = vsel %vm48, %v2367, 0
    %v2386 = vsel %vm48, %v2368, 0
    %2388 = vmatprep.subr.mxu0 0.0
    %v2389 = vand.u32 %v2364, 4294901760
    %2390 = vmatpush1.msra.mxu0 %v2389
    %2391 = vmatprep.subr.mxu0 0.0
    %v2392 = vand.u32 %v2365, 4294901760
    %2393 = vmatpush1.msra.mxu0 %v2392
    %2394 = vmatprep.subr.mxu0 0.0
    %2395 = vmatpush1.msra.mxu0 0.0
    %2396 = vmatprep.subr.mxu0 0.0
    %2397 = vmatpush1.msra.mxu0 0.0
    %2398 = vmatprep.subr.mxu0 0.0
    %2399 = vmatpush1.msra.mxu0 0.0
    %2400 = vmatprep.subr.mxu0 0.0
    %2401 = vmatpush1.msra.mxu0 0.0
    %2402 = vmatprep.subr.mxu0 0.0
    %2403 = vmatpush1.msra.mxu0 0.0
    %2404 = vmatprep.subr.mxu0 0.0
    %2405 = vmatpush1.msra.mxu0 0.0
    %2406 = vmatprep.subr.mxu0 0.0
    %2407 = vmatpush1.msra.mxu0 0.0
    %2408 = vmatprep.subr.mxu0 0.0
    %2409 = vmatpush1.msra.mxu0 0.0
    %2410 = vmatprep.subr.mxu0 0.0
    %2411 = vmatpush1.msra.mxu0 0.0
    %2412 = vmatprep.subr.mxu0 0.0
    %2413 = vmatpush1.msra.mxu0 0.0
    %2414 = vmatprep.subr.mxu0 0.0
    %2415 = vmatpush1.msra.mxu0 0.0
    %2416 = vmatprep.subr.mxu0 0.0
    %2417 = vmatpush1.msra.mxu0 0.0
    %2418 = vmatprep.subr.mxu0 0.0
    %2419 = vmatpush1.msra.mxu0 0.0
    %2420 = vmatprep.subr.mxu0 0.0
    %2421 = vmatpush1.msra.mxu0 0.0
    %2422 = vmatprep.subr.mxu0 0.0
    %2423 = vmatpush1.msra.mxu0 0.0
    %2424 = vmatprep.subr.mxu0 0.0
    %2425 = vmatpush1.msra.mxu0 0.0
    %2426 = vmatprep.subr.mxu0 0.0
    %2427 = vmatpush1.msra.mxu0 0.0
    %2428 = vmatprep.subr.mxu0 0.0
    %2429 = vmatpush1.msra.mxu0 0.0
    %2430 = vmatprep.subr.mxu0 0.0
    %2431 = vmatpush1.msra.mxu0 0.0
    %2432 = vmatprep.subr.mxu0 0.0
    %2433 = vmatpush1.msra.mxu0 0.0
    %2434 = vmatprep.subr.mxu0 0.0
    %2435 = vmatpush1.msra.mxu0 0.0
    %2436 = vmatprep.subr.mxu0 0.0
    %2437 = vmatpush1.msra.mxu0 0.0
    %2438 = vmatprep.subr.mxu0 0.0
    %2439 = vmatpush1.msra.mxu0 0.0
    %2440 = vmatprep.subr.mxu0 0.0
    %2441 = vmatpush1.msra.mxu0 0.0
    %2442 = vmatprep.subr.mxu0 0.0
    %2443 = vmatpush1.msra.mxu0 0.0
    %2444 = vmatprep.subr.mxu0 0.0
    %2445 = vmatpush1.msra.mxu0 0.0
    %2446 = vmatprep.subr.mxu0 0.0
    %2447 = vmatpush1.msra.mxu0 0.0
    %2448 = vmatprep.subr.mxu0 0.0
    %2449 = vmatpush1.msra.mxu0 0.0
    %2450 = vmatprep.subr.mxu0 0.0
    %2451 = vmatpush1.msra.mxu0 0.0
    %2452 = vmatprep.subr.mxu0 0.0
    %2453 = vmatpush1.msra.mxu0 0.0
    %2454 = vmatprep.mubr.f32.mxu0 0.0
    %v2455 = vand.u32 %v2383, 4294901760
    %v2456 = vsub.f32 %v2383, %v2455
    %v2457 = vand.u32 %v2456, 4294901760
    %v2458 = vsub.f32 %v2456, %v2457
    %v2459 = vand.u32 %v2458, 4294901760
    %2460 = vmatmul.mubr.f32.gmra.mrb[0].mxu0 %v2459
    %v2461 = vpop.f32.mrb[0].mxu0
    %v2462 = vadd.f32 %v2375, %v2461
    %v2463 = vpop.f32.mrb[0].mxu0
    %2464 = vmatprep.mubr.f32.mxu0 0.0
    %v2465 = vand.u32 %v2386, 4294901760
    %v2466 = vsub.f32 %v2386, %v2465
    %v2467 = vand.u32 %v2466, 4294901760
    %v2468 = vsub.f32 %v2466, %v2467
    %v2469 = vand.u32 %v2468, 4294901760
    %2470 = vmatmul.mubr.f32.gmra.mrb[0].mxu0 %v2469
    %v2471 = vpop.f32.mrb[0].mxu0
    %v2472 = vadd.f32 %v2380, %v2471
    %v2473 = vpop.f32.mrb[0].mxu0
    %2474 = vdwg.mxu0
    %2475 = vmatprep.subr.mxu0 0.0
    %v2476 = vand.u32 %v2364, 4294901760
    %v2477 = vsub.f32 %v2364, %v2476
    %v2478 = vand.u32 %v2477, 4294901760
    %v2479 = vsub.f32 %v2477, %v2478
    %v2480 = vand.u32 %v2479, 4294901760
    %2481 = vmatpush1.msra.mxu0 %v2480
    %2482 = vmatprep.subr.mxu0 0.0
    %v2483 = vand.u32 %v2365, 4294901760
    %v2484 = vsub.f32 %v2365, %v2483
    %v2485 = vand.u32 %v2484, 4294901760
    %v2486 = vsub.f32 %v2484, %v2485
    %v2487 = vand.u32 %v2486, 4294901760
    %2488 = vmatpush1.msra.mxu0 %v2487
    %2489 = vmatprep.subr.mxu0 0.0
    %2490 = vmatpush1.msra.mxu0 0.0
    %2491 = vmatprep.subr.mxu0 0.0
    %2492 = vmatpush1.msra.mxu0 0.0
    %2493 = vmatprep.subr.mxu0 0.0
    %2494 = vmatpush1.msra.mxu0 0.0
    %2495 = vmatprep.subr.mxu0 0.0
    %2496 = vmatpush1.msra.mxu0 0.0
    %2497 = vmatprep.subr.mxu0 0.0
    %2498 = vmatpush1.msra.mxu0 0.0
    %2499 = vmatprep.subr.mxu0 0.0
    %2500 = vmatpush1.msra.mxu0 0.0
    %2501 = vmatprep.subr.mxu0 0.0
    %2502 = vmatpush1.msra.mxu0 0.0
    %2503 = vmatprep.subr.mxu0 0.0
    %2504 = vmatpush1.msra.mxu0 0.0
    %2505 = vmatprep.subr.mxu0 0.0
    %2506 = vmatpush1.msra.mxu0 0.0
    %2507 = vmatprep.subr.mxu0 0.0
    %2508 = vmatpush1.msra.mxu0 0.0
    %2509 = vmatprep.subr.mxu0 0.0
    %2510 = vmatpush1.msra.mxu0 0.0
    %2511 = vmatprep.subr.mxu0 0.0
    %2512 = vmatpush1.msra.mxu0 0.0
    %2513 = vmatprep.subr.mxu0 0.0
    %2514 = vmatpush1.msra.mxu0 0.0
    %2515 = vmatprep.subr.mxu0 0.0
    %2516 = vmatpush1.msra.mxu0 0.0
    %2517 = vmatprep.subr.mxu0 0.0
    %2518 = vmatpush1.msra.mxu0 0.0
    %2519 = vmatprep.subr.mxu0 0.0
    %2520 = vmatpush1.msra.mxu0 0.0
    %2521 = vmatprep.subr.mxu0 0.0
    %2522 = vmatpush1.msra.mxu0 0.0
    %2523 = vmatprep.subr.mxu0 0.0
    %2524 = vmatpush1.msra.mxu0 0.0
    %2525 = vmatprep.subr.mxu0 0.0
    %2526 = vmatpush1.msra.mxu0 0.0
    %2527 = vmatprep.subr.mxu0 0.0
    %2528 = vmatpush1.msra.mxu0 0.0
    %2529 = vmatprep.subr.mxu0 0.0
    %2530 = vmatpush1.msra.mxu0 0.0
    %2531 = vmatprep.subr.mxu0 0.0
    %2532 = vmatpush1.msra.mxu0 0.0
    %2533 = vmatprep.subr.mxu0 0.0
    %2534 = vmatpush1.msra.mxu0 0.0
    %2535 = vmatprep.subr.mxu0 0.0
    %2536 = vmatpush1.msra.mxu0 0.0
    %2537 = vmatprep.subr.mxu0 0.0
    %2538 = vmatpush1.msra.mxu0 0.0
    %2539 = vmatprep.subr.mxu0 0.0
    %2540 = vmatpush1.msra.mxu0 0.0
    %2541 = vmatprep.subr.mxu0 0.0
    %2542 = vmatpush1.msra.mxu0 0.0
    %2543 = vmatprep.subr.mxu0 0.0
    %2544 = vmatpush1.msra.mxu0 0.0
    %2545 = vmatprep.subr.mxu0 0.0
    %2546 = vmatpush1.msra.mxu0 0.0
    %2547 = vmatprep.subr.mxu0 0.0
    %2548 = vmatpush1.msra.mxu0 0.0
    %2549 = vmatprep.mubr.f32.mxu0 0.0
    %v2550 = vand.u32 %v2383, 4294901760
    %2551 = vmatmul.mubr.f32.gmra.mrb[0].mxu0 %v2550
    %v2552 = vpop.f32.mrb[0].mxu0
    %v2553 = vadd.f32 %v2462, %v2552
    %v2554 = vpop.f32.mrb[0].mxu0
    %2555 = vmatprep.mubr.f32.mxu0 0.0
    %v2556 = vand.u32 %v2386, 4294901760
    %2557 = vmatmul.mubr.f32.gmra.mrb[0].mxu0 %v2556
    %v2558 = vpop.f32.mrb[0].mxu0
    %v2559 = vadd.f32 %v2472, %v2558
    %v2560 = vpop.f32.mrb[0].mxu0
    %2561 = vdwg.mxu0
    %2562 = vmatprep.subr.mxu0 0.0
    %v2563 = vand.u32 %v2364, 4294901760
    %v2564 = vsub.f32 %v2364, %v2563
    %2565 = vmatpush1.msra.mxu0 %v2564
    %2566 = vmatprep.subr.mxu0 0.0
    %v2567 = vand.u32 %v2365, 4294901760
    %v2568 = vsub.f32 %v2365, %v2567
    %2569 = vmatpush1.msra.mxu0 %v2568
    %2570 = vmatprep.subr.mxu0 0.0
    %2571 = vmatpush1.msra.mxu0 0.0
    %2572 = vmatprep.subr.mxu0 0.0
    %2573 = vmatpush1.msra.mxu0 0.0
    %2574 = vmatprep.subr.mxu0 0.0
    %2575 = vmatpush1.msra.mxu0 0.0
    %2576 = vmatprep.subr.mxu0 0.0
    %2577 = vmatpush1.msra.mxu0 0.0
    %2578 = vmatprep.subr.mxu0 0.0
    %2579 = vmatpush1.msra.mxu0 0.0
    %2580 = vmatprep.subr.mxu0 0.0
    %2581 = vmatpush1.msra.mxu0 0.0
    %2582 = vmatprep.subr.mxu0 0.0
    %2583 = vmatpush1.msra.mxu0 0.0
    %2584 = vmatprep.subr.mxu0 0.0
    %2585 = vmatpush1.msra.mxu0 0.0
    %2586 = vmatprep.subr.mxu0 0.0
    %2587 = vmatpush1.msra.mxu0 0.0
    %2588 = vmatprep.subr.mxu0 0.0
    %2589 = vmatpush1.msra.mxu0 0.0
    %2590 = vmatprep.subr.mxu0 0.0
    %2591 = vmatpush1.msra.mxu0 0.0
    %2592 = vmatprep.subr.mxu0 0.0
    %2593 = vmatpush1.msra.mxu0 0.0
    %2594 = vmatprep.subr.mxu0 0.0
    %2595 = vmatpush1.msra.mxu0 0.0
    %2596 = vmatprep.subr.mxu0 0.0
    %2597 = vmatpush1.msra.mxu0 0.0
    %2598 = vmatprep.subr.mxu0 0.0
    %2599 = vmatpush1.msra.mxu0 0.0
    %2600 = vmatprep.subr.mxu0 0.0
    %2601 = vmatpush1.msra.mxu0 0.0
    %2602 = vmatprep.subr.mxu0 0.0
    %2603 = vmatpush1.msra.mxu0 0.0
    %2604 = vmatprep.subr.mxu0 0.0
    %2605 = vmatpush1.msra.mxu0 0.0
    %2606 = vmatprep.subr.mxu0 0.0
    %2607 = vmatpush1.msra.mxu0 0.0
    %2608 = vmatprep.subr.mxu0 0.0
    %2609 = vmatpush1.msra.mxu0 0.0
    %2610 = vmatprep.subr.mxu0 0.0
    %2611 = vmatpush1.msra.mxu0 0.0
    %2612 = vmatprep.subr.mxu0 0.0
    %2613 = vmatpush1.msra.mxu0 0.0
    %2614 = vmatprep.subr.mxu0 0.0
    %2615 = vmatpush1.msra.mxu0 0.0
    %2616 = vmatprep.subr.mxu0 0.0
    %2617 = vmatpush1.msra.mxu0 0.0
    %2618 = vmatprep.subr.mxu0 0.0
    %2619 = vmatpush1.msra.mxu0 0.0
    %2620 = vmatprep.subr.mxu0 0.0
    %2621 = vmatpush1.msra.mxu0 0.0
    %2622 = vmatprep.subr.mxu0 0.0
    %2623 = vmatpush1.msra.mxu0 0.0
    %2624 = vmatprep.subr.mxu0 0.0
    %2625 = vmatpush1.msra.mxu0 0.0
    %2626 = vmatprep.subr.mxu0 0.0
    %2627 = vmatpush1.msra.mxu0 0.0
    %2628 = vmatprep.subr.mxu0 0.0
    %2629 = vmatpush1.msra.mxu0 0.0
    %2630 = vmatprep.mubr.f32.mxu0 0.0
    %v2631 = vand.u32 %v2383, 4294901760
    %v2632 = vsub.f32 %v2383, %v2631
    %2633 = vmatmul.mubr.f32.gmra.mrb[0].mxu0 %v2632
    %v2634 = vpop.f32.mrb[0].mxu0
    %v2635 = vadd.f32 %v2553, %v2634
    %v2636 = vpop.f32.mrb[0].mxu0
    %2637 = vmatprep.mubr.f32.mxu0 0.0
    %v2638 = vand.u32 %v2386, 4294901760
    %v2639 = vsub.f32 %v2386, %v2638
    %2640 = vmatmul.mubr.f32.gmra.mrb[0].mxu0 %v2639
    %v2641 = vpop.f32.mrb[0].mxu0
    %v2642 = vadd.f32 %v2559, %v2641
    %v2643 = vpop.f32.mrb[0].mxu0
    %2644 = vdwg.mxu0
    %2645 = vmatprep.subr.mxu0 0.0
    %v2646 = vand.u32 %v2364, 4294901760
    %2647 = vmatpush1.msra.mxu0 %v2646
    %2648 = vmatprep.subr.mxu0 0.0
    %v2649 = vand.u32 %v2365, 4294901760
    %2650 = vmatpush1.msra.mxu0 %v2649
    %2651 = vmatprep.subr.mxu0 0.0
    %2652 = vmatpush1.msra.mxu0 0.0
    %2653 = vmatprep.subr.mxu0 0.0
    %2654 = vmatpush1.msra.mxu0 0.0
    %2655 = vmatprep.subr.mxu0 0.0
    %2656 = vmatpush1.msra.mxu0 0.0
    %2657 = vmatprep.subr.mxu0 0.0
    %2658 = vmatpush1.msra.mxu0 0.0
    %2659 = vmatprep.subr.mxu0 0.0
    %2660 = vmatpush1.msra.mxu0 0.0
    %2661 = vmatprep.subr.mxu0 0.0
    %2662 = vmatpush1.msra.mxu0 0.0
    %2663 = vmatprep.subr.mxu0 0.0
    %2664 = vmatpush1.msra.mxu0 0.0
    %2665 = vmatprep.subr.mxu0 0.0
    %2666 = vmatpush1.msra.mxu0 0.0
    %2667 = vmatprep.subr.mxu0 0.0
    %2668 = vmatpush1.msra.mxu0 0.0
    %2669 = vmatprep.subr.mxu0 0.0
    %2670 = vmatpush1.msra.mxu0 0.0
    %2671 = vmatprep.subr.mxu0 0.0
    %2672 = vmatpush1.msra.mxu0 0.0
    %2673 = vmatprep.subr.mxu0 0.0
    %2674 = vmatpush1.msra.mxu0 0.0
    %2675 = vmatprep.subr.mxu0 0.0
    %2676 = vmatpush1.msra.mxu0 0.0
    %2677 = vmatprep.subr.mxu0 0.0
    %2678 = vmatpush1.msra.mxu0 0.0
    %2679 = vmatprep.subr.mxu0 0.0
    %2680 = vmatpush1.msra.mxu0 0.0
    %2681 = vmatprep.subr.mxu0 0.0
    %2682 = vmatpush1.msra.mxu0 0.0
    %2683 = vmatprep.subr.mxu0 0.0
    %2684 = vmatpush1.msra.mxu0 0.0
    %2685 = vmatprep.subr.mxu0 0.0
    %2686 = vmatpush1.msra.mxu0 0.0
    %2687 = vmatprep.subr.mxu0 0.0
    %2688 = vmatpush1.msra.mxu0 0.0
    %2689 = vmatprep.subr.mxu0 0.0
    %2690 = vmatpush1.msra.mxu0 0.0
    %2691 = vmatprep.subr.mxu0 0.0
    %2692 = vmatpush1.msra.mxu0 0.0
    %2693 = vmatprep.subr.mxu0 0.0
    %2694 = vmatpush1.msra.mxu0 0.0
    %2695 = vmatprep.subr.mxu0 0.0
    %2696 = vmatpush1.msra.mxu0 0.0
    %2697 = vmatprep.subr.mxu0 0.0
    %2698 = vmatpush1.msra.mxu0 0.0
    %2699 = vmatprep.subr.mxu0 0.0
    %2700 = vmatpush1.msra.mxu0 0.0
    %2701 = vmatprep.subr.mxu0 0.0
    %2702 = vmatpush1.msra.mxu0 0.0
    %2703 = vmatprep.subr.mxu0 0.0
    %2704 = vmatpush1.msra.mxu0 0.0
    %2705 = vmatprep.subr.mxu0 0.0
    %2706 = vmatpush1.msra.mxu0 0.0
    %2707 = vmatprep.subr.mxu0 0.0
    %2708 = vmatpush1.msra.mxu0 0.0
    %2709 = vmatprep.subr.mxu0 0.0
    %2710 = vmatpush1.msra.mxu0 0.0
    %2711 = vmatprep.mubr.f32.mxu0 0.0
    %v2712 = vand.u32 %v2383, 4294901760
    %v2713 = vsub.f32 %v2383, %v2712
    %v2714 = vand.u32 %v2713, 4294901760
    %2715 = vmatmul.mubr.f32.gmra.mrb[0].mxu0 %v2714
    %v2716 = vpop.f32.mrb[0].mxu0
    %v2717 = vadd.f32 %v2635, %v2716
    %v2718 = vpop.f32.mrb[0].mxu0
    %2719 = vmatprep.mubr.f32.mxu0 0.0
    %v2720 = vand.u32 %v2386, 4294901760
    %v2721 = vsub.f32 %v2386, %v2720
    %v2722 = vand.u32 %v2721, 4294901760
    %2723 = vmatmul.mubr.f32.gmra.mrb[0].mxu0 %v2722
    %v2724 = vpop.f32.mrb[0].mxu0
    %v2725 = vadd.f32 %v2642, %v2724
    %v2726 = vpop.f32.mrb[0].mxu0
    %2727 = vdwg.mxu0
    %2728 = vmatprep.subr.mxu0 0.0
    %v2729 = vand.u32 %v2364, 4294901760
    %v2730 = vsub.f32 %v2364, %v2729
    %v2731 = vand.u32 %v2730, 4294901760
    %2732 = vmatpush1.msra.mxu0 %v2731
    %2733 = vmatprep.subr.mxu0 0.0
    %v2734 = vand.u32 %v2365, 4294901760
    %v2735 = vsub.f32 %v2365, %v2734
    %v2736 = vand.u32 %v2735, 4294901760
    %2737 = vmatpush1.msra.mxu0 %v2736
    %2738 = vmatprep.subr.mxu0 0.0
    %2739 = vmatpush1.msra.mxu0 0.0
    %2740 = vmatprep.subr.mxu0 0.0
    %2741 = vmatpush1.msra.mxu0 0.0
    %2742 = vmatprep.subr.mxu0 0.0
    %2743 = vmatpush1.msra.mxu0 0.0
    %2744 = vmatprep.subr.mxu0 0.0
    %2745 = vmatpush1.msra.mxu0 0.0
    %2746 = vmatprep.subr.mxu0 0.0
    %2747 = vmatpush1.msra.mxu0 0.0
    %2748 = vmatprep.subr.mxu0 0.0
    %2749 = vmatpush1.msra.mxu0 0.0
    %2750 = vmatprep.subr.mxu0 0.0
    %2751 = vmatpush1.msra.mxu0 0.0
    %2752 = vmatprep.subr.mxu0 0.0
    %2753 = vmatpush1.msra.mxu0 0.0
    %2754 = vmatprep.subr.mxu0 0.0
    %2755 = vmatpush1.msra.mxu0 0.0
    %2756 = vmatprep.subr.mxu0 0.0
    %2757 = vmatpush1.msra.mxu0 0.0
    %2758 = vmatprep.subr.mxu0 0.0
    %2759 = vmatpush1.msra.mxu0 0.0
    %2760 = vmatprep.subr.mxu0 0.0
    %2761 = vmatpush1.msra.mxu0 0.0
    %2762 = vmatprep.subr.mxu0 0.0
    %2763 = vmatpush1.msra.mxu0 0.0
    %2764 = vmatprep.subr.mxu0 0.0
    %2765 = vmatpush1.msra.mxu0 0.0
    %2766 = vmatprep.subr.mxu0 0.0
    %2767 = vmatpush1.msra.mxu0 0.0
    %2768 = vmatprep.subr.mxu0 0.0
    %2769 = vmatpush1.msra.mxu0 0.0
    %2770 = vmatprep.subr.mxu0 0.0
    %2771 = vmatpush1.msra.mxu0 0.0
    %2772 = vmatprep.subr.mxu0 0.0
    %2773 = vmatpush1.msra.mxu0 0.0
    %2774 = vmatprep.subr.mxu0 0.0
    %2775 = vmatpush1.msra.mxu0 0.0
    %2776 = vmatprep.subr.mxu0 0.0
    %2777 = vmatpush1.msra.mxu0 0.0
    %2778 = vmatprep.subr.mxu0 0.0
    %2779 = vmatpush1.msra.mxu0 0.0
    %2780 = vmatprep.subr.mxu0 0.0
    %2781 = vmatpush1.msra.mxu0 0.0
    %2782 = vmatprep.subr.mxu0 0.0
    %2783 = vmatpush1.msra.mxu0 0.0
    %2784 = vmatprep.subr.mxu0 0.0
    %2785 = vmatpush1.msra.mxu0 0.0
    %2786 = vmatprep.subr.mxu0 0.0
    %2787 = vmatpush1.msra.mxu0 0.0
    %2788 = vmatprep.subr.mxu0 0.0
    %2789 = vmatpush1.msra.mxu0 0.0
    %2790 = vmatprep.subr.mxu0 0.0
    %2791 = vmatpush1.msra.mxu0 0.0
    %2792 = vmatprep.subr.mxu0 0.0
    %2793 = vmatpush1.msra.mxu0 0.0
    %2794 = vmatprep.subr.mxu0 0.0
    %2795 = vmatpush1.msra.mxu0 0.0
    %2796 = vmatprep.subr.mxu0 0.0
    %2797 = vmatpush1.msra.mxu0 0.0
    %2798 = vmatprep.mubr.f32.mxu0 0.0
    %v2799 = vand.u32 %v2383, 4294901760
    %2800 = vmatmul.mubr.f32.gmra.mrb[0].mxu0 %v2799
    %v2801 = vpop.f32.mrb[0].mxu0
    %v2802 = vadd.f32 %v2717, %v2801
    %v2803 = vpop.f32.mrb[0].mxu0
    %2804 = vmatprep.mubr.f32.mxu0 0.0
    %v2805 = vand.u32 %v2386, 4294901760
    %2806 = vmatmul.mubr.f32.gmra.mrb[0].mxu0 %v2805
    %v2807 = vpop.f32.mrb[0].mxu0
    %v2808 = vadd.f32 %v2725, %v2807
    %v2809 = vpop.f32.mrb[0].mxu0
    %2810 = vdwg.mxu0
    %2811 = vmatprep.subr.mxu0 0.0
    %v2812 = vand.u32 %v2364, 4294901760
    %2813 = vmatpush1.msra.mxu0 %v2812
    %2814 = vmatprep.subr.mxu0 0.0
    %v2815 = vand.u32 %v2365, 4294901760
    %2816 = vmatpush1.msra.mxu0 %v2815
    %2817 = vmatprep.subr.mxu0 0.0
    %2818 = vmatpush1.msra.mxu0 0.0
    %2819 = vmatprep.subr.mxu0 0.0
    %2820 = vmatpush1.msra.mxu0 0.0
    %2821 = vmatprep.subr.mxu0 0.0
    %2822 = vmatpush1.msra.mxu0 0.0
    %2823 = vmatprep.subr.mxu0 0.0
    %2824 = vmatpush1.msra.mxu0 0.0
    %2825 = vmatprep.subr.mxu0 0.0
    %2826 = vmatpush1.msra.mxu0 0.0
    %2827 = vmatprep.subr.mxu0 0.0
    %2828 = vmatpush1.msra.mxu0 0.0
    %2829 = vmatprep.subr.mxu0 0.0
    %2830 = vmatpush1.msra.mxu0 0.0
    %2831 = vmatprep.subr.mxu0 0.0
    %2832 = vmatpush1.msra.mxu0 0.0
    %2833 = vmatprep.subr.mxu0 0.0
    %2834 = vmatpush1.msra.mxu0 0.0
    %2835 = vmatprep.subr.mxu0 0.0
    %2836 = vmatpush1.msra.mxu0 0.0
    %2837 = vmatprep.subr.mxu0 0.0
    %2838 = vmatpush1.msra.mxu0 0.0
    %2839 = vmatprep.subr.mxu0 0.0
    %2840 = vmatpush1.msra.mxu0 0.0
    %2841 = vmatprep.subr.mxu0 0.0
    %2842 = vmatpush1.msra.mxu0 0.0
    %2843 = vmatprep.subr.mxu0 0.0
    %2844 = vmatpush1.msra.mxu0 0.0
    %2845 = vmatprep.subr.mxu0 0.0
    %2846 = vmatpush1.msra.mxu0 0.0
    %2847 = vmatprep.subr.mxu0 0.0
    %2848 = vmatpush1.msra.mxu0 0.0
    %2849 = vmatprep.subr.mxu0 0.0
    %2850 = vmatpush1.msra.mxu0 0.0
    %2851 = vmatprep.subr.mxu0 0.0
    %2852 = vmatpush1.msra.mxu0 0.0
    %2853 = vmatprep.subr.mxu0 0.0
    %2854 = vmatpush1.msra.mxu0 0.0
    %2855 = vmatprep.subr.mxu0 0.0
    %2856 = vmatpush1.msra.mxu0 0.0
    %2857 = vmatprep.subr.mxu0 0.0
    %2858 = vmatpush1.msra.mxu0 0.0
    %2859 = vmatprep.subr.mxu0 0.0
    %2860 = vmatpush1.msra.mxu0 0.0
    %2861 = vmatprep.subr.mxu0 0.0
    %2862 = vmatpush1.msra.mxu0 0.0
    %2863 = vmatprep.subr.mxu0 0.0
    %2864 = vmatpush1.msra.mxu0 0.0
    %2865 = vmatprep.subr.mxu0 0.0
    %2866 = vmatpush1.msra.mxu0 0.0
    %2867 = vmatprep.subr.mxu0 0.0
    %2868 = vmatpush1.msra.mxu0 0.0
    %2869 = vmatprep.subr.mxu0 0.0
    %2870 = vmatpush1.msra.mxu0 0.0
    %2871 = vmatprep.subr.mxu0 0.0
    %2872 = vmatpush1.msra.mxu0 0.0
    %2873 = vmatprep.subr.mxu0 0.0
    %2874 = vmatpush1.msra.mxu0 0.0
    %2875 = vmatprep.subr.mxu0 0.0
    %2876 = vmatpush1.msra.mxu0 0.0
    %2877 = vmatprep.mubr.f32.mxu0 0.0
    %v2878 = vand.u32 %v2383, 4294901760
    %2879 = vmatmul.mubr.f32.gmra.mrb[0].mxu0 %v2878
    %v2880 = vpop.f32.mrb[0].mxu0
    %v2881 = vadd.f32 %v2802, %v2880
    %v2882 = vpop.f32.mrb[0].mxu0
    %2883 = vmatprep.mubr.f32.mxu0 0.0
    %v2884 = vand.u32 %v2386, 4294901760
    %2885 = vmatmul.mubr.f32.gmra.mrb[0].mxu0 %v2884
    %v2886 = vpop.f32.mrb[0].mxu0
    %v2887 = vadd.f32 %v2808, %v2886
    %v2888 = vpop.f32.mrb[0].mxu0
    %2889 = vdwg.mxu0
    %v2890 = vtanh.pop %v2881
    %v2891 = vtanh.pop %v2887
    %s2892 = scalar_lea.vmem %s2, 64
    %v2893 = vld [vmem:[%s2892] sm:$0xff]
    %s2894 = scalar_lea.vmem %s3, 80
    %v2895 = vld [vmem:[%s2894] sm:$0xff]
    %2897 = vset.pattern.permute.xlu0 0
    %2898 = vperm.xlu0 %2897, %v2895
    %v2899 = vpop.permute.xlu0 %2898
    %v2902 = vsel %vm48, %v2893, 0
    %2904 = vmatprep.subr.mxu0 0.0
    %v2905 = vand.u32 %v2890, 4294901760
    %2906 = vmatpush1.msra.mxu0 %v2905
    %2907 = vmatprep.subr.mxu0 0.0
    %v2908 = vand.u32 %v2891, 4294901760
    %2909 = vmatpush1.msra.mxu0 %v2908
    %2910 = vmatprep.subr.mxu0 0.0
    %2911 = vmatpush1.msra.mxu0 0.0
    %2912 = vmatprep.subr.mxu0 0.0
    %2913 = vmatpush1.msra.mxu0 0.0
    %2914 = vmatprep.subr.mxu0 0.0
    %2915 = vmatpush1.msra.mxu0 0.0
    %2916 = vmatprep.subr.mxu0 0.0
    %2917 = vmatpush1.msra.mxu0 0.0
    %2918 = vmatprep.subr.mxu0 0.0
    %2919 = vmatpush1.msra.mxu0 0.0
    %2920 = vmatprep.subr.mxu0 0.0
    %2921 = vmatpush1.msra.mxu0 0.0
    %2922 = vmatprep.subr.mxu0 0.0
    %2923 = vmatpush1.msra.mxu0 0.0
    %2924 = vmatprep.subr.mxu0 0.0
    %2925 = vmatpush1.msra.mxu0 0.0
    %2926 = vmatprep.subr.mxu0 0.0
    %2927 = vmatpush1.msra.mxu0 0.0
    %2928 = vmatprep.subr.mxu0 0.0
    %2929 = vmatpush1.msra.mxu0 0.0
    %2930 = vmatprep.subr.mxu0 0.0
    %2931 = vmatpush1.msra.mxu0 0.0
    %2932 = vmatprep.subr.mxu0 0.0
    %2933 = vmatpush1.msra.mxu0 0.0
    %2934 = vmatprep.subr.mxu0 0.0
    %2935 = vmatpush1.msra.mxu0 0.0
    %2936 = vmatprep.subr.mxu0 0.0
    %2937 = vmatpush1.msra.mxu0 0.0
    %2938 = vmatprep.subr.mxu0 0.0
    %2939 = vmatpush1.msra.mxu0 0.0
    %2940 = vmatprep.subr.mxu0 0.0
    %2941 = vmatpush1.msra.mxu0 0.0
    %2942 = vmatprep.subr.mxu0 0.0
    %2943 = vmatpush1.msra.mxu0 0.0
    %2944 = vmatprep.subr.mxu0 0.0
    %2945 = vmatpush1.msra.mxu0 0.0
    %2946 = vmatprep.subr.mxu0 0.0
    %2947 = vmatpush1.msra.mxu0 0.0
    %2948 = vmatprep.subr.mxu0 0.0
    %2949 = vmatpush1.msra.mxu0 0.0
    %2950 = vmatprep.subr.mxu0 0.0
    %2951 = vmatpush1.msra.mxu0 0.0
    %2952 = vmatprep.subr.mxu0 0.0
    %2953 = vmatpush1.msra.mxu0 0.0
    %2954 = vmatprep.subr.mxu0 0.0
    %2955 = vmatpush1.msra.mxu0 0.0
    %2956 = vmatprep.subr.mxu0 0.0
    %2957 = vmatpush1.msra.mxu0 0.0
    %2958 = vmatprep.subr.mxu0 0.0
    %2959 = vmatpush1.msra.mxu0 0.0
    %2960 = vmatprep.subr.mxu0 0.0
    %2961 = vmatpush1.msra.mxu0 0.0
    %2962 = vmatprep.subr.mxu0 0.0
    %2963 = vmatpush1.msra.mxu0 0.0
    %2964 = vmatprep.subr.mxu0 0.0
    %2965 = vmatpush1.msra.mxu0 0.0
    %2966 = vmatprep.subr.mxu0 0.0
    %2967 = vmatpush1.msra.mxu0 0.0
    %2968 = vmatprep.subr.mxu0 0.0
    %2969 = vmatpush1.msra.mxu0 0.0
    %2970 = vmatprep.mubr.f32.mxu0 0.0
    %v2971 = vand.u32 %v2902, 4294901760
    %v2972 = vsub.f32 %v2902, %v2971
    %v2973 = vand.u32 %v2972, 4294901760
    %v2974 = vsub.f32 %v2972, %v2973
    %v2975 = vand.u32 %v2974, 4294901760
    %2976 = vmatmul.mubr.f32.gmra.mrb[0].mxu0 %v2975
    %v2977 = vpop.f32.mrb[0].mxu0
    %v2978 = vadd.f32 %v2899, %v2977
    %v2979 = vpop.f32.mrb[0].mxu0
    %2980 = vdwg.mxu0
    %2981 = vmatprep.subr.mxu0 0.0
    %v2982 = vand.u32 %v2890, 4294901760
    %v2983 = vsub.f32 %v2890, %v2982
    %v2984 = vand.u32 %v2983, 4294901760
    %v2985 = vsub.f32 %v2983, %v2984
    %v2986 = vand.u32 %v2985, 4294901760
    %2987 = vmatpush1.msra.mxu0 %v2986
    %2988 = vmatprep.subr.mxu0 0.0
    %v2989 = vand.u32 %v2891, 4294901760
    %v2990 = vsub.f32 %v2891, %v2989
    %v2991 = vand.u32 %v2990, 4294901760
    %v2992 = vsub.f32 %v2990, %v2991
    %v2993 = vand.u32 %v2992, 4294901760
    %2994 = vmatpush1.msra.mxu0 %v2993
    %2995 = vmatprep.subr.mxu0 0.0
    %2996 = vmatpush1.msra.mxu0 0.0
    %2997 = vmatprep.subr.mxu0 0.0
    %2998 = vmatpush1.msra.mxu0 0.0
    %2999 = vmatprep.subr.mxu0 0.0
    %3000 = vmatpush1.msra.mxu0 0.0
    %3001 = vmatprep.subr.mxu0 0.0
    %3002 = vmatpush1.msra.mxu0 0.0
    %3003 = vmatprep.subr.mxu0 0.0
    %3004 = vmatpush1.msra.mxu0 0.0
    %3005 = vmatprep.subr.mxu0 0.0
    %3006 = vmatpush1.msra.mxu0 0.0
    %3007 = vmatprep.subr.mxu0 0.0
    %3008 = vmatpush1.msra.mxu0 0.0
    %3009 = vmatprep.subr.mxu0 0.0
    %3010 = vmatpush1.msra.mxu0 0.0
    %3011 = vmatprep.subr.mxu0 0.0
    %3012 = vmatpush1.msra.mxu0 0.0
    %3013 = vmatprep.subr.mxu0 0.0
    %3014 = vmatpush1.msra.mxu0 0.0
    %3015 = vmatprep.subr.mxu0 0.0
    %3016 = vmatpush1.msra.mxu0 0.0
    %3017 = vmatprep.subr.mxu0 0.0
    %3018 = vmatpush1.msra.mxu0 0.0
    %3019 = vmatprep.subr.mxu0 0.0
    %3020 = vmatpush1.msra.mxu0 0.0
    %3021 = vmatprep.subr.mxu0 0.0
    %3022 = vmatpush1.msra.mxu0 0.0
    %3023 = vmatprep.subr.mxu0 0.0
    %3024 = vmatpush1.msra.mxu0 0.0
    %3025 = vmatprep.subr.mxu0 0.0
    %3026 = vmatpush1.msra.mxu0 0.0
    %3027 = vmatprep.subr.mxu0 0.0
    %3028 = vmatpush1.msra.mxu0 0.0
    %3029 = vmatprep.subr.mxu0 0.0
    %3030 = vmatpush1.msra.mxu0 0.0
    %3031 = vmatprep.subr.mxu0 0.0
    %3032 = vmatpush1.msra.mxu0 0.0
    %3033 = vmatprep.subr.mxu0 0.0
    %3034 = vmatpush1.msra.mxu0 0.0
    %3035 = vmatprep.subr.mxu0 0.0
    %3036 = vmatpush1.msra.mxu0 0.0
    %3037 = vmatprep.subr.mxu0 0.0
    %3038 = vmatpush1.msra.mxu0 0.0
    %3039 = vmatprep.subr.mxu0 0.0
    %3040 = vmatpush1.msra.mxu0 0.0
    %3041 = vmatprep.subr.mxu0 0.0
    %3042 = vmatpush1.msra.mxu0 0.0
    %3043 = vmatprep.subr.mxu0 0.0
    %3044 = vmatpush1.msra.mxu0 0.0
    %3045 = vmatprep.subr.mxu0 0.0
    %3046 = vmatpush1.msra.mxu0 0.0
    %3047 = vmatprep.subr.mxu0 0.0
    %3048 = vmatpush1.msra.mxu0 0.0
    %3049 = vmatprep.subr.mxu0 0.0
    %3050 = vmatpush1.msra.mxu0 0.0
    %3051 = vmatprep.subr.mxu0 0.0
    %3052 = vmatpush1.msra.mxu0 0.0
    %3053 = vmatprep.subr.mxu0 0.0
    %3054 = vmatpush1.msra.mxu0 0.0
    %3055 = vmatprep.mubr.f32.mxu0 0.0
    %v3056 = vand.u32 %v2902, 4294901760
    %3057 = vmatmul.mubr.f32.gmra.mrb[0].mxu0 %v3056
    %v3058 = vpop.f32.mrb[0].mxu0
    %v3059 = vadd.f32 %v2978, %v3058
    %v3060 = vpop.f32.mrb[0].mxu0
    %3061 = vdwg.mxu0
    %3062 = vmatprep.subr.mxu0 0.0
    %v3063 = vand.u32 %v2890, 4294901760
    %v3064 = vsub.f32 %v2890, %v3063
    %3065 = vmatpush1.msra.mxu0 %v3064
    %3066 = vmatprep.subr.mxu0 0.0
    %v3067 = vand.u32 %v2891, 4294901760
    %v3068 = vsub.f32 %v2891, %v3067
    %3069 = vmatpush1.msra.mxu0 %v3068
    %3070 = vmatprep.subr.mxu0 0.0
    %3071 = vmatpush1.msra.mxu0 0.0
    %3072 = vmatprep.subr.mxu0 0.0
    %3073 = vmatpush1.msra.mxu0 0.0
    %3074 = vmatprep.subr.mxu0 0.0
    %3075 = vmatpush1.msra.mxu0 0.0
    %3076 = vmatprep.subr.mxu0 0.0
    %3077 = vmatpush1.msra.mxu0 0.0
    %3078 = vmatprep.subr.mxu0 0.0
    %3079 = vmatpush1.msra.mxu0 0.0
    %3080 = vmatprep.subr.mxu0 0.0
    %3081 = vmatpush1.msra.mxu0 0.0
    %3082 = vmatprep.subr.mxu0 0.0
    %3083 = vmatpush1.msra.mxu0 0.0
    %3084 = vmatprep.subr.mxu0 0.0
    %3085 = vmatpush1.msra.mxu0 0.0
    %3086 = vmatprep.subr.mxu0 0.0
    %3087 = vmatpush1.msra.mxu0 0.0
    %3088 = vmatprep.subr.mxu0 0.0
    %3089 = vmatpush1.msra.mxu0 0.0
    %3090 = vmatprep.subr.mxu0 0.0
    %3091 = vmatpush1.msra.mxu0 0.0
    %3092 = vmatprep.subr.mxu0 0.0
    %3093 = vmatpush1.msra.mxu0 0.0
    %3094 = vmatprep.subr.mxu0 0.0
    %3095 = vmatpush1.msra.mxu0 0.0
    %3096 = vmatprep.subr.mxu0 0.0
    %3097 = vmatpush1.msra.mxu0 0.0
    %3098 = vmatprep.subr.mxu0 0.0
    %3099 = vmatpush1.msra.mxu0 0.0
    %3100 = vmatprep.subr.mxu0 0.0
    %3101 = vmatpush1.msra.mxu0 0.0
    %3102 = vmatprep.subr.mxu0 0.0
    %3103 = vmatpush1.msra.mxu0 0.0
    %3104 = vmatprep.subr.mxu0 0.0
    %3105 = vmatpush1.msra.mxu0 0.0
    %3106 = vmatprep.subr.mxu0 0.0
    %3107 = vmatpush1.msra.mxu0 0.0
    %3108 = vmatprep.subr.mxu0 0.0
    %3109 = vmatpush1.msra.mxu0 0.0
    %3110 = vmatprep.subr.mxu0 0.0
    %3111 = vmatpush1.msra.mxu0 0.0
    %3112 = vmatprep.subr.mxu0 0.0
    %3113 = vmatpush1.msra.mxu0 0.0
    %3114 = vmatprep.subr.mxu0 0.0
    %3115 = vmatpush1.msra.mxu0 0.0
    %3116 = vmatprep.subr.mxu0 0.0
    %3117 = vmatpush1.msra.mxu0 0.0
    %3118 = vmatprep.subr.mxu0 0.0
    %3119 = vmatpush1.msra.mxu0 0.0
    %3120 = vmatprep.subr.mxu0 0.0
    %3121 = vmatpush1.msra.mxu0 0.0
    %3122 = vmatprep.subr.mxu0 0.0
    %3123 = vmatpush1.msra.mxu0 0.0
    %3124 = vmatprep.subr.mxu0 0.0
    %3125 = vmatpush1.msra.mxu0 0.0
    %3126 = vmatprep.subr.mxu0 0.0
    %3127 = vmatpush1.msra.mxu0 0.0
    %3128 = vmatprep.subr.mxu0 0.0
    %3129 = vmatpush1.msra.mxu0 0.0
    %3130 = vmatprep.mubr.f32.mxu0 0.0
    %v3131 = vand.u32 %v2902, 4294901760
    %v3132 = vsub.f32 %v2902, %v3131
    %3133 = vmatmul.mubr.f32.gmra.mrb[0].mxu0 %v3132
    %v3134 = vpop.f32.mrb[0].mxu0
    %v3135 = vadd.f32 %v3059, %v3134
    %v3136 = vpop.f32.mrb[0].mxu0
    %3137 = vdwg.mxu0
    %3138 = vmatprep.subr.mxu0 0.0
    %v3139 = vand.u32 %v2890, 4294901760
    %3140 = vmatpush1.msra.mxu0 %v3139
    %3141 = vmatprep.subr.mxu0 0.0
    %v3142 = vand.u32 %v2891, 4294901760
    %3143 = vmatpush1.msra.mxu0 %v3142
    %3144 = vmatprep.subr.mxu0 0.0
    %3145 = vmatpush1.msra.mxu0 0.0
    %3146 = vmatprep.subr.mxu0 0.0
    %3147 = vmatpush1.msra.mxu0 0.0
    %3148 = vmatprep.subr.mxu0 0.0
    %3149 = vmatpush1.msra.mxu0 0.0
    %3150 = vmatprep.subr.mxu0 0.0
    %3151 = vmatpush1.msra.mxu0 0.0
    %3152 = vmatprep.subr.mxu0 0.0
    %3153 = vmatpush1.msra.mxu0 0.0
    %3154 = vmatprep.subr.mxu0 0.0
    %3155 = vmatpush1.msra.mxu0 0.0
    %3156 = vmatprep.subr.mxu0 0.0
    %3157 = vmatpush1.msra.mxu0 0.0
    %3158 = vmatprep.subr.mxu0 0.0
    %3159 = vmatpush1.msra.mxu0 0.0
    %3160 = vmatprep.subr.mxu0 0.0
    %3161 = vmatpush1.msra.mxu0 0.0
    %3162 = vmatprep.subr.mxu0 0.0
    %3163 = vmatpush1.msra.mxu0 0.0
    %3164 = vmatprep.subr.mxu0 0.0
    %3165 = vmatpush1.msra.mxu0 0.0
    %3166 = vmatprep.subr.mxu0 0.0
    %3167 = vmatpush1.msra.mxu0 0.0
    %3168 = vmatprep.subr.mxu0 0.0
    %3169 = vmatpush1.msra.mxu0 0.0
    %3170 = vmatprep.subr.mxu0 0.0
    %3171 = vmatpush1.msra.mxu0 0.0
    %3172 = vmatprep.subr.mxu0 0.0
    %3173 = vmatpush1.msra.mxu0 0.0
    %3174 = vmatprep.subr.mxu0 0.0
    %3175 = vmatpush1.msra.mxu0 0.0
    %3176 = vmatprep.subr.mxu0 0.0
    %3177 = vmatpush1.msra.mxu0 0.0
    %3178 = vmatprep.subr.mxu0 0.0
    %3179 = vmatpush1.msra.mxu0 0.0
    %3180 = vmatprep.subr.mxu0 0.0
    %3181 = vmatpush1.msra.mxu0 0.0
    %3182 = vmatprep.subr.mxu0 0.0
    %3183 = vmatpush1.msra.mxu0 0.0
    %3184 = vmatprep.subr.mxu0 0.0
    %3185 = vmatpush1.msra.mxu0 0.0
    %3186 = vmatprep.subr.mxu0 0.0
    %3187 = vmatpush1.msra.mxu0 0.0
    %3188 = vmatprep.subr.mxu0 0.0
    %3189 = vmatpush1.msra.mxu0 0.0
    %3190 = vmatprep.subr.mxu0 0.0
    %3191 = vmatpush1.msra.mxu0 0.0
    %3192 = vmatprep.subr.mxu0 0.0
    %3193 = vmatpush1.msra.mxu0 0.0
    %3194 = vmatprep.subr.mxu0 0.0
    %3195 = vmatpush1.msra.mxu0 0.0
    %3196 = vmatprep.subr.mxu0 0.0
    %3197 = vmatpush1.msra.mxu0 0.0
    %3198 = vmatprep.subr.mxu0 0.0
    %3199 = vmatpush1.msra.mxu0 0.0
    %3200 = vmatprep.subr.mxu0 0.0
    %3201 = vmatpush1.msra.mxu0 0.0
    %3202 = vmatprep.subr.mxu0 0.0
    %3203 = vmatpush1.msra.mxu0 0.0
    %3204 = vmatprep.mubr.f32.mxu0 0.0
    %v3205 = vand.u32 %v2902, 4294901760
    %v3206 = vsub.f32 %v2902, %v3205
    %v3207 = vand.u32 %v3206, 4294901760
    %3208 = vmatmul.mubr.f32.gmra.mrb[0].mxu0 %v3207
    %v3209 = vpop.f32.mrb[0].mxu0
    %v3210 = vadd.f32 %v3135, %v3209
    %v3211 = vpop.f32.mrb[0].mxu0
    %3212 = vdwg.mxu0
    %3213 = vmatprep.subr.mxu0 0.0
    %v3214 = vand.u32 %v2890, 4294901760
    %v3215 = vsub.f32 %v2890, %v3214
    %v3216 = vand.u32 %v3215, 4294901760
    %3217 = vmatpush1.msra.mxu0 %v3216
    %3218 = vmatprep.subr.mxu0 0.0
    %v3219 = vand.u32 %v2891, 4294901760
    %v3220 = vsub.f32 %v2891, %v3219
    %v3221 = vand.u32 %v3220, 4294901760
    %3222 = vmatpush1.msra.mxu0 %v3221
    %3223 = vmatprep.subr.mxu0 0.0
    %3224 = vmatpush1.msra.mxu0 0.0
    %3225 = vmatprep.subr.mxu0 0.0
    %3226 = vmatpush1.msra.mxu0 0.0
    %3227 = vmatprep.subr.mxu0 0.0
    %3228 = vmatpush1.msra.mxu0 0.0
    %3229 = vmatprep.subr.mxu0 0.0
    %3230 = vmatpush1.msra.mxu0 0.0
    %3231 = vmatprep.subr.mxu0 0.0
    %3232 = vmatpush1.msra.mxu0 0.0
    %3233 = vmatprep.subr.mxu0 0.0
    %3234 = vmatpush1.msra.mxu0 0.0
    %3235 = vmatprep.subr.mxu0 0.0
    %3236 = vmatpush1.msra.mxu0 0.0
    %3237 = vmatprep.subr.mxu0 0.0
    %3238 = vmatpush1.msra.mxu0 0.0
    %3239 = vmatprep.subr.mxu0 0.0
    %3240 = vmatpush1.msra.mxu0 0.0
    %3241 = vmatprep.subr.mxu0 0.0
    %3242 = vmatpush1.msra.mxu0 0.0
    %3243 = vmatprep.subr.mxu0 0.0
    %3244 = vmatpush1.msra.mxu0 0.0
    %3245 = vmatprep.subr.mxu0 0.0
    %3246 = vmatpush1.msra.mxu0 0.0
    %3247 = vmatprep.subr.mxu0 0.0
    %3248 = vmatpush1.msra.mxu0 0.0
    %3249 = vmatprep.subr.mxu0 0.0
    %3250 = vmatpush1.msra.mxu0 0.0
    %3251 = vmatprep.subr.mxu0 0.0
    %3252 = vmatpush1.msra.mxu0 0.0
    %3253 = vmatprep.subr.mxu0 0.0
    %3254 = vmatpush1.msra.mxu0 0.0
    %3255 = vmatprep.subr.mxu0 0.0
    %3256 = vmatpush1.msra.mxu0 0.0
    %3257 = vmatprep.subr.mxu0 0.0
    %3258 = vmatpush1.msra.mxu0 0.0
    %3259 = vmatprep.subr.mxu0 0.0
    %3260 = vmatpush1.msra.mxu0 0.0
    %3261 = vmatprep.subr.mxu0 0.0
    %3262 = vmatpush1.msra.mxu0 0.0
    %3263 = vmatprep.subr.mxu0 0.0
    %3264 = vmatpush1.msra.mxu0 0.0
    %3265 = vmatprep.subr.mxu0 0.0
    %3266 = vmatpush1.msra.mxu0 0.0
    %3267 = vmatprep.subr.mxu0 0.0
    %3268 = vmatpush1.msra.mxu0 0.0
    %3269 = vmatprep.subr.mxu0 0.0
    %3270 = vmatpush1.msra.mxu0 0.0
    %3271 = vmatprep.subr.mxu0 0.0
    %3272 = vmatpush1.msra.mxu0 0.0
    %3273 = vmatprep.subr.mxu0 0.0
    %3274 = vmatpush1.msra.mxu0 0.0
    %3275 = vmatprep.subr.mxu0 0.0
    %3276 = vmatpush1.msra.mxu0 0.0
    %3277 = vmatprep.subr.mxu0 0.0
    %3278 = vmatpush1.msra.mxu0 0.0
    %3279 = vmatprep.subr.mxu0 0.0
    %3280 = vmatpush1.msra.mxu0 0.0
    %3281 = vmatprep.subr.mxu0 0.0
    %3282 = vmatpush1.msra.mxu0 0.0
    %3283 = vmatprep.mubr.f32.mxu0 0.0
    %v3284 = vand.u32 %v2902, 4294901760
    %3285 = vmatmul.mubr.f32.gmra.mrb[0].mxu0 %v3284
    %v3286 = vpop.f32.mrb[0].mxu0
    %v3287 = vadd.f32 %v3210, %v3286
    %v3288 = vpop.f32.mrb[0].mxu0
    %3289 = vdwg.mxu0
    %3290 = vmatprep.subr.mxu0 0.0
    %v3291 = vand.u32 %v2890, 4294901760
    %3292 = vmatpush1.msra.mxu0 %v3291
    %3293 = vmatprep.subr.mxu0 0.0
    %v3294 = vand.u32 %v2891, 4294901760
    %3295 = vmatpush1.msra.mxu0 %v3294
    %3296 = vmatprep.subr.mxu0 0.0
    %3297 = vmatpush1.msra.mxu0 0.0
    %3298 = vmatprep.subr.mxu0 0.0
    %3299 = vmatpush1.msra.mxu0 0.0
    %3300 = vmatprep.subr.mxu0 0.0
    %3301 = vmatpush1.msra.mxu0 0.0
    %3302 = vmatprep.subr.mxu0 0.0
    %3303 = vmatpush1.msra.mxu0 0.0
    %3304 = vmatprep.subr.mxu0 0.0
    %3305 = vmatpush1.msra.mxu0 0.0
    %3306 = vmatprep.subr.mxu0 0.0
    %3307 = vmatpush1.msra.mxu0 0.0
    %3308 = vmatprep.subr.mxu0 0.0
    %3309 = vmatpush1.msra.mxu0 0.0
    %3310 = vmatprep.subr.mxu0 0.0
    %3311 = vmatpush1.msra.mxu0 0.0
    %3312 = vmatprep.subr.mxu0 0.0
    %3313 = vmatpush1.msra.mxu0 0.0
    %3314 = vmatprep.subr.mxu0 0.0
    %3315 = vmatpush1.msra.mxu0 0.0
    %3316 = vmatprep.subr.mxu0 0.0
    %3317 = vmatpush1.msra.mxu0 0.0
    %3318 = vmatprep.subr.mxu0 0.0
    %3319 = vmatpush1.msra.mxu0 0.0
    %3320 = vmatprep.subr.mxu0 0.0
    %3321 = vmatpush1.msra.mxu0 0.0
    %3322 = vmatprep.subr.mxu0 0.0
    %3323 = vmatpush1.msra.mxu0 0.0
    %3324 = vmatprep.subr.mxu0 0.0
    %3325 = vmatpush1.msra.mxu0 0.0
    %3326 = vmatprep.subr.mxu0 0.0
    %3327 = vmatpush1.msra.mxu0 0.0
    %3328 = vmatprep.subr.mxu0 0.0
    %3329 = vmatpush1.msra.mxu0 0.0
    %3330 = vmatprep.subr.mxu0 0.0
    %3331 = vmatpush1.msra.mxu0 0.0
    %3332 = vmatprep.subr.mxu0 0.0
    %3333 = vmatpush1.msra.mxu0 0.0
    %3334 = vmatprep.subr.mxu0 0.0
    %3335 = vmatpush1.msra.mxu0 0.0
    %3336 = vmatprep.subr.mxu0 0.0
    %3337 = vmatpush1.msra.mxu0 0.0
    %3338 = vmatprep.subr.mxu0 0.0
    %3339 = vmatpush1.msra.mxu0 0.0
    %3340 = vmatprep.subr.mxu0 0.0
    %3341 = vmatpush1.msra.mxu0 0.0
    %3342 = vmatprep.subr.mxu0 0.0
    %3343 = vmatpush1.msra.mxu0 0.0
    %3344 = vmatprep.subr.mxu0 0.0
    %3345 = vmatpush1.msra.mxu0 0.0
    %3346 = vmatprep.subr.mxu0 0.0
    %3347 = vmatpush1.msra.mxu0 0.0
    %3348 = vmatprep.subr.mxu0 0.0
    %3349 = vmatpush1.msra.mxu0 0.0
    %3350 = vmatprep.subr.mxu0 0.0
    %3351 = vmatpush1.msra.mxu0 0.0
    %3352 = vmatprep.subr.mxu0 0.0
    %3353 = vmatpush1.msra.mxu0 0.0
    %3354 = vmatprep.subr.mxu0 0.0
    %3355 = vmatpush1.msra.mxu0 0.0
    %3356 = vmatprep.mubr.f32.mxu0 0.0
    %v3357 = vand.u32 %v2902, 4294901760
    %3358 = vmatmul.mubr.f32.gmra.mrb[0].mxu0 %v3357
    %v3359 = vpop.f32.mrb[0].mxu0
    %v3360 = vadd.f32 %v3287, %v3359
    %v3361 = vpop.f32.mrb[0].mxu0
    %3362 = vdwg.mxu0
    %3363 = vst [vmem:[#allocation2] sm:$0x1] %v3360
    // Predicated region
    $region18: #{mlp_forward.1} parent=1 // pred_check
      _
    $region19: #{mlp_forward.1} parent=1 // pred_check_branch
      %3365 = sbr.rel (0) target = $region21
    $region20: #{mlp_forward.1} parent=1 // pred_region
      %s3367 = ssub.s32 16, 16
      %3368 = vsyncadd [#allocation3], %s3367
      %s3370 = sshll.u32 [#allocation2], 4
      %s3371 = int_to_ptr.vmem [resolvable:$true] %s3370
      %3373 = dma.vmem_to_hbm [thread:$0]  %s3371, 16, %s4, [#allocation3]
    $region21: #{mlp_forward.1} parent=1 // pred_fallthru
      _
    // Predicated region
    $region22: #{mlp_forward.1} parent=1 // pred_check
      _
    $region23: #{mlp_forward.1} parent=1 // pred_check_branch
      %3375 = sbr.rel (0) target = $region25
    $region24: #{mlp_forward.1} parent=1 // pred_region
      %3376 = dma.done [#allocation3], 16
    $region25: #{mlp_forward.1} parent=1 // pred_fallthru
      _
    %3377 = vsyncpa [#allocation3], 1

</llo_original>
